<compile_context>
chip_gen: v7x
topology: tpu7x:2x2x1
jax: 0.10.0
libtpu: 0.0.40
codegen_flags: <defaults>
</compile_context>

<pallas_src>
import functools

import jax
import jax.numpy as jnp
from jax.experimental import pallas as pl
from jax.experimental.pallas import tpu as pltpu

_MiB = 1024 * 1024


def _round_up(x, m):
    return (x + m - 1) // m * m


def bottleneck_kernel(x_ref, w1d_ref, s1d_ref, b1d_ref,
                      w2_ref, s2_ref, b2_ref,
                      w3_ref, s3_ref, b3_ref,
                      out_ref, pad_ref, *, H, W, Cmid_p):
    # x_ref:   (F, H*W, Cin_p)          bf16   F frames, channels-last, spatial flattened
    # w1d_ref: (Cin_p, Cmid_p+Cout_p)   bf16   [conv1 | downsample] fused 1x1 weights
    # s1d/b1d: (1, Cmid_p+Cout_p)       f32    folded BN scale/bias for the fused matmul
    # w2_ref:  (3, 3, Cmid_p, Cmid_p)   bf16   conv2 3x3 weights (ky, kx)
    # s2/b2:   (1, Cmid_p)              f32
    # w3_ref:  (Cmid_p, Cout_p)         bf16   conv3 1x1
    # s3/b3:   (1, Cout_p)              f32
    # out_ref: (F, H*W, Cout_p)         bf16
    # pad_ref: (F, H+2, Wp, Cmid_p)     bf16   scratch: zero-padded conv2 input
    F = x_ref.shape[0]
    Cin_p = x_ref.shape[2]
    Cout_p = w3_ref.shape[1]
    Wp = pad_ref.shape[2]
    M = F * H * W

    x2d = x_ref[...].reshape(M, Cin_p)

    # ---- conv1 (1x1x1) + bn1 + relu, fused with downsample 1x1 conv + bn ----
    # Split point Cmid_p is a multiple of 128 -> lane-aligned slices.
    t = jnp.dot(x2d, w1d_ref[...], preferred_element_type=jnp.float32)
    t = t * s1d_ref[...] + b1d_ref[...]
    t1 = jnp.maximum(t[:, :Cmid_p], 0.0)        # (M, Cmid_p) conv1 branch
    res = t[:, Cmid_p:]                         # (M, Cout_p) residual (downsample) branch

    # ---- conv2 (1x3x3, pad=1, stride=1) + bn2 + relu ----
    # Zero only the 1-element border (cheap); the interior is fully overwritten, so
    # every grid step stays independent -> safe under "parallel".
    pad_ref[:, 0:1, :, :] = jnp.zeros((F, 1, Wp, Cmid_p), pad_ref.dtype)
    pad_ref[:, H + 1:H + 2, :, :] = jnp.zeros((F, 1, Wp, Cmid_p), pad_ref.dtype)
    pad_ref[:, 1:H + 1, 0:1, :] = jnp.zeros((F, H, 1, Cmid_p), pad_ref.dtype)
    pad_ref[:, 1:H + 1, W + 1:W + 2, :] = jnp.zeros((F, H, 1, Cmid_p), pad_ref.dtype)
    pad_ref[:, 1:H + 1, 1:W + 1, :] = t1.astype(pad_ref.dtype).reshape(F, H, W, Cmid_p)

    # 9 accumulating dots (K = Cmid_p); first dot initializes the accumulator.
    acc = None
    for ky in range(3):
        for kx in range(3):
            win = pad_ref[:, ky:ky + H, kx:kx + W, :].reshape(M, Cmid_p)
            d = jnp.dot(win, w2_ref[ky, kx], preferred_element_type=jnp.float32)
            acc = d if acc is None else acc + d
    t2 = jnp.maximum(acc * s2_ref[...] + b2_ref[...], 0.0)

    # ---- conv3 (1x1x1) + bn3 ----
    t3 = jnp.dot(t2.astype(w3_ref.dtype), w3_ref[...],
                 preferred_element_type=jnp.float32)
    t3 = t3 * s3_ref[...] + b3_ref[...]

    # ---- residual add + relu ----
    out = jnp.maximum(t3 + res, 0.0)
    out_ref[...] = out.reshape(F, H * W, Cout_p).astype(out_ref.dtype)


# --------------------------- VMEM sizing helpers ---------------------------
def _vmem_capacity_bytes():
    try:
        return int(pltpu.get_tpu_info().vmem_capacity_bytes)
    except Exception:
        return 64 * _MiB            # conservative default (sized for v7x's 64 MiB/TC)


def _vmem_budget_bytes(cap):
    # Working-set budget for tile sizing: ~24 MiB on v7x, ~56 MiB on v5e/v6e.
    return max(min(cap // 2 - 8 * _MiB, 72 * _MiB), 16 * _MiB)


def _vmem_limit_bytes(cap):
    # Scoped VMEM limit handed to Mosaic: 48 MiB on v7x, 96 MiB on v5e/v6e.
    return min(cap * 3 // 4, 96 * _MiB)


def _pick_frames_per_step(N, H, W, Cin_p, Cmid_p, Cout_p, budget):
    """Frames per grid step F: divisor of N with F*H*W >= 512 if possible, capped by
    the per-core VMEM budget, and keeping the grid length >= 2 (both v7x TCs busy)."""
    Wp = _round_up(W + 2, 8)
    per_frame = (2 * H * W * Cin_p * 2                       # x block (bf16, 2x buffered)
                 + 2 * H * W * Cout_p * 2                    # out block (bf16, 2x buffered)
                 + (H + 2) * Wp * Cmid_p * 2                 # padded conv2 scratch (bf16)
                 + H * W * (Cmid_p + Cout_p) * 4             # fused conv1/downsample result
                 + H * W * (6 * Cmid_p + 6 * Cout_p) * 4)    # t1/acc/t2/t3/out temps (rough)
    weight_bytes = 2 * 2 * (Cin_p * (Cmid_p + Cout_p)
                            + 9 * Cmid_p * Cmid_p + Cmid_p * Cout_p)
    cap = max(1, (budget - weight_bytes) // max(per_frame, 1))
    max_f = N if N < 2 else N // 2           # keep >= 2 grid steps when possible
    target = max(1, -(-512 // (H * W)))      # aim for M = F*H*W >= 512 rows
    best = 1
    for f in range(1, max_f + 1):
        if N % f == 0 and f <= cap:
            best = f
            if f >= target:
                break
    return best


# --------------------------- weight prep (hoisted) ---------------------------
def _prepare_params(params):
    """Fold/pad/cast weights once: channels zero-padded to multiples of 128."""
    Cin, Cmid = params["w1"].shape
    Cout = params["w3"].shape[1]
    Cin_p = _round_up(Cin, 128)
    Cmid_p = _round_up(Cmid, 128)
    Cout_p = _round_up(Cout, 128)

    def pad2(w, r, c):
        return jnp.pad(w, ((0, r - w.shape[0]), (0, c - w.shape[1])))

    w1d = jnp.concatenate([pad2(params["w1"], Cin_p, Cmid_p),
                           pad2(params["wd"], Cin_p, Cout_p)],
                          axis=1).astype(jnp.bfloat16)
    s1d = jnp.concatenate([pad2(params["s1"], 1, Cmid_p),
                           pad2(params["sd"], 1, Cout_p)], axis=1).astype(jnp.float32)
    b1d = jnp.concatenate([pad2(params["b1"], 1, Cmid_p),
                           pad2(params["bd"], 1, Cout_p)], axis=1).astype(jnp.float32)

    w2 = params["w2"].reshape(3, 3, Cmid, Cmid)
    w2 = jnp.pad(w2, ((0, 0), (0, 0), (0, Cmid_p - Cmid),
                      (0, Cmid_p - Cmid))).astype(jnp.bfloat16)
    w3 = pad2(params["w3"], Cmid_p, Cout_p).astype(jnp.bfloat16)
    s2 = pad2(params["s2"], 1, Cmid_p).astype(jnp.float32)
    b2 = pad2(params["b2"], 1, Cmid_p).astype(jnp.float32)
    s3 = pad2(params["s3"], 1, Cout_p).astype(jnp.float32)
    b3 = pad2(params["b3"], 1, Cout_p).astype(jnp.float32)

    return dict(w1d=w1d, s1d=s1d, b1d=b1d, w2=w2, s2=s2, b2=b2,
                w3=w3, s3=s3, b3=b3)


# --------------------------- forward ---------------------------
def _forward_once(x, prep, cout):
    """x: (B, C, T, H, W) float32 -> (B, cout, T, H, W) float32."""
    B, C, T, H, W = x.shape
    w1d, s1d, b1d = prep["w1d"], prep["s1d"], prep["b1d"]
    w2, s2, b2 = prep["w2"], prep["s2"], prep["b2"]
    w3, s3, b3 = prep["w3"], prep["s3"], prep["b3"]
    Cin_p = w1d.shape[0]
    Cmid_p, Cout_p = w3.shape
    N = B * T

    # NCTHW -> (frames, spatial, channels), channels zero-padded to a lane-dense width.
    xb = jnp.transpose(x, (0, 2, 3, 4, 1)).reshape(N, H * W, C)
    xb = jnp.pad(xb, ((0, 0), (0, 0), (0, Cin_p - C))).astype(jnp.bfloat16)

    cap = _vmem_capacity_bytes()
    F = _pick_frames_per_step(N, H, W, Cin_p, Cmid_p, Cout_p, _vmem_budget_bytes(cap))
    Wp = _round_up(W + 2, 8)

    kernel = functools.partial(bottleneck_kernel, H=H, W=W, Cmid_p=Cmid_p)

    weight_bytes = sum(int(a.size) * a.dtype.itemsize
                       for a in (w1d, s1d, b1d, w2, s2, b2, w3, s3, b3))
    cost = pl.CostEstimate(
        flops=2 * N * H * W * (Cin_p * (Cmid_p + Cout_p)
                               + 9 * Cmid_p * Cmid_p + Cmid_p * Cout_p),
        transcendentals=0,
        bytes_accessed=int(xb.size) * 2 + N * H * W * Cout_p * 2 + weight_bytes)

    grid_spec = pltpu.PrefetchScalarGridSpec(
        num_scalar_prefetch=0,
        grid=(N // F,),
        in_specs=[
            pl.BlockSpec((F, H * W, Cin_p), lambda n: (n, 0, 0)),
            pl.BlockSpec((Cin_p, Cmid_p + Cout_p), lambda n: (0, 0)),
            pl.BlockSpec((1, Cmid_p + Cout_p), lambda n: (0, 0)),
            pl.BlockSpec((1, Cmid_p + Cout_p), lambda n: (0, 0)),
            pl.BlockSpec((3, 3, Cmid_p, Cmid_p), lambda n: (0, 0, 0, 0)),
            pl.BlockSpec((1, Cmid_p), lambda n: (0, 0)),
            pl.BlockSpec((1, Cmid_p), lambda n: (0, 0)),
            pl.BlockSpec((Cmid_p, Cout_p), lambda n: (0, 0)),
            pl.BlockSpec((1, Cout_p), lambda n: (0, 0)),
            pl.BlockSpec((1, Cout_p), lambda n: (0, 0)),
        ],
        out_specs=pl.BlockSpec((F, H * W, Cout_p), lambda n: (n, 0, 0)),
        scratch_shapes=[pltpu.VMEM((F, H + 2, Wp, Cmid_p), jnp.bfloat16)],
    )

    out = pl.pallas_call(
        kernel,
        out_shape=jax.ShapeDtypeStruct((N, H * W, Cout_p), jnp.bfloat16),
        grid_spec=grid_spec,
        compiler_params=pltpu.CompilerParams(
            dimension_semantics=("parallel",),
            vmem_limit_bytes=_vmem_limit_bytes(cap)),
        cost_estimate=cost,
    )(xb, w1d, s1d, b1d, w2, s2, b2, w3, s3, b3)

    out = out[:, :, :cout].astype(jnp.float32)
    return jnp.transpose(out.reshape(B, T, H, W, cout), (0, 4, 1, 2, 3))


@functools.partial(jax.jit, static_argnames=("cout",))
def _forward_once_jit(x, prep, *, cout):
    return _forward_once(x, prep, cout)


def make_forward(params):
    """Pad/cast/fold weights once and return a jitted NCTHW forward function."""
    prep = _prepare_params(params)
    cout = int(params["w3"].shape[1])
    return lambda x: _forward_once_jit(x, prep, cout=cout)


def bottleneck3d_forward(x_tuple, params):
    """Matches Bottleneck3d.forward: x is a tuple (xh, xl)."""
    fwd = make_forward(params)
    xh, xl = x_tuple
    return fwd(xh), fwd(xl)


# ---------------- pure-JAX reference (same bf16 operand casts, f32 accumulation) ----------------
def _ref_forward_once(x, params):
    B, C, T, H, W = x.shape
    Cmid = params["w1"].shape[1]
    Cout = params["w3"].shape[1]
    bf = jnp.bfloat16
    f32 = jnp.float32
    xb = jnp.transpose(x, (0, 2, 3, 4, 1)).reshape(B * T, H, W, C).astype(bf)

    t1 = jnp.einsum("bhwi,io->bhwo", xb, params["w1"].astype(bf),
                    preferred_element_type=f32)
    t1 = jnp.maximum(t1 * params["s1"] + params["b1"], 0.0)
    res = jnp.einsum("bhwi,io->bhwo", xb, params["wd"].astype(bf),
                     preferred_element_type=f32) * params["sd"] + params["bd"]

    tp = jnp.pad(t1.astype(bf), ((0, 0), (1, 1), (1, 1), (0, 0)))
    acc = jnp.zeros((B * T, H, W, Cmid), f32)
    for ky in range(3):
        for kx in range(3):
            acc = acc + jnp.einsum("bhwi,io->bhwo",
                                   tp[:, ky:ky + H, kx:kx + W, :],
                                   params["w2"][ky * 3 + kx].astype(bf),
                                   preferred_element_type=f32)
    t2 = jnp.maximum(acc * params["s2"] + params["b2"], 0.0)
    t3 = jnp.einsum("bhwi,io->bhwo", t2.astype(bf), params["w3"].astype(bf),
                    preferred_element_type=f32) * params["s3"] + params["b3"]
    out = jnp.maximum(t3 + res, 0.0)
    return jnp.transpose(out.reshape(B, T, H, W, Cout), (0, 4, 1, 2, 3))


def make_params(key, c_in, planes):
    """Deterministic synthetic weights for the inflated bottleneck (eval-mode BN folded)."""
    c_out = planes * 4
    eps = 1e-5
    ks = jax.random.split(key, 16)

    def bn_fold(kg, kb, km, kv, c):
        gamma = 1.0 + 0.1 * jax.random.normal(kg, (c,), jnp.float32)
        beta = 0.1 * jax.random.normal(kb, (c,), jnp.float32)
        mean = 0.1 * jax.random.normal(km, (c,), jnp.float32)
        var = 0.5 + jax.random.uniform(kv, (c,), jnp.float32)
        scale = gamma / jnp.sqrt(var + eps)
        bias = beta - mean * scale
        return scale.reshape(1, c), bias.reshape(1, c)

    w1 = 0.2 * jax.random.normal(ks[0], (c_in, planes), jnp.float32)
    w2 = 0.1 * jax.random.normal(ks[1], (9, planes, planes), jnp.float32)
    w3 = 0.2 * jax.random.normal(ks[2], (planes, c_out), jnp.float32)
    wd = 0.2 * jax.random.normal(ks[3], (c_in, c_out), jnp.float32)

    s1, b1 = bn_fold(ks[4], ks[5], ks[6], ks[7], planes)
    s2, b2 = bn_fold(ks[8], ks[9], ks[10], ks[11], planes)
    s3, b3 = bn_fold(ks[12], ks[13], ks[14], ks[15], c_out)
    kd = jax.random.split(ks[15], 4)
    sd, bd = bn_fold(kd[0], kd[1], kd[2], kd[3], c_out)

    return dict(w1=w1, s1=s1, b1=b1, w2=w2, s2=s2, b2=b2,
                w3=w3, s3=s3, b3=b3, wd=wd, sd=sd, bd=bd)


if __name__ == "__main__":
    key = jax.random.PRNGKey(0)
    k_xh, k_xl, k_p = jax.random.split(key, 3)

    B, C_IN, T = 2, 4, 2
    PLANES = 4                  # bottleneck width; output channels = 4 * PLANES = 16
    H, W = 8, 8                 # xh spatial; xl is half resolution

    xh = jax.random.normal(k_xh, (B, C_IN, T, H, W), jnp.float32)
    xl = jax.random.normal(k_xl, (B, C_IN, T, H // 2, W // 2), jnp.float32)
    params = make_params(k_p, C_IN, PLANES)

    fwd = make_forward(params)          # weight prep hoisted; forward is jitted
    outh = jax.block_until_ready(fwd(xh))
    outl = jax.block_until_ready(fwd(xl))

    # sanity check against a pure-JAX reference (same bf16 operand casts)
    refh = _ref_forward_once(xh, params)
    refl = _ref_forward_once(xl, params)
    assert outh.shape == (B, 4 * PLANES, T, H, W)
    assert outl.shape == (B, 4 * PLANES, T, H // 2, W // 2)
    assert jnp.allclose(outh, refh, atol=2e-2, rtol=2e-2)
    assert jnp.allclose(outl, refl, atol=2e-2, rtol=2e-2)

    print("KERNEL_OK")
</pallas_src>

<mosaic_0001>
module attributes {stable_mosaic.version = 11 : i64} {
  func.func @bottleneck_kernel(%arg0: i32, %arg1: memref<2x64x128xbf16, #tpu.memory_space<vmem>>, %arg2: memref<128x256xbf16, #tpu.memory_space<vmem>>, %arg3: memref<1x256xf32, #tpu.memory_space<vmem>>, %arg4: memref<1x256xf32, #tpu.memory_space<vmem>>, %arg5: memref<3x3x128x128xbf16, #tpu.memory_space<vmem>>, %arg6: memref<1x128xf32, #tpu.memory_space<vmem>>, %arg7: memref<1x128xf32, #tpu.memory_space<vmem>>, %arg8: memref<128x128xbf16, #tpu.memory_space<vmem>>, %arg9: memref<1x128xf32, #tpu.memory_space<vmem>>, %arg10: memref<1x128xf32, #tpu.memory_space<vmem>>, %arg11: memref<2x64x128xbf16, #tpu.memory_space<vmem>>, %arg12: memref<2x10x16x128xbf16, #tpu.memory_space<vmem>>) attributes {dimension_semantics = [#tpu.dimension_semantics<parallel>], iteration_bounds = array<i64: 2>, scalar_prefetch = 0 : i64, scratch_operands = 1 : i64, tpu.core_type = #tpu.core_type<tc>, window_params = [{transform_indices = @transform_0, window_bounds = array<i64: 2, 64, 128>}, {pipeline_mode = #tpu.pipeline_mode<synchronous>, transform_indices = @transform_1, window_bounds = array<i64: 128, 256>}, {pipeline_mode = #tpu.pipeline_mode<synchronous>, transform_indices = @transform_2, window_bounds = array<i64: 1, 256>}, {pipeline_mode = #tpu.pipeline_mode<synchronous>, transform_indices = @transform_3, window_bounds = array<i64: 1, 256>}, {pipeline_mode = #tpu.pipeline_mode<synchronous>, transform_indices = @transform_4, window_bounds = array<i64: 3, 3, 128, 128>}, {pipeline_mode = #tpu.pipeline_mode<synchronous>, transform_indices = @transform_5, window_bounds = array<i64: 1, 128>}, {pipeline_mode = #tpu.pipeline_mode<synchronous>, transform_indices = @transform_6, window_bounds = array<i64: 1, 128>}, {pipeline_mode = #tpu.pipeline_mode<synchronous>, transform_indices = @transform_7, window_bounds = array<i64: 128, 128>}, {pipeline_mode = #tpu.pipeline_mode<synchronous>, transform_indices = @transform_8, window_bounds = array<i64: 1, 128>}, {pipeline_mode = #tpu.pipeline_mode<synchronous>, transform_indices = @transform_9, window_bounds = array<i64: 1, 128>}, {transform_indices = @transform_10, window_bounds = array<i64: 2, 64, 128>}]} {
    %c0 = arith.constant 0 : index
    %c0_0 = arith.constant 0 : index
    %c0_1 = arith.constant 0 : index
    %0 = vector.load %arg1[%c0, %c0_0, %c0_1] : memref<2x64x128xbf16, #tpu.memory_space<vmem>>, vector<2x64x128xbf16>
    %1 = vector.shape_cast %0 : vector<2x64x128xbf16> to vector<128x128xbf16>
    %c0_2 = arith.constant 0 : index
    %c0_3 = arith.constant 0 : index
    %2 = vector.load %arg2[%c0_2, %c0_3] : memref<128x256xbf16, #tpu.memory_space<vmem>>, vector<128x256xbf16>
    %cst = arith.constant dense<0.000000e+00> : vector<128x256xf32>
    %3 = tpu.matmul %1, %2, %cst {dimension_numbers = #tpu.dot_dimension_numbers<[1], [0], [0], [1], [0, 0, 1, 1], [], []>} : vector<128x128xbf16>, vector<128x256xbf16>, vector<128x256xf32> -> vector<128x256xf32>
    %c0_4 = arith.constant 0 : index
    %c0_5 = arith.constant 0 : index
    %4 = vector.load %arg3[%c0_4, %c0_5] : memref<1x256xf32, #tpu.memory_space<vmem>>, vector<1x256xf32>
    %5 = vector.broadcast %4 : vector<1x256xf32> to vector<128x256xf32>
    %6 = arith.mulf %3, %5 : vector<128x256xf32>
    %c0_6 = arith.constant 0 : index
    %c0_7 = arith.constant 0 : index
    %7 = vector.load %arg4[%c0_6, %c0_7] : memref<1x256xf32, #tpu.memory_space<vmem>>, vector<1x256xf32>
    %8 = vector.broadcast %7 : vector<1x256xf32> to vector<128x256xf32>
    %9 = arith.addf %6, %8 : vector<128x256xf32>
    %10 = vector.extract_strided_slice %9 {offsets = [0, 0], sizes = [128, 128], strides = [1, 1]} : vector<128x256xf32> to vector<128x128xf32>
    %cst_8 = arith.constant 0.000000e+00 : f32
    %11 = vector.broadcast %cst_8 : f32 to vector<128x128xf32>
    %12 = arith.maximumf %10, %11 : vector<128x128xf32>
    %13 = vector.extract_strided_slice %9 {offsets = [0, 128], sizes = [128, 128], strides = [1, 1]} : vector<128x256xf32> to vector<128x128xf32>
    %cst_9 = arith.constant 0.000000e+00 : bf16
    %14 = vector.broadcast %cst_9 : bf16 to vector<2x1x16x128xbf16>
    %c0_10 = arith.constant 0 : index
    %c0_11 = arith.constant 0 : index
    %c0_12 = arith.constant 0 : index
    %c0_13 = arith.constant 0 : index
    %15 = vector.load %arg12[%c0_10, %c0_11, %c0_12, %c0_13] : memref<2x10x16x128xbf16, #tpu.memory_space<vmem>>, vector<2x1x16x128xbf16>
    tpu.vector_store %arg12[%c0_10, %c0_11, %c0_12, %c0_13], %14 {strides = array<i32>} : memref<2x10x16x128xbf16, #tpu.memory_space<vmem>>, vector<2x1x16x128xbf16>,
    %cst_14 = arith.constant 0.000000e+00 : bf16
    %16 = vector.broadcast %cst_14 : bf16 to vector<2x1x16x128xbf16>
    %c0_15 = arith.constant 0 : index
    %c9 = arith.constant 9 : index
    %c0_16 = arith.constant 0 : index
    %c0_17 = arith.constant 0 : index
    %17 = vector.load %arg12[%c0_15, %c9, %c0_16, %c0_17] : memref<2x10x16x128xbf16, #tpu.memory_space<vmem>>, vector<2x1x16x128xbf16>
    tpu.vector_store %arg12[%c0_15, %c9, %c0_16, %c0_17], %16 {strides = array<i32>} : memref<2x10x16x128xbf16, #tpu.memory_space<vmem>>, vector<2x1x16x128xbf16>,
    %cst_18 = arith.constant 0.000000e+00 : bf16
    %18 = vector.broadcast %cst_18 : bf16 to vector<2x8x1x128xbf16>
    %c0_19 = arith.constant 0 : index
    %c1 = arith.constant 1 : index
    %c0_20 = arith.constant 0 : index
    %c0_21 = arith.constant 0 : index
    %19 = vector.load %arg12[%c0_19, %c1, %c0_20, %c0_21] : memref<2x10x16x128xbf16, #tpu.memory_space<vmem>>, vector<2x8x1x128xbf16>
    tpu.vector_store %arg12[%c0_19, %c1, %c0_20, %c0_21], %18 {strides = array<i32>} : memref<2x10x16x128xbf16, #tpu.memory_space<vmem>>, vector<2x8x1x128xbf16>,
    %cst_22 = arith.constant 0.000000e+00 : bf16
    %20 = vector.broadcast %cst_22 : bf16 to vector<2x8x1x128xbf16>
    %c0_23 = arith.constant 0 : index
    %c1_24 = arith.constant 1 : index
    %c9_25 = arith.constant 9 : index
    %c0_26 = arith.constant 0 : index
    %21 = vector.load %arg12[%c0_23, %c1_24, %c9_25, %c0_26] : memref<2x10x16x128xbf16, #tpu.memory_space<vmem>>, vector<2x8x1x128xbf16>
    tpu.vector_store %arg12[%c0_23, %c1_24, %c9_25, %c0_26], %20 {strides = array<i32>} : memref<2x10x16x128xbf16, #tpu.memory_space<vmem>>, vector<2x8x1x128xbf16>,
    %22 = arith.truncf %12 : vector<128x128xf32> to vector<128x128xbf16>
    %23 = vector.shape_cast %22 : vector<128x128xbf16> to vector<2x8x8x128xbf16>
    %c0_27 = arith.constant 0 : index
    %c1_28 = arith.constant 1 : index
    %c1_29 = arith.constant 1 : index
    %c0_30 = arith.constant 0 : index
    %24 = vector.load %arg12[%c0_27, %c1_28, %c1_29, %c0_30] : memref<2x10x16x128xbf16, #tpu.memory_space<vmem>>, vector<2x8x8x128xbf16>
    tpu.vector_store %arg12[%c0_27, %c1_28, %c1_29, %c0_30], %23 {strides = array<i32>} : memref<2x10x16x128xbf16, #tpu.memory_space<vmem>>, vector<2x8x8x128xbf16>,
    %c0_31 = arith.constant 0 : index
    %c0_32 = arith.constant 0 : index
    %c0_33 = arith.constant 0 : index
    %c0_34 = arith.constant 0 : index
    %25 = vector.load %arg12[%c0_31, %c0_32, %c0_33, %c0_34] : memref<2x10x16x128xbf16, #tpu.memory_space<vmem>>, vector<2x8x8x128xbf16>
    %26 = vector.shape_cast %25 : vector<2x8x8x128xbf16> to vector<128x128xbf16>
    %c0_35 = arith.constant 0 : index
    %c0_36 = arith.constant 0 : index
    %c0_37 = arith.constant 0 : index
    %c0_38 = arith.constant 0 : index
    %27 = vector.load %arg5[%c0_35, %c0_36, %c0_37, %c0_38] : memref<3x3x128x128xbf16, #tpu.memory_space<vmem>>, vector<1x1x128x128xbf16>
    %28 = vector.shape_cast %27 : vector<1x1x128x128xbf16> to vector<128x128xbf16>
    %cst_39 = arith.constant dense<0.000000e+00> : vector<128x128xf32>
    %29 = tpu.matmul %26, %28, %cst_39 {dimension_numbers = #tpu.dot_dimension_numbers<[1], [0], [0], [1], [0, 0, 1, 1], [], []>} : vector<128x128xbf16>, vector<128x128xbf16>, vector<128x128xf32> -> vector<128x128xf32>
    %c0_40 = arith.constant 0 : index
    %c0_41 = arith.constant 0 : index
    %c1_42 = arith.constant 1 : index
    %c0_43 = arith.constant 0 : index
    %30 = vector.load %arg12[%c0_40, %c0_41, %c1_42, %c0_43] : memref<2x10x16x128xbf16, #tpu.memory_space<vmem>>, vector<2x8x8x128xbf16>
    %31 = vector.shape_cast %30 : vector<2x8x8x128xbf16> to vector<128x128xbf16>
    %c0_44 = arith.constant 0 : index
    %c1_45 = arith.constant 1 : index
    %c0_46 = arith.constant 0 : index
    %c0_47 = arith.constant 0 : index
    %32 = vector.load %arg5[%c0_44, %c1_45, %c0_46, %c0_47] : memref<3x3x128x128xbf16, #tpu.memory_space<vmem>>, vector<1x1x128x128xbf16>
    %33 = vector.shape_cast %32 : vector<1x1x128x128xbf16> to vector<128x128xbf16>
    %cst_48 = arith.constant dense<0.000000e+00> : vector<128x128xf32>
    %34 = tpu.matmul %31, %33, %cst_48 {dimension_numbers = #tpu.dot_dimension_numbers<[1], [0], [0], [1], [0, 0, 1, 1], [], []>} : vector<128x128xbf16>, vector<128x128xbf16>, vector<128x128xf32> -> vector<128x128xf32>
    %35 = arith.addf %29, %34 : vector<128x128xf32>
    %c0_49 = arith.constant 0 : index
    %c0_50 = arith.constant 0 : index
    %c2 = arith.constant 2 : index
    %c0_51 = arith.constant 0 : index
    %36 = vector.load %arg12[%c0_49, %c0_50, %c2, %c0_51] : memref<2x10x16x128xbf16, #tpu.memory_space<vmem>>, vector<2x8x8x128xbf16>
    %37 = vector.shape_cast %36 : vector<2x8x8x128xbf16> to vector<128x128xbf16>
    %c0_52 = arith.constant 0 : index
    %c2_53 = arith.constant 2 : index
    %c0_54 = arith.constant 0 : index
    %c0_55 = arith.constant 0 : index
    %38 = vector.load %arg5[%c0_52, %c2_53, %c0_54, %c0_55] : memref<3x3x128x128xbf16, #tpu.memory_space<vmem>>, vector<1x1x128x128xbf16>
    %39 = vector.shape_cast %38 : vector<1x1x128x128xbf16> to vector<128x128xbf16>
    %cst_56 = arith.constant dense<0.000000e+00> : vector<128x128xf32>
    %40 = tpu.matmul %37, %39, %cst_56 {dimension_numbers = #tpu.dot_dimension_numbers<[1], [0], [0], [1], [0, 0, 1, 1], [], []>} : vector<128x128xbf16>, vector<128x128xbf16>, vector<128x128xf32> -> vector<128x128xf32>
    %41 = arith.addf %35, %40 : vector<128x128xf32>
    %c0_57 = arith.constant 0 : index
    %c1_58 = arith.constant 1 : index
    %c0_59 = arith.constant 0 : index
    %c0_60 = arith.constant 0 : index
    %42 = vector.load %arg12[%c0_57, %c1_58, %c0_59, %c0_60] : memref<2x10x16x128xbf16, #tpu.memory_space<vmem>>, vector<2x8x8x128xbf16>
    %43 = vector.shape_cast %42 : vector<2x8x8x128xbf16> to vector<128x128xbf16>
    %c1_61 = arith.constant 1 : index
    %c0_62 = arith.constant 0 : index
    %c0_63 = arith.constant 0 : index
    %c0_64 = arith.constant 0 : index
    %44 = vector.load %arg5[%c1_61, %c0_62, %c0_63, %c0_64] : memref<3x3x128x128xbf16, #tpu.memory_space<vmem>>, vector<1x1x128x128xbf16>
    %45 = vector.shape_cast %44 : vector<1x1x128x128xbf16> to vector<128x128xbf16>
    %cst_65 = arith.constant dense<0.000000e+00> : vector<128x128xf32>
    %46 = tpu.matmul %43, %45, %cst_65 {dimension_numbers = #tpu.dot_dimension_numbers<[1], [0], [0], [1], [0, 0, 1, 1], [], []>} : vector<128x128xbf16>, vector<128x128xbf16>, vector<128x128xf32> -> vector<128x128xf32>
    %47 = arith.addf %41, %46 : vector<128x128xf32>
    %c0_66 = arith.constant 0 : index
    %c1_67 = arith.constant 1 : index
    %c1_68 = arith.constant 1 : index
    %c0_69 = arith.constant 0 : index
    %48 = vector.load %arg12[%c0_66, %c1_67, %c1_68, %c0_69] : memref<2x10x16x128xbf16, #tpu.memory_space<vmem>>, vector<2x8x8x128xbf16>
    %49 = vector.shape_cast %48 : vector<2x8x8x128xbf16> to vector<128x128xbf16>
    %c1_70 = arith.constant 1 : index
    %c1_71 = arith.constant 1 : index
    %c0_72 = arith.constant 0 : index
    %c0_73 = arith.constant 0 : index
    %50 = vector.load %arg5[%c1_70, %c1_71, %c0_72, %c0_73] : memref<3x3x128x128xbf16, #tpu.memory_space<vmem>>, vector<1x1x128x128xbf16>
    %51 = vector.shape_cast %50 : vector<1x1x128x128xbf16> to vector<128x128xbf16>
    %cst_74 = arith.constant dense<0.000000e+00> : vector<128x128xf32>
    %52 = tpu.matmul %49, %51, %cst_74 {dimension_numbers = #tpu.dot_dimension_numbers<[1], [0], [0], [1], [0, 0, 1, 1], [], []>} : vector<128x128xbf16>, vector<128x128xbf16>, vector<128x128xf32> -> vector<128x128xf32>
    %53 = arith.addf %47, %52 : vector<128x128xf32>
    %c0_75 = arith.constant 0 : index
    %c1_76 = arith.constant 1 : index
    %c2_77 = arith.constant 2 : index
    %c0_78 = arith.constant 0 : index
    %54 = vector.load %arg12[%c0_75, %c1_76, %c2_77, %c0_78] : memref<2x10x16x128xbf16, #tpu.memory_space<vmem>>, vector<2x8x8x128xbf16>
    %55 = vector.shape_cast %54 : vector<2x8x8x128xbf16> to vector<128x128xbf16>
    %c1_79 = arith.constant 1 : index
    %c2_80 = arith.constant 2 : index
    %c0_81 = arith.constant 0 : index
    %c0_82 = arith.constant 0 : index
    %56 = vector.load %arg5[%c1_79, %c2_80, %c0_81, %c0_82] : memref<3x3x128x128xbf16, #tpu.memory_space<vmem>>, vector<1x1x128x128xbf16>
    %57 = vector.shape_cast %56 : vector<1x1x128x128xbf16> to vector<128x128xbf16>
    %cst_83 = arith.constant dense<0.000000e+00> : vector<128x128xf32>
    %58 = tpu.matmul %55, %57, %cst_83 {dimension_numbers = #tpu.dot_dimension_numbers<[1], [0], [0], [1], [0, 0, 1, 1], [], []>} : vector<128x128xbf16>, vector<128x128xbf16>, vector<128x128xf32> -> vector<128x128xf32>
    %59 = arith.addf %53, %58 : vector<128x128xf32>
    %c0_84 = arith.constant 0 : index
    %c2_85 = arith.constant 2 : index
    %c0_86 = arith.constant 0 : index
    %c0_87 = arith.constant 0 : index
    %60 = vector.load %arg12[%c0_84, %c2_85, %c0_86, %c0_87] : memref<2x10x16x128xbf16, #tpu.memory_space<vmem>>, vector<2x8x8x128xbf16>
    %61 = vector.shape_cast %60 : vector<2x8x8x128xbf16> to vector<128x128xbf16>
    %c2_88 = arith.constant 2 : index
    %c0_89 = arith.constant 0 : index
    %c0_90 = arith.constant 0 : index
    %c0_91 = arith.constant 0 : index
    %62 = vector.load %arg5[%c2_88, %c0_89, %c0_90, %c0_91] : memref<3x3x128x128xbf16, #tpu.memory_space<vmem>>, vector<1x1x128x128xbf16>
    %63 = vector.shape_cast %62 : vector<1x1x128x128xbf16> to vector<128x128xbf16>
    %cst_92 = arith.constant dense<0.000000e+00> : vector<128x128xf32>
    %64 = tpu.matmul %61, %63, %cst_92 {dimension_numbers = #tpu.dot_dimension_numbers<[1], [0], [0], [1], [0, 0, 1, 1], [], []>} : vector<128x128xbf16>, vector<128x128xbf16>, vector<128x128xf32> -> vector<128x128xf32>
    %65 = arith.addf %59, %64 : vector<128x128xf32>
    %c0_93 = arith.constant 0 : index
    %c2_94 = arith.constant 2 : index
    %c1_95 = arith.constant 1 : index
    %c0_96 = arith.constant 0 : index
    %66 = vector.load %arg12[%c0_93, %c2_94, %c1_95, %c0_96] : memref<2x10x16x128xbf16, #tpu.memory_space<vmem>>, vector<2x8x8x128xbf16>
    %67 = vector.shape_cast %66 : vector<2x8x8x128xbf16> to vector<128x128xbf16>
    %c2_97 = arith.constant 2 : index
    %c1_98 = arith.constant 1 : index
    %c0_99 = arith.constant 0 : index
    %c0_100 = arith.constant 0 : index
    %68 = vector.load %arg5[%c2_97, %c1_98, %c0_99, %c0_100] : memref<3x3x128x128xbf16, #tpu.memory_space<vmem>>, vector<1x1x128x128xbf16>
    %69 = vector.shape_cast %68 : vector<1x1x128x128xbf16> to vector<128x128xbf16>
    %cst_101 = arith.constant dense<0.000000e+00> : vector<128x128xf32>
    %70 = tpu.matmul %67, %69, %cst_101 {dimension_numbers = #tpu.dot_dimension_numbers<[1], [0], [0], [1], [0, 0, 1, 1], [], []>} : vector<128x128xbf16>, vector<128x128xbf16>, vector<128x128xf32> -> vector<128x128xf32>
    %71 = arith.addf %65, %70 : vector<128x128xf32>
    %c0_102 = arith.constant 0 : index
    %c2_103 = arith.constant 2 : index
    %c2_104 = arith.constant 2 : index
    %c0_105 = arith.constant 0 : index
    %72 = vector.load %arg12[%c0_102, %c2_103, %c2_104, %c0_105] : memref<2x10x16x128xbf16, #tpu.memory_space<vmem>>, vector<2x8x8x128xbf16>
    %73 = vector.shape_cast %72 : vector<2x8x8x128xbf16> to vector<128x128xbf16>
    %c2_106 = arith.constant 2 : index
    %c2_107 = arith.constant 2 : index
    %c0_108 = arith.constant 0 : index
    %c0_109 = arith.constant 0 : index
    %74 = vector.load %arg5[%c2_106, %c2_107, %c0_108, %c0_109] : memref<3x3x128x128xbf16, #tpu.memory_space<vmem>>, vector<1x1x128x128xbf16>
    %75 = vector.shape_cast %74 : vector<1x1x128x128xbf16> to vector<128x128xbf16>
    %cst_110 = arith.constant dense<0.000000e+00> : vector<128x128xf32>
    %76 = tpu.matmul %73, %75, %cst_110 {dimension_numbers = #tpu.dot_dimension_numbers<[1], [0], [0], [1], [0, 0, 1, 1], [], []>} : vector<128x128xbf16>, vector<128x128xbf16>, vector<128x128xf32> -> vector<128x128xf32>
    %77 = arith.addf %71, %76 : vector<128x128xf32>
    %c0_111 = arith.constant 0 : index
    %c0_112 = arith.constant 0 : index
    %78 = vector.load %arg6[%c0_111, %c0_112] : memref<1x128xf32, #tpu.memory_space<vmem>>, vector<1x128xf32>
    %79 = vector.broadcast %78 : vector<1x128xf32> to vector<128x128xf32>
    %80 = arith.mulf %77, %79 : vector<128x128xf32>
    %c0_113 = arith.constant 0 : index
    %c0_114 = arith.constant 0 : index
    %81 = vector.load %arg7[%c0_113, %c0_114] : memref<1x128xf32, #tpu.memory_space<vmem>>, vector<1x128xf32>
    %82 = vector.broadcast %81 : vector<1x128xf32> to vector<128x128xf32>
    %83 = arith.addf %80, %82 : vector<128x128xf32>
    %cst_115 = arith.constant 0.000000e+00 : f32
    %84 = vector.broadcast %cst_115 : f32 to vector<128x128xf32>
    %85 = arith.maximumf %83, %84 : vector<128x128xf32>
    %86 = arith.truncf %85 : vector<128x128xf32> to vector<128x128xbf16>
    %c0_116 = arith.constant 0 : index
    %c0_117 = arith.constant 0 : index
    %87 = vector.load %arg8[%c0_116, %c0_117] : memref<128x128xbf16, #tpu.memory_space<vmem>>, vector<128x128xbf16>
    %cst_118 = arith.constant dense<0.000000e+00> : vector<128x128xf32>
    %88 = tpu.matmul %86, %87, %cst_118 {dimension_numbers = #tpu.dot_dimension_numbers<[1], [0], [0], [1], [0, 0, 1, 1], [], []>} : vector<128x128xbf16>, vector<128x128xbf16>, vector<128x128xf32> -> vector<128x128xf32>
    %c0_119 = arith.constant 0 : index
    %c0_120 = arith.constant 0 : index
    %89 = vector.load %arg9[%c0_119, %c0_120] : memref<1x128xf32, #tpu.memory_space<vmem>>, vector<1x128xf32>
    %90 = vector.broadcast %89 : vector<1x128xf32> to vector<128x128xf32>
    %91 = arith.mulf %88, %90 : vector<128x128xf32>
    %c0_121 = arith.constant 0 : index
    %c0_122 = arith.constant 0 : index
    %92 = vector.load %arg10[%c0_121, %c0_122] : memref<1x128xf32, #tpu.memory_space<vmem>>, vector<1x128xf32>
    %93 = vector.broadcast %92 : vector<1x128xf32> to vector<128x128xf32>
    %94 = arith.addf %91, %93 : vector<128x128xf32>
    %95 = arith.addf %94, %13 : vector<128x128xf32>
    %cst_123 = arith.constant 0.000000e+00 : f32
    %96 = vector.broadcast %cst_123 : f32 to vector<128x128xf32>
    %97 = arith.maximumf %95, %96 : vector<128x128xf32>
    %98 = vector.shape_cast %97 : vector<128x128xf32> to vector<2x64x128xf32>
    %99 = arith.truncf %98 : vector<2x64x128xf32> to vector<2x64x128xbf16>
    %c0_124 = arith.constant 0 : index
    %c0_125 = arith.constant 0 : index
    %c0_126 = arith.constant 0 : index
    %100 = vector.load %arg11[%c0_124, %c0_125, %c0_126] : memref<2x64x128xbf16, #tpu.memory_space<vmem>>, vector<2x64x128xbf16>
    tpu.vector_store %arg11[%c0_124, %c0_125, %c0_126], %99 {strides = array<i32>} : memref<2x64x128xbf16, #tpu.memory_space<vmem>>, vector<2x64x128xbf16>,
    return
  }
  func.func @transform_0(%arg0: i32) -> (i32, i32, i32) {
    %c0_i32 = arith.constant 0 : i32
    %c0_i32_0 = arith.constant 0 : i32
    %c0_i32_1 = arith.constant 0 : i32
    return %arg0, %c0_i32, %c0_i32_0 : i32, i32, i32
  }
  func.func @transform_1(%arg0: i32) -> (i32, i32) {
    %c0_i32 = arith.constant 0 : i32
    %c0_i32_0 = arith.constant 0 : i32
    %c0_i32_1 = arith.constant 0 : i32
    return %c0_i32, %c0_i32_0 : i32, i32
  }
  func.func @transform_2(%arg0: i32) -> (i32, i32) {
    %c0_i32 = arith.constant 0 : i32
    %c0_i32_0 = arith.constant 0 : i32
    %c0_i32_1 = arith.constant 0 : i32
    return %c0_i32, %c0_i32_0 : i32, i32
  }
  func.func @transform_3(%arg0: i32) -> (i32, i32) {
    %c0_i32 = arith.constant 0 : i32
    %c0_i32_0 = arith.constant 0 : i32
    %c0_i32_1 = arith.constant 0 : i32
    return %c0_i32, %c0_i32_0 : i32, i32
  }
  func.func @transform_4(%arg0: i32) -> (i32, i32, i32, i32) {
    %c0_i32 = arith.constant 0 : i32
    %c0_i32_0 = arith.constant 0 : i32
    %c0_i32_1 = arith.constant 0 : i32
    %c0_i32_2 = arith.constant 0 : i32
    %c0_i32_3 = arith.constant 0 : i32
    return %c0_i32, %c0_i32_0, %c0_i32_1, %c0_i32_2 : i32, i32, i32, i32
  }
  func.func @transform_5(%arg0: i32) -> (i32, i32) {
    %c0_i32 = arith.constant 0 : i32
    %c0_i32_0 = arith.constant 0 : i32
    %c0_i32_1 = arith.constant 0 : i32
    return %c0_i32, %c0_i32_0 : i32, i32
  }
  func.func @transform_6(%arg0: i32) -> (i32, i32) {
    %c0_i32 = arith.constant 0 : i32
    %c0_i32_0 = arith.constant 0 : i32
    %c0_i32_1 = arith.constant 0 : i32
    return %c0_i32, %c0_i32_0 : i32, i32
  }
  func.func @transform_7(%arg0: i32) -> (i32, i32) {
    %c0_i32 = arith.constant 0 : i32
    %c0_i32_0 = arith.constant 0 : i32
    %c0_i32_1 = arith.constant 0 : i32
    return %c0_i32, %c0_i32_0 : i32, i32
  }
  func.func @transform_8(%arg0: i32) -> (i32, i32) {
    %c0_i32 = arith.constant 0 : i32
    %c0_i32_0 = arith.constant 0 : i32
    %c0_i32_1 = arith.constant 0 : i32
    return %c0_i32, %c0_i32_0 : i32, i32
  }
  func.func @transform_9(%arg0: i32) -> (i32, i32) {
    %c0_i32 = arith.constant 0 : i32
    %c0_i32_0 = arith.constant 0 : i32
    %c0_i32_1 = arith.constant 0 : i32
    return %c0_i32, %c0_i32_0 : i32, i32
  }
  func.func @transform_10(%arg0: i32) -> (i32, i32, i32) {
    %c0_i32 = arith.constant 0 : i32
    %c0_i32_0 = arith.constant 0 : i32
    %c0_i32_1 = arith.constant 0 : i32
    return %arg0, %c0_i32, %c0_i32_0 : i32, i32, i32
  }
}

</mosaic_0001>

<llo_original>
// kernel: _forward_once_jit.1
$region0: #{_forward_once_jit.1}
  #allocation0 [shape = 'u32[]', space=smem, size = 0x4, offset = 0x4, fixed_abs, tag = 'smem constant byte address 0x4 - core index']
  #allocation1 [shape = 'u32[144,128]{1,0:T(1,128)}', space=vmem, size = 0x12000, scoped, tag = 'internal scratch']
  #allocation2 [shape = 'bf16[2,10,16,128]{3,2,1,0:T(16,128)(2,1)}', space=vmem, size = 0x14000, scoped, tag = 'scratch operand']
  %s0 = inlined_call_operand.vmem [shape: bf16[4,64,128], index: 0, kind: input, shape index: {}]
  %s1 = inlined_call_operand.hbm [shape: bf16[128,256], index: 1, kind: input, shape index: {}]
  %s2 = inlined_call_operand.vmem [shape: f32[1,256], index: 2, kind: input, shape index: {}]
  %s3 = inlined_call_operand.vmem [shape: f32[1,256], index: 3, kind: input, shape index: {}]
  %s4 = inlined_call_operand.vmem [shape: bf16[3,3,128,128], index: 4, kind: input, shape index: {}]
  %s5 = inlined_call_operand.vmem [shape: f32[1,128], index: 5, kind: input, shape index: {}]
  %s6 = inlined_call_operand.vmem [shape: f32[1,128], index: 6, kind: input, shape index: {}]
  %s7 = inlined_call_operand.vmem [shape: bf16[128,128], index: 7, kind: input, shape index: {}]
  %s8 = inlined_call_operand.vmem [shape: f32[1,128], index: 8, kind: input, shape index: {}]
  %s9 = inlined_call_operand.vmem [shape: f32[1,128], index: 9, kind: input, shape index: {}]
  %s10 = inlined_call_operand.vmem [shape: bf16[4,64,128], index: 10, kind: output, shape index: {}]
  %s11 = sld [smem:[#allocation0]]
  $region77: #{_forward_once_jit.1} parent=0
    _
  %s13 = ssub.s32 1, %s11
  %s14 = scalar_select 0, %s13, %s11
  $region1: #{_forward_once_jit.1} parent=0
    #allocation3 [shape = 'u8[65536]{0}', space=vmem, size = 0x10000, scoped, tag = 'input window, operand 1, single buffered']
    #allocation4 [shape = 's32[2]{0}', space=sflag, size = 0x8, scoped, tag = 'scoped memory for _forward_once_jit.1']
    %15 = vsyncpa [#allocation4], 0
    loop: start=0, step=1, limit=4
    $region2: #{_forward_once_jit.1} parent=1 // loop_pre_header
      _
    $region3: #{_forward_once_jit.1} parent=1 // loop_header
      %s17 = sphi 0, %s21
      %p18 = scmp.ge.s32.totalorder %s17, 4
      %s27 = sphi 0, %s29
      %s30 = sphi 0, %s27
      %s31 = sphi 0, %s30
      %s47 = sphi 0, %s31
      %s51 = sphi 0, %s51
      %s53 = sphi 0, %s51
      %s54 = sphi 0, %s53
      %s68 = sphi 0, %s54
      %s72 = sphi 0, %s72
      %s74 = sphi 0, %s72
      %s75 = sphi 0, %s74
      %s89 = sphi 0, %s75
      %s93 = sphi 0, %s93
      %s95 = sphi 0, %s93
      %s96 = sphi 0, %s95
      %s110 = sphi 0, %s96
      %s114 = sphi 0, %s114
      %s116 = sphi 0, %s114
      %s117 = sphi 0, %s116
      %s131 = sphi 0, %s117
      %s135 = sphi 0, %s135
      %s137 = sphi 0, %s135
      %s138 = sphi 0, %s137
      %s152 = sphi 0, %s138
      %s156 = sphi 0, %s156
      %s158 = sphi 0, %s156
      %s159 = sphi 0, %s158
      %s173 = sphi 0, %s159
      %s177 = sphi 0, %s177
      %s179 = sphi 0, %s177
      %s180 = sphi 0, %s179
      %s194 = sphi 0, %s180
      %s198 = sphi 0, %s198
      %s200 = sphi 0, %s198
      %s201 = sphi 0, %s200
      %s215 = sphi 0, %s201
      %s219 = sphi 0, %s219
      %s221 = sphi 0, %s219
      %s222 = sphi 0, %s221
      %s236 = sphi 0, %s222
      %s242 = sphi 0, %s244
      %s245 = sphi 0, %s242
      %s246 = sphi 0, %s245
      %s262 = sphi 0, %s246
    $region4: #{_forward_once_jit.1} parent=1 // loop_header_branch
      %20 = sbr.rel (%p18) target = $region8
    $region5: #{_forward_once_jit.1} parent=1 // loop_body
      %s22 = ssub.s32 %s17, 1
      %s23 = ssub.s32 %s17, 2
      %s24 = sadd.s32 %s17, 1
      %s25 = ssub.s32 %s17, %s24
      %p26 = scmp.eq.s32.totalorder %s25, 0
      %s28 = sadd.s32 %s27, 1
      %s29 = scalar_select %p26, %s27, %s28
      %p32 = pneg %p26
      %p33 = scmp.eq.s32.totalorder %s17, 1
      %p34 = por %p32, %p33
      %p35 = scmp.ne.s32.totalorder %s27, %s30
      %p36 = scmp.eq.s32.totalorder %s17, 0
      %p37 = por %p35, %p36
      %p38 = scmp.ne.s32.totalorder %s27, %s30
      %p39 = scmp.eq.s32.totalorder %s22, 1
      %p40 = por %p38, %p39
      %p41 = scmp.ne.s32.totalorder %s30, %s31
      %p42 = scmp.eq.s32.totalorder %s22, 0
      %p43 = por %p41, %p42
      %p44 = scmp.ne.s32.totalorder %s30, %s31
      %p45 = scmp.eq.s32.totalorder %s23, 1
      %p46 = por %p44, %p45
      %p48 = scmp.ne.s32.totalorder %s31, %s47
      %p49 = scmp.eq.s32.totalorder %s23, 0
      %p50 = por %p48, %p49
      %s52 = sadd.s32 %s51, 1
      %p55 = scmp.eq.s32.totalorder %s17, 1
      %p56 = scmp.ne.s32.totalorder %s51, %s53
      %p57 = scmp.eq.s32.totalorder %s17, 0
      %p58 = por %p56, %p57
      %p59 = scmp.ne.s32.totalorder %s51, %s53
      %p60 = scmp.eq.s32.totalorder %s22, 1
      %p61 = por %p59, %p60
      %p62 = scmp.ne.s32.totalorder %s53, %s54
      %p63 = scmp.eq.s32.totalorder %s22, 0
      %p64 = por %p62, %p63
      %p65 = scmp.ne.s32.totalorder %s53, %s54
      %p66 = scmp.eq.s32.totalorder %s23, 1
      %p67 = por %p65, %p66
      %p69 = scmp.ne.s32.totalorder %s54, %s68
      %p70 = scmp.eq.s32.totalorder %s23, 0
      %p71 = por %p69, %p70
      %s73 = sadd.s32 %s72, 1
      %p76 = scmp.eq.s32.totalorder %s17, 1
      %p77 = scmp.ne.s32.totalorder %s72, %s74
      %p78 = scmp.eq.s32.totalorder %s17, 0
      %p79 = por %p77, %p78
      %p80 = scmp.ne.s32.totalorder %s72, %s74
      %p81 = scmp.eq.s32.totalorder %s22, 1
      %p82 = por %p80, %p81
      %p83 = scmp.ne.s32.totalorder %s74, %s75
      %p84 = scmp.eq.s32.totalorder %s22, 0
      %p85 = por %p83, %p84
      %p86 = scmp.ne.s32.totalorder %s74, %s75
      %p87 = scmp.eq.s32.totalorder %s23, 1
      %p88 = por %p86, %p87
      %p90 = scmp.ne.s32.totalorder %s75, %s89
      %p91 = scmp.eq.s32.totalorder %s23, 0
      %p92 = por %p90, %p91
      %s94 = sadd.s32 %s93, 1
      %p97 = scmp.eq.s32.totalorder %s17, 1
      %p98 = scmp.ne.s32.totalorder %s93, %s95
      %p99 = scmp.eq.s32.totalorder %s17, 0
      %p100 = por %p98, %p99
      %p101 = scmp.ne.s32.totalorder %s93, %s95
      %p102 = scmp.eq.s32.totalorder %s22, 1
      %p103 = por %p101, %p102
      %p104 = scmp.ne.s32.totalorder %s95, %s96
      %p105 = scmp.eq.s32.totalorder %s22, 0
      %p106 = por %p104, %p105
      %p107 = scmp.ne.s32.totalorder %s95, %s96
      %p108 = scmp.eq.s32.totalorder %s23, 1
      %p109 = por %p107, %p108
      %p111 = scmp.ne.s32.totalorder %s96, %s110
      %p112 = scmp.eq.s32.totalorder %s23, 0
      %p113 = por %p111, %p112
      %s115 = sadd.s32 %s114, 1
      %p118 = scmp.eq.s32.totalorder %s17, 1
      %p119 = scmp.ne.s32.totalorder %s114, %s116
      %p120 = scmp.eq.s32.totalorder %s17, 0
      %p121 = por %p119, %p120
      %p122 = scmp.ne.s32.totalorder %s114, %s116
      %p123 = scmp.eq.s32.totalorder %s22, 1
      %p124 = por %p122, %p123
      %p125 = scmp.ne.s32.totalorder %s116, %s117
      %p126 = scmp.eq.s32.totalorder %s22, 0
      %p127 = por %p125, %p126
      %p128 = scmp.ne.s32.totalorder %s116, %s117
      %p129 = scmp.eq.s32.totalorder %s23, 1
      %p130 = por %p128, %p129
      %p132 = scmp.ne.s32.totalorder %s117, %s131
      %p133 = scmp.eq.s32.totalorder %s23, 0
      %p134 = por %p132, %p133
      %s136 = sadd.s32 %s135, 1
      %p139 = scmp.eq.s32.totalorder %s17, 1
      %p140 = scmp.ne.s32.totalorder %s135, %s137
      %p141 = scmp.eq.s32.totalorder %s17, 0
      %p142 = por %p140, %p141
      %p143 = scmp.ne.s32.totalorder %s135, %s137
      %p144 = scmp.eq.s32.totalorder %s22, 1
      %p145 = por %p143, %p144
      %p146 = scmp.ne.s32.totalorder %s137, %s138
      %p147 = scmp.eq.s32.totalorder %s22, 0
      %p148 = por %p146, %p147
      %p149 = scmp.ne.s32.totalorder %s137, %s138
      %p150 = scmp.eq.s32.totalorder %s23, 1
      %p151 = por %p149, %p150
      %p153 = scmp.ne.s32.totalorder %s138, %s152
      %p154 = scmp.eq.s32.totalorder %s23, 0
      %p155 = por %p153, %p154
      %s157 = sadd.s32 %s156, 1
      %p160 = scmp.eq.s32.totalorder %s17, 1
      %p161 = scmp.ne.s32.totalorder %s156, %s158
      %p162 = scmp.eq.s32.totalorder %s17, 0
      %p163 = por %p161, %p162
      %p164 = scmp.ne.s32.totalorder %s156, %s158
      %p165 = scmp.eq.s32.totalorder %s22, 1
      %p166 = por %p164, %p165
      %p167 = scmp.ne.s32.totalorder %s158, %s159
      %p168 = scmp.eq.s32.totalorder %s22, 0
      %p169 = por %p167, %p168
      %p170 = scmp.ne.s32.totalorder %s158, %s159
      %p171 = scmp.eq.s32.totalorder %s23, 1
      %p172 = por %p170, %p171
      %p174 = scmp.ne.s32.totalorder %s159, %s173
      %p175 = scmp.eq.s32.totalorder %s23, 0
      %p176 = por %p174, %p175
      %s178 = sadd.s32 %s177, 1
      %p181 = scmp.eq.s32.totalorder %s17, 1
      %p182 = scmp.ne.s32.totalorder %s177, %s179
      %p183 = scmp.eq.s32.totalorder %s17, 0
      %p184 = por %p182, %p183
      %p185 = scmp.ne.s32.totalorder %s177, %s179
      %p186 = scmp.eq.s32.totalorder %s22, 1
      %p187 = por %p185, %p186
      %p188 = scmp.ne.s32.totalorder %s179, %s180
      %p189 = scmp.eq.s32.totalorder %s22, 0
      %p190 = por %p188, %p189
      %p191 = scmp.ne.s32.totalorder %s179, %s180
      %p192 = scmp.eq.s32.totalorder %s23, 1
      %p193 = por %p191, %p192
      %p195 = scmp.ne.s32.totalorder %s180, %s194
      %p196 = scmp.eq.s32.totalorder %s23, 0
      %p197 = por %p195, %p196
      %s199 = sadd.s32 %s198, 1
      %p202 = scmp.eq.s32.totalorder %s17, 1
      %p203 = scmp.ne.s32.totalorder %s198, %s200
      %p204 = scmp.eq.s32.totalorder %s17, 0
      %p205 = por %p203, %p204
      %p206 = scmp.ne.s32.totalorder %s198, %s200
      %p207 = scmp.eq.s32.totalorder %s22, 1
      %p208 = por %p206, %p207
      %p209 = scmp.ne.s32.totalorder %s200, %s201
      %p210 = scmp.eq.s32.totalorder %s22, 0
      %p211 = por %p209, %p210
      %p212 = scmp.ne.s32.totalorder %s200, %s201
      %p213 = scmp.eq.s32.totalorder %s23, 1
      %p214 = por %p212, %p213
      %p216 = scmp.ne.s32.totalorder %s201, %s215
      %p217 = scmp.eq.s32.totalorder %s23, 0
      %p218 = por %p216, %p217
      %s220 = sadd.s32 %s219, 1
      %p223 = scmp.eq.s32.totalorder %s17, 1
      %p224 = scmp.ne.s32.totalorder %s219, %s221
      %p225 = scmp.eq.s32.totalorder %s17, 0
      %p226 = por %p224, %p225
      %p227 = scmp.ne.s32.totalorder %s219, %s221
      %p228 = scmp.eq.s32.totalorder %s22, 1
      %p229 = por %p227, %p228
      %p230 = scmp.ne.s32.totalorder %s221, %s222
      %p231 = scmp.eq.s32.totalorder %s22, 0
      %p232 = por %p230, %p231
      %p233 = scmp.ne.s32.totalorder %s221, %s222
      %p234 = scmp.eq.s32.totalorder %s23, 1
      %p235 = por %p233, %p234
      %p237 = scmp.ne.s32.totalorder %s222, %s236
      %p238 = scmp.eq.s32.totalorder %s23, 0
      %p239 = por %p237, %p238
      %s240 = ssub.s32 %s17, %s24
      %p241 = scmp.eq.s32.totalorder %s240, 0
      %s243 = sadd.s32 %s242, 1
      %s244 = scalar_select %p241, %s242, %s243
      %p247 = pneg %p241
      %p248 = scmp.eq.s32.totalorder %s17, 1
      %p249 = por %p247, %p248
      %p250 = scmp.ne.s32.totalorder %s242, %s245
      %p251 = scmp.eq.s32.totalorder %s17, 0
      %p252 = por %p250, %p251
      %p253 = scmp.ne.s32.totalorder %s242, %s245
      %p254 = scmp.eq.s32.totalorder %s22, 1
      %p255 = por %p253, %p254
      %p256 = scmp.ne.s32.totalorder %s245, %s246
      %p257 = scmp.eq.s32.totalorder %s22, 0
      %p258 = por %p256, %p257
      %p259 = scmp.ne.s32.totalorder %s245, %s246
      %p260 = scmp.eq.s32.totalorder %s23, 1
      %p261 = por %p259, %p260
      %p263 = scmp.ne.s32.totalorder %s246, %s262
      %p264 = scmp.eq.s32.totalorder %s23, 0
      %p265 = por %p263, %p264
      %p266 = scmp.le.s32.totalorder 1, %s17
      %p267 = scmp.lt.s32.totalorder %s17, 3
      %p268 = pnand %p266, %p267
      %p269 = pneg %p268
      // Predicated region
      $region9: #{_forward_once_jit.1} parent=5 // pred_check
        _
      $region10: #{_forward_once_jit.1} parent=5 // pred_check_branch
        %271 = sbr.rel (%p268) target = $region12
      $region11: #{_forward_once_jit.1} parent=5 // pred_region
        %s272 = ssub.s32 %s17, 1
        // Predicated region
        $region13: #{_forward_once_jit.1} parent=11 // pred_check
          %p273 = pneg %p64
        $region14: #{_forward_once_jit.1} parent=11 // pred_check_branch
          %275 = sbr.rel (%p273) target = $region16
        $region15: #{_forward_once_jit.1} parent=11 // pred_region
          %s277 = ssub.s32 2048, 2048
          %278 = vsyncadd [#allocation4], %s277
          %s279 = sshll.u32 [#allocation3], 4
          %s280 = int_to_ptr.vmem [resolvable:$true] %s279
          %285 = dma.hbm_to_vmem [thread:$0]  %s1, 2048, %s280, [#allocation4], 128, 128, 8
        $region16: #{_forward_once_jit.1} parent=11 // pred_fallthru
          _
        // Predicated region
        $region17: #{_forward_once_jit.1} parent=11 // pred_check
          %p286 = pneg %p85
        $region18: #{_forward_once_jit.1} parent=11 // pred_check_branch
          %288 = sbr.rel (%p286) target = $region20
        $region19: #{_forward_once_jit.1} parent=11 // pred_region
          _
        $region20: #{_forward_once_jit.1} parent=11 // pred_fallthru
          _
        // Predicated region
        $region21: #{_forward_once_jit.1} parent=11 // pred_check
          %p289 = pneg %p106
        $region22: #{_forward_once_jit.1} parent=11 // pred_check_branch
          %291 = sbr.rel (%p289) target = $region24
        $region23: #{_forward_once_jit.1} parent=11 // pred_region
          _
        $region24: #{_forward_once_jit.1} parent=11 // pred_fallthru
          _
        // Predicated region
        $region25: #{_forward_once_jit.1} parent=11 // pred_check
          %p292 = pneg %p127
        $region26: #{_forward_once_jit.1} parent=11 // pred_check_branch
          %294 = sbr.rel (%p292) target = $region28
        $region27: #{_forward_once_jit.1} parent=11 // pred_region
          _
        $region28: #{_forward_once_jit.1} parent=11 // pred_fallthru
          _
        // Predicated region
        $region29: #{_forward_once_jit.1} parent=11 // pred_check
          %p295 = pneg %p148
        $region30: #{_forward_once_jit.1} parent=11 // pred_check_branch
          %297 = sbr.rel (%p295) target = $region32
        $region31: #{_forward_once_jit.1} parent=11 // pred_region
          _
        $region32: #{_forward_once_jit.1} parent=11 // pred_fallthru
          _
        // Predicated region
        $region33: #{_forward_once_jit.1} parent=11 // pred_check
          %p298 = pneg %p169
        $region34: #{_forward_once_jit.1} parent=11 // pred_check_branch
          %300 = sbr.rel (%p298) target = $region36
        $region35: #{_forward_once_jit.1} parent=11 // pred_region
          _
        $region36: #{_forward_once_jit.1} parent=11 // pred_fallthru
          _
        // Predicated region
        $region37: #{_forward_once_jit.1} parent=11 // pred_check
          %p301 = pneg %p190
        $region38: #{_forward_once_jit.1} parent=11 // pred_check_branch
          %303 = sbr.rel (%p301) target = $region40
        $region39: #{_forward_once_jit.1} parent=11 // pred_region
          _
        $region40: #{_forward_once_jit.1} parent=11 // pred_fallthru
          _
        // Predicated region
        $region41: #{_forward_once_jit.1} parent=11 // pred_check
          %p304 = pneg %p211
        $region42: #{_forward_once_jit.1} parent=11 // pred_check_branch
          %306 = sbr.rel (%p304) target = $region44
        $region43: #{_forward_once_jit.1} parent=11 // pred_region
          _
        $region44: #{_forward_once_jit.1} parent=11 // pred_fallthru
          _
        // Predicated region
        $region45: #{_forward_once_jit.1} parent=11 // pred_check
          %p307 = pneg %p232
        $region46: #{_forward_once_jit.1} parent=11 // pred_check_branch
          %309 = sbr.rel (%p307) target = $region48
        $region47: #{_forward_once_jit.1} parent=11 // pred_region
          _
        $region48: #{_forward_once_jit.1} parent=11 // pred_fallthru
          _
      $region12: #{_forward_once_jit.1} parent=5 // pred_fallthru
        _
      %p310 = scmp.lt.s32.totalorder %s17, 2
      // Predicated region
      $region49: #{_forward_once_jit.1} parent=5 // pred_check
        %p311 = pneg %p310
      $region50: #{_forward_once_jit.1} parent=5 // pred_check_branch
        %313 = sbr.rel (%p311) target = $region52
      $region51: #{_forward_once_jit.1} parent=5 // pred_region
        // Predicated region
        $region53: #{_forward_once_jit.1} parent=51 // pred_check
          %p314 = pneg %p37
        $region54: #{_forward_once_jit.1} parent=51 // pred_check_branch
          %316 = sbr.rel (%p314) target = $region56
        $region55: #{_forward_once_jit.1} parent=51 // pred_region
          %s317 = smul.u32 2, %s17
          %p318 = scmp.lt.s32.totalorder %s317, 3
          %s319 = scalar_select %p318, %s317, 3
          %s320 = smul.addr %s319, 8
          %s321 = smul.addr %s320, 4
          %s322 = scalar_lea.vmem %s0, %s321
          %s323 = smul.u32 2, %s17
        $region56: #{_forward_once_jit.1} parent=51 // pred_fallthru
          _
      $region52: #{_forward_once_jit.1} parent=5 // pred_fallthru
        _
      %p324 = scmp.le.s32.totalorder 1, %s17
      %p325 = scmp.lt.s32.totalorder %s17, 3
      %p326 = pnand %p324, %p325
      %p327 = pneg %p326
      // Predicated region
      $region57: #{_forward_once_jit.1} parent=5 // pred_check
        _
      $region58: #{_forward_once_jit.1} parent=5 // pred_check_branch
        %329 = sbr.rel (%p326) target = $region60
      $region59: #{_forward_once_jit.1} parent=5 // pred_region
        %s330 = ssub.s32 %s17, 1
        // Predicated region
        $region61: #{_forward_once_jit.1} parent=59 // pred_check
          %p331 = pneg %p64
        $region62: #{_forward_once_jit.1} parent=59 // pred_check_branch
          %333 = sbr.rel (%p331) target = $region64
        $region63: #{_forward_once_jit.1} parent=59 // pred_region
          %334 = dma.done [#allocation4], 2048
        $region64: #{_forward_once_jit.1} parent=59 // pred_fallthru
          _
        %s335 = smul.u32 2, %s22
        %p336 = scmp.lt.s32.totalorder %s335, 3
        %s337 = scalar_select %p336, %s335, 3
        %s338 = smul.addr %s337, 8
        %s339 = smul.addr %s338, 4
        %s340 = scalar_lea.vmem %s0, %s339
        %p341 = pneg %p43
        %p342 = pneg %p40
        %p343 = pneg %p64
        %p344 = pneg %p61
        %p345 = pneg %p85
        %p346 = pneg %p82
        %p347 = pneg %p106
        %p348 = pneg %p103
        %p349 = pneg %p127
        %p350 = pneg %p124
        %p351 = pneg %p148
        %p352 = pneg %p145
        %p353 = pneg %p169
        %p354 = pneg %p166
        %p355 = pneg %p190
        %p356 = pneg %p187
        %p357 = pneg %p211
        %p358 = pneg %p208
        %p359 = pneg %p232
        %p360 = pneg %p229
        %p361 = pneg %p258
        %p362 = pneg %p255
        %s363 = smul.u32 2, %s22
        %p364 = scmp.lt.s32.totalorder %s363, 3
        %s365 = scalar_select %p364, %s363, 3
        %s366 = smul.addr %s365, 8
        %s367 = smul.addr %s366, 4
        %s368 = scalar_lea.vmem %s10, %s367
        %s369 = smul.u32 2, %s22
        %p370 = scmp.lt.s32.totalorder %s369, 3
        %s371 = scalar_select %p370, %s369, 3
        %s372 = smul.addr %s371, 8
        %s373 = smul.addr %s372, 4
        %s374 = scalar_lea.vmem %s0, %s373
        %s375 = smul.u32 2, %s22
        %s376 = smul.u32 2, %s22
        %p377 = scmp.lt.s32.totalorder %s376, 3
        %s378 = scalar_select %p377, %s376, 3
        %s379 = smul.addr %s378, 8
        %s380 = smul.addr %s379, 4
        %s381 = scalar_lea.vmem %s10, %s380
        %s382 = smul.u32 2, %s22
        %v384 = vld [vmem:[%s374] sm:$0xf]
        %v385 = vld [vmem:[%s374 + $0x4] sm:$0xf]
        %v386 = vld [vmem:[%s374 + $0x8] sm:$0xf]
        %v387 = vld [vmem:[%s374 + $0xc] sm:$0xf]
        %v388 = vld [vmem:[%s374 + $0x10] sm:$0xf]
        %v389 = vld [vmem:[%s374 + $0x14] sm:$0xf]
        %v390 = vld [vmem:[%s374 + $0x18] sm:$0xf]
        %v391 = vld [vmem:[%s374 + $0x1c] sm:$0xf]
        %v392 = vld [vmem:[%s374 + $0x20] sm:$0xf]
        %v393 = vld [vmem:[%s374 + $0x24] sm:$0xf]
        %v394 = vld [vmem:[%s374 + $0x28] sm:$0xf]
        %v395 = vld [vmem:[%s374 + $0x2c] sm:$0xf]
        %v396 = vld [vmem:[%s374 + $0x30] sm:$0xf]
        %v397 = vld [vmem:[%s374 + $0x34] sm:$0xf]
        %v398 = vld [vmem:[%s374 + $0x38] sm:$0xf]
        %v399 = vld [vmem:[%s374 + $0x3c] sm:$0xf]
        %v400 = vld [vmem:[#allocation3] sm:$0xff]
        %v401 = vld [vmem:[#allocation3 + $0x8] sm:$0xff]
        %v402 = vld [vmem:[#allocation3 + $0x10] sm:$0xff]
        %v403 = vld [vmem:[#allocation3 + $0x18] sm:$0xff]
        %v404 = vld [vmem:[#allocation3 + $0x20] sm:$0xff]
        %v405 = vld [vmem:[#allocation3 + $0x28] sm:$0xff]
        %v406 = vld [vmem:[#allocation3 + $0x30] sm:$0xff]
        %v407 = vld [vmem:[#allocation3 + $0x38] sm:$0xff]
        %v408 = vld [vmem:[#allocation3 + $0x40] sm:$0xff]
        %v409 = vld [vmem:[#allocation3 + $0x48] sm:$0xff]
        %v410 = vld [vmem:[#allocation3 + $0x50] sm:$0xff]
        %v411 = vld [vmem:[#allocation3 + $0x58] sm:$0xff]
        %v412 = vld [vmem:[#allocation3 + $0x60] sm:$0xff]
        %v413 = vld [vmem:[#allocation3 + $0x68] sm:$0xff]
        %v414 = vld [vmem:[#allocation3 + $0x70] sm:$0xff]
        %v415 = vld [vmem:[#allocation3 + $0x78] sm:$0xff]
        %v432 = vunpack.c.l.b16 %v384
        %v433 = vunpack.c.l.b16 %v385
        %v434 = vunpack.c.l.b16 %v386
        %v435 = vunpack.c.l.b16 %v387
        %v436 = vunpack.c.l.b16 %v388
        %v437 = vunpack.c.l.b16 %v389
        %v438 = vunpack.c.l.b16 %v390
        %v439 = vunpack.c.l.b16 %v391
        %v440 = vunpack.c.l.b16 %v392
        %v441 = vunpack.c.l.b16 %v393
        %v442 = vunpack.c.l.b16 %v394
        %v443 = vunpack.c.l.b16 %v395
        %v444 = vunpack.c.l.b16 %v396
        %v445 = vunpack.c.l.b16 %v397
        %v446 = vunpack.c.l.b16 %v398
        %v447 = vunpack.c.l.b16 %v399
        %v448 = vpack.c.b16 %v433, %v432
        %v449 = vpack.c.b16 %v435, %v434
        %v450 = vpack.c.b16 %v437, %v436
        %v451 = vpack.c.b16 %v439, %v438
        %v452 = vpack.c.b16 %v441, %v440
        %v453 = vpack.c.b16 %v443, %v442
        %v454 = vpack.c.b16 %v445, %v444
        %v455 = vpack.c.b16 %v447, %v446
        %v480 = vunpack.c.l.b16 %v400
        %v481 = vunpack.c.h.b16 %v400
        %v482 = vunpack.c.l.b16 %v401
        %v483 = vunpack.c.h.b16 %v401
        %v484 = vunpack.c.l.b16 %v402
        %v485 = vunpack.c.h.b16 %v402
        %v486 = vunpack.c.l.b16 %v403
        %v487 = vunpack.c.h.b16 %v403
        %v488 = vunpack.c.l.b16 %v404
        %v489 = vunpack.c.h.b16 %v404
        %v490 = vunpack.c.l.b16 %v405
        %v491 = vunpack.c.h.b16 %v405
        %v492 = vunpack.c.l.b16 %v406
        %v493 = vunpack.c.h.b16 %v406
        %v494 = vunpack.c.l.b16 %v407
        %v495 = vunpack.c.h.b16 %v407
        %v496 = vunpack.c.l.b16 %v408
        %v497 = vunpack.c.h.b16 %v408
        %v498 = vunpack.c.l.b16 %v409
        %v499 = vunpack.c.h.b16 %v409
        %v500 = vunpack.c.l.b16 %v410
        %v501 = vunpack.c.h.b16 %v410
        %v502 = vunpack.c.l.b16 %v411
        %v503 = vunpack.c.h.b16 %v411
        %v504 = vunpack.c.l.b16 %v412
        %v505 = vunpack.c.h.b16 %v412
        %v506 = vunpack.c.l.b16 %v413
        %v507 = vunpack.c.h.b16 %v413
        %v508 = vunpack.c.l.b16 %v414
        %v509 = vunpack.c.h.b16 %v414
        %v510 = vunpack.c.l.b16 %v415
        %v511 = vunpack.c.h.b16 %v415
        %v512 = vpack.c.b16 %v482, %v480
        %v513 = vpack.c.b16 %v483, %v481
        %v514 = vpack.c.b16 %v486, %v484
        %v515 = vpack.c.b16 %v487, %v485
        %v516 = vpack.c.b16 %v490, %v488
        %v517 = vpack.c.b16 %v491, %v489
        %v518 = vpack.c.b16 %v494, %v492
        %v519 = vpack.c.b16 %v495, %v493
        %v520 = vpack.c.b16 %v498, %v496
        %v521 = vpack.c.b16 %v499, %v497
        %v522 = vpack.c.b16 %v502, %v500
        %v523 = vpack.c.b16 %v503, %v501
        %v524 = vpack.c.b16 %v506, %v504
        %v525 = vpack.c.b16 %v507, %v505
        %v526 = vpack.c.b16 %v510, %v508
        %v527 = vpack.c.b16 %v511, %v509
        %544 = vmatprep.subr.bf16.mxu0 %v513
        %545 = vmatpush1.bf16.msra.mxu0 %v512
        %546 = vmatprep.subr.bf16.mxu0 %v515
        %547 = vmatpush1.bf16.msra.mxu0 %v514
        %548 = vmatprep.subr.bf16.mxu0 %v517
        %549 = vmatpush1.bf16.msra.mxu0 %v516
        %550 = vmatprep.subr.bf16.mxu0 %v519
        %551 = vmatpush1.bf16.msra.mxu0 %v518
        %552 = vmatprep.subr.bf16.mxu0 %v521
        %553 = vmatpush1.bf16.msra.mxu0 %v520
        %554 = vmatprep.subr.bf16.mxu0 %v523
        %555 = vmatpush1.bf16.msra.mxu0 %v522
        %556 = vmatprep.subr.bf16.mxu0 %v525
        %557 = vmatpush1.bf16.msra.mxu0 %v524
        %558 = vmatprep.subr.bf16.mxu0 %v527
        %559 = vmatpush1.bf16.msra.mxu0 %v526
        %560 = vmatprep.subr.bf16.mxu0 0
        %561 = vmatpush1.bf16.msra.mxu0 0
        %562 = vmatprep.subr.bf16.mxu0 0
        %563 = vmatpush1.bf16.msra.mxu0 0
        %564 = vmatprep.subr.bf16.mxu0 0
        %565 = vmatpush1.bf16.msra.mxu0 0
        %566 = vmatprep.subr.bf16.mxu0 0
        %567 = vmatpush1.bf16.msra.mxu0 0
        %568 = vmatprep.subr.bf16.mxu0 0
        %569 = vmatpush1.bf16.msra.mxu0 0
        %570 = vmatprep.subr.bf16.mxu0 0
        %571 = vmatpush1.bf16.msra.mxu0 0
        %572 = vmatprep.subr.bf16.mxu0 0
        %573 = vmatpush1.bf16.msra.mxu0 0
        %574 = vmatprep.subr.bf16.mxu0 0
        %575 = vmatpush1.bf16.msra.mxu0 0
        %576 = vmatprep.mubr.bf16.mxu0 0
        %577 = vmatmul.mubr.bf16.gmra.mrb[0].mxu0 %v448
        %v578 = vpop.f32.mrb[0].mxu0
        %v579 = vadd.f32 0.0, %v578
        %v580 = vpop.f32.mrb[0].mxu0
        %v581 = vadd.f32 0.0, %v580
        %v582 = vpop.f32.mrb[0].mxu0
        %v583 = vadd.f32 0.0, %v582
        %v584 = vpop.f32.mrb[0].mxu0
        %v585 = vadd.f32 0.0, %v584
        %586 = vmatprep.mubr.bf16.mxu0 0
        %587 = vmatmul.mubr.bf16.gmra.mrb[0].mxu0 %v449
        %v588 = vpop.f32.mrb[0].mxu0
        %v589 = vadd.f32 0.0, %v588
        %v590 = vpop.f32.mrb[0].mxu0
        %v591 = vadd.f32 0.0, %v590
        %v592 = vpop.f32.mrb[0].mxu0
        %v593 = vadd.f32 0.0, %v592
        %v594 = vpop.f32.mrb[0].mxu0
        %v595 = vadd.f32 0.0, %v594
        %596 = vmatprep.mubr.bf16.mxu0 0
        %597 = vmatmul.mubr.bf16.gmra.mrb[0].mxu0 %v450
        %v598 = vpop.f32.mrb[0].mxu0
        %v599 = vadd.f32 0.0, %v598
        %v600 = vpop.f32.mrb[0].mxu0
        %v601 = vadd.f32 0.0, %v600
        %v602 = vpop.f32.mrb[0].mxu0
        %v603 = vadd.f32 0.0, %v602
        %v604 = vpop.f32.mrb[0].mxu0
        %v605 = vadd.f32 0.0, %v604
        %606 = vmatprep.mubr.bf16.mxu0 0
        %607 = vmatmul.mubr.bf16.gmra.mrb[0].mxu0 %v451
        %v608 = vpop.f32.mrb[0].mxu0
        %v609 = vadd.f32 0.0, %v608
        %v610 = vpop.f32.mrb[0].mxu0
        %v611 = vadd.f32 0.0, %v610
        %v612 = vpop.f32.mrb[0].mxu0
        %v613 = vadd.f32 0.0, %v612
        %v614 = vpop.f32.mrb[0].mxu0
        %v615 = vadd.f32 0.0, %v614
        %616 = vmatprep.mubr.bf16.mxu0 0
        %617 = vmatmul.mubr.bf16.gmra.mrb[0].mxu0 %v452
        %v618 = vpop.f32.mrb[0].mxu0
        %v619 = vadd.f32 0.0, %v618
        %v620 = vpop.f32.mrb[0].mxu0
        %v621 = vadd.f32 0.0, %v620
        %v622 = vpop.f32.mrb[0].mxu0
        %v623 = vadd.f32 0.0, %v622
        %v624 = vpop.f32.mrb[0].mxu0
        %v625 = vadd.f32 0.0, %v624
        %626 = vmatprep.mubr.bf16.mxu0 0
        %627 = vmatmul.mubr.bf16.gmra.mrb[0].mxu0 %v453
        %v628 = vpop.f32.mrb[0].mxu0
        %v629 = vadd.f32 0.0, %v628
        %v630 = vpop.f32.mrb[0].mxu0
        %v631 = vadd.f32 0.0, %v630
        %v632 = vpop.f32.mrb[0].mxu0
        %v633 = vadd.f32 0.0, %v632
        %v634 = vpop.f32.mrb[0].mxu0
        %v635 = vadd.f32 0.0, %v634
        %636 = vmatprep.mubr.bf16.mxu0 0
        %637 = vmatmul.mubr.bf16.gmra.mrb[0].mxu0 %v454
        %v638 = vpop.f32.mrb[0].mxu0
        %v639 = vadd.f32 0.0, %v638
        %v640 = vpop.f32.mrb[0].mxu0
        %v641 = vadd.f32 0.0, %v640
        %v642 = vpop.f32.mrb[0].mxu0
        %v643 = vadd.f32 0.0, %v642
        %v644 = vpop.f32.mrb[0].mxu0
        %v645 = vadd.f32 0.0, %v644
        %646 = vmatprep.mubr.bf16.mxu0 0
        %647 = vmatmul.mubr.bf16.gmra.mrb[0].mxu0 %v455
        %v648 = vpop.f32.mrb[0].mxu0
        %v649 = vadd.f32 0.0, %v648
        %v650 = vpop.f32.mrb[0].mxu0
        %v651 = vadd.f32 0.0, %v650
        %v652 = vpop.f32.mrb[0].mxu0
        %v653 = vadd.f32 0.0, %v652
        %v654 = vpop.f32.mrb[0].mxu0
        %v655 = vadd.f32 0.0, %v654
        %656 = vdwg.mxu0
        %v657 = vld [vmem:[%s2] sm:$0x3]
        %v659 = vlaneseq
        %v660 = vshrl.u32 %v659, 7
        %v661 = vsub.s32 0, %v660
        %v662 = vrot.slane %v657, %v661
        %v663 = vlaneseq
        %v664 = vshrl.u32 %v663, 7
        %v665 = vsub.s32 1, %v664
        %v666 = vrot.slane %v657, %v665
        %v669 = vmul.f32 %v579, %v662
        %v670 = vmul.f32 %v581, %v666
        %v671 = vmul.f32 %v583, %v662
        %v672 = vmul.f32 %v585, %v666
        %v673 = vmul.f32 %v589, %v662
        %v674 = vmul.f32 %v591, %v666
        %v675 = vmul.f32 %v593, %v662
        %v676 = vmul.f32 %v595, %v666
        %v677 = vmul.f32 %v599, %v662
        %v678 = vmul.f32 %v601, %v666
        %v679 = vmul.f32 %v603, %v662
        %v680 = vmul.f32 %v605, %v666
        %v681 = vmul.f32 %v609, %v662
        %v682 = vmul.f32 %v611, %v666
        %v683 = vmul.f32 %v613, %v662
        %v684 = vmul.f32 %v615, %v666
        %v685 = vmul.f32 %v619, %v662
        %v686 = vmul.f32 %v621, %v666
        %v687 = vmul.f32 %v623, %v662
        %v688 = vmul.f32 %v625, %v666
        %v689 = vmul.f32 %v629, %v662
        %v690 = vmul.f32 %v631, %v666
        %v691 = vmul.f32 %v633, %v662
        %v692 = vmul.f32 %v635, %v666
        %v693 = vmul.f32 %v639, %v662
        %v694 = vmul.f32 %v641, %v666
        %v695 = vmul.f32 %v643, %v662
        %v696 = vmul.f32 %v645, %v666
        %v697 = vmul.f32 %v649, %v662
        %v698 = vmul.f32 %v651, %v666
        %v699 = vmul.f32 %v653, %v662
        %v700 = vmul.f32 %v655, %v666
        %v701 = vld [vmem:[%s3] sm:$0x3]
        %v703 = vlaneseq
        %v704 = vshrl.u32 %v703, 7
        %v705 = vsub.s32 0, %v704
        %v706 = vrot.slane %v701, %v705
        %v707 = vlaneseq
        %v708 = vshrl.u32 %v707, 7
        %v709 = vsub.s32 1, %v708
        %v710 = vrot.slane %v701, %v709
        %v713 = vadd.f32 %v669, %v706
        %v714 = vadd.f32 %v670, %v710
        %v715 = vadd.f32 %v671, %v706
        %v716 = vadd.f32 %v672, %v710
        %v717 = vadd.f32 %v673, %v706
        %v718 = vadd.f32 %v674, %v710
        %v719 = vadd.f32 %v675, %v706
        %v720 = vadd.f32 %v676, %v710
        %v721 = vadd.f32 %v677, %v706
        %v722 = vadd.f32 %v678, %v710
        %v723 = vadd.f32 %v679, %v706
        %v724 = vadd.f32 %v680, %v710
        %v725 = vadd.f32 %v681, %v706
        %v726 = vadd.f32 %v682, %v710
        %v727 = vadd.f32 %v683, %v706
        %v728 = vadd.f32 %v684, %v710
        %v729 = vadd.f32 %v685, %v706
        %v730 = vadd.f32 %v686, %v710
        %v731 = vadd.f32 %v687, %v706
        %v732 = vadd.f32 %v688, %v710
        %v733 = vadd.f32 %v689, %v706
        %v734 = vadd.f32 %v690, %v710
        %v735 = vadd.f32 %v691, %v706
        %v736 = vadd.f32 %v692, %v710
        %v737 = vadd.f32 %v693, %v706
        %v738 = vadd.f32 %v694, %v710
        %v739 = vadd.f32 %v695, %v706
        %v740 = vadd.f32 %v696, %v710
        %v741 = vadd.f32 %v697, %v706
        %v742 = vadd.f32 %v698, %v710
        %v743 = vadd.f32 %v699, %v706
        %v744 = vadd.f32 %v700, %v710
        %v745 = vmax.f32 %v713, 0.0
        %v746 = vmax.f32 %v715, 0.0
        %v747 = vmax.f32 %v717, 0.0
        %v748 = vmax.f32 %v719, 0.0
        %v749 = vmax.f32 %v721, 0.0
        %v750 = vmax.f32 %v723, 0.0
        %v751 = vmax.f32 %v725, 0.0
        %v752 = vmax.f32 %v727, 0.0
        %v753 = vmax.f32 %v729, 0.0
        %v754 = vmax.f32 %v731, 0.0
        %v755 = vmax.f32 %v733, 0.0
        %v756 = vmax.f32 %v735, 0.0
        %v757 = vmax.f32 %v737, 0.0
        %v758 = vmax.f32 %v739, 0.0
        %v759 = vmax.f32 %v741, 0.0
        %v760 = vmax.f32 %v743, 0.0
        %761 = vst [vmem:[#allocation2] sm:$0xff] 0
        %762 = vst [vmem:[#allocation2 + $0x50] sm:$0xff] 0
        %s763 = scalar_lea.vmem [#allocation2], 72
        %764 = vst [vmem:[%s763] sm:$0xff] 0
        %765 = vst [vmem:[%s763 + $0x50] sm:$0xff] 0
        %s766 = scalar_lea.vmem [#allocation2], 8
        %vm767 = vcmask 1040384
        %vm768 = vsmask.f32 256
        %vm769 = vmand %vm767, %vm768
        %v770 = vld [vmem:[%s766] sm:$0x1]
        %v771 = vsel %vm769, 0, %v770
        %772 = vst [vmem:[%s766] sm:$0x1] %v771
        %v773 = vld [vmem:[%s766 + $0x8] sm:$0x1]
        %v774 = vsel %vm769, 0, %v773
        %775 = vst [vmem:[%s766 + $0x8] sm:$0x1] %v774
        %v776 = vld [vmem:[%s766 + $0x10] sm:$0x1]
        %v777 = vsel %vm769, 0, %v776
        %778 = vst [vmem:[%s766 + $0x10] sm:$0x1] %v777
        %v779 = vld [vmem:[%s766 + $0x18] sm:$0x1]
        %v780 = vsel %vm769, 0, %v779
        %781 = vst [vmem:[%s766 + $0x18] sm:$0x1] %v780
        %v782 = vld [vmem:[%s766 + $0x20] sm:$0x1]
        %v783 = vsel %vm769, 0, %v782
        %784 = vst [vmem:[%s766 + $0x20] sm:$0x1] %v783
        %v785 = vld [vmem:[%s766 + $0x28] sm:$0x1]
        %v786 = vsel %vm769, 0, %v785
        %787 = vst [vmem:[%s766 + $0x28] sm:$0x1] %v786
        %v788 = vld [vmem:[%s766 + $0x30] sm:$0x1]
        %v789 = vsel %vm769, 0, %v788
        %790 = vst [vmem:[%s766 + $0x30] sm:$0x1] %v789
        %v791 = vld [vmem:[%s766 + $0x38] sm:$0x1]
        %v792 = vsel %vm769, 0, %v791
        %793 = vst [vmem:[%s766 + $0x38] sm:$0x1] %v792
        %v794 = vld [vmem:[%s766 + $0x50] sm:$0x1]
        %v795 = vsel %vm769, 0, %v794
        %796 = vst [vmem:[%s766 + $0x50] sm:$0x1] %v795
        %v797 = vld [vmem:[%s766 + $0x58] sm:$0x1]
        %v798 = vsel %vm769, 0, %v797
        %799 = vst [vmem:[%s766 + $0x58] sm:$0x1] %v798
        %v800 = vld [vmem:[%s766 + $0x60] sm:$0x1]
        %v801 = vsel %vm769, 0, %v800
        %802 = vst [vmem:[%s766 + $0x60] sm:$0x1] %v801
        %v803 = vld [vmem:[%s766 + $0x68] sm:$0x1]
        %v804 = vsel %vm769, 0, %v803
        %805 = vst [vmem:[%s766 + $0x68] sm:$0x1] %v804
        %v806 = vld [vmem:[%s766 + $0x70] sm:$0x1]
        %v807 = vsel %vm769, 0, %v806
        %808 = vst [vmem:[%s766 + $0x70] sm:$0x1] %v807
        %v809 = vld [vmem:[%s766 + $0x78] sm:$0x1]
        %v810 = vsel %vm769, 0, %v809
        %811 = vst [vmem:[%s766 + $0x78] sm:$0x1] %v810
        %v812 = vld [vmem:[%s766 + $0x80] sm:$0x1]
        %v813 = vsel %vm769, 0, %v812
        %814 = vst [vmem:[%s766 + $0x80] sm:$0x1] %v813
        %v815 = vld [vmem:[%s766 + $0x88] sm:$0x1]
        %v816 = vsel %vm769, 0, %v815
        %817 = vst [vmem:[%s766 + $0x88] sm:$0x1] %v816
        %vm818 = vcmask 1044484
        %vm819 = vsmask.f32 7954
        %vm820 = vmand %vm818, %vm819
        %v821 = vld [vmem:[%s766] sm:$0x10]
        %v822 = vsel %vm820, 0, %v821
        %823 = vst [vmem:[%s766] sm:$0x10] %v822
        %v824 = vld [vmem:[%s766 + $0x8] sm:$0x10]
        %v825 = vsel %vm820, 0, %v824
        %826 = vst [vmem:[%s766 + $0x8] sm:$0x10] %v825
        %v827 = vld [vmem:[%s766 + $0x10] sm:$0x10]
        %v828 = vsel %vm820, 0, %v827
        %829 = vst [vmem:[%s766 + $0x10] sm:$0x10] %v828
        %v830 = vld [vmem:[%s766 + $0x18] sm:$0x10]
        %v831 = vsel %vm820, 0, %v830
        %832 = vst [vmem:[%s766 + $0x18] sm:$0x10] %v831
        %v833 = vld [vmem:[%s766 + $0x20] sm:$0x10]
        %v834 = vsel %vm820, 0, %v833
        %835 = vst [vmem:[%s766 + $0x20] sm:$0x10] %v834
        %v836 = vld [vmem:[%s766 + $0x28] sm:$0x10]
        %v837 = vsel %vm820, 0, %v836
        %838 = vst [vmem:[%s766 + $0x28] sm:$0x10] %v837
        %v839 = vld [vmem:[%s766 + $0x30] sm:$0x10]
        %v840 = vsel %vm820, 0, %v839
        %841 = vst [vmem:[%s766 + $0x30] sm:$0x10] %v840
        %v842 = vld [vmem:[%s766 + $0x38] sm:$0x10]
        %v843 = vsel %vm820, 0, %v842
        %844 = vst [vmem:[%s766 + $0x38] sm:$0x10] %v843
        %v845 = vld [vmem:[%s766 + $0x50] sm:$0x10]
        %v846 = vsel %vm820, 0, %v845
        %847 = vst [vmem:[%s766 + $0x50] sm:$0x10] %v846
        %v848 = vld [vmem:[%s766 + $0x58] sm:$0x10]
        %v849 = vsel %vm820, 0, %v848
        %850 = vst [vmem:[%s766 + $0x58] sm:$0x10] %v849
        %v851 = vld [vmem:[%s766 + $0x60] sm:$0x10]
        %v852 = vsel %vm820, 0, %v851
        %853 = vst [vmem:[%s766 + $0x60] sm:$0x10] %v852
        %v854 = vld [vmem:[%s766 + $0x68] sm:$0x10]
        %v855 = vsel %vm820, 0, %v854
        %856 = vst [vmem:[%s766 + $0x68] sm:$0x10] %v855
        %v857 = vld [vmem:[%s766 + $0x70] sm:$0x10]
        %v858 = vsel %vm820, 0, %v857
        %859 = vst [vmem:[%s766 + $0x70] sm:$0x10] %v858
        %v860 = vld [vmem:[%s766 + $0x78] sm:$0x10]
        %v861 = vsel %vm820, 0, %v860
        %862 = vst [vmem:[%s766 + $0x78] sm:$0x10] %v861
        %v863 = vld [vmem:[%s766 + $0x80] sm:$0x10]
        %v864 = vsel %vm820, 0, %v863
        %865 = vst [vmem:[%s766 + $0x80] sm:$0x10] %v864
        %v866 = vld [vmem:[%s766 + $0x88] sm:$0x10]
        %v867 = vsel %vm820, 0, %v866
        %868 = vst [vmem:[%s766 + $0x88] sm:$0x10] %v867
        %v869 = vpack.c.bf16 %v746, %v745
        %v870 = vpack.c.bf16 %v748, %v747
        %v871 = vpack.c.bf16 %v750, %v749
        %v872 = vpack.c.bf16 %v752, %v751
        %v873 = vpack.c.bf16 %v754, %v753
        %v874 = vpack.c.bf16 %v756, %v755
        %v875 = vpack.c.bf16 %v758, %v757
        %v876 = vpack.c.bf16 %v760, %v759
        %v885 = vunpack.c.l.b16 %v869
        %v886 = vunpack.c.h.b16 %v869
        %v887 = vunpack.c.l.b16 %v870
        %v888 = vunpack.c.h.b16 %v870
        %v889 = vunpack.c.l.b16 %v871
        %v890 = vunpack.c.h.b16 %v871
        %v891 = vunpack.c.l.b16 %v872
        %v892 = vunpack.c.h.b16 %v872
        %v893 = vunpack.c.l.b16 %v873
        %v894 = vunpack.c.h.b16 %v873
        %v895 = vunpack.c.l.b16 %v874
        %v896 = vunpack.c.h.b16 %v874
        %v897 = vunpack.c.l.b16 %v875
        %v898 = vunpack.c.h.b16 %v875
        %v899 = vunpack.c.l.b16 %v876
        %v900 = vunpack.c.h.b16 %v876
        %v901 = vpack.c.b16 %v885, %v885
        %v902 = vpack.c.b16 %v886, %v886
        %v903 = vpack.c.b16 %v887, %v887
        %v904 = vpack.c.b16 %v888, %v888
        %v905 = vpack.c.b16 %v889, %v889
        %v906 = vpack.c.b16 %v890, %v890
        %v907 = vpack.c.b16 %v891, %v891
        %v908 = vpack.c.b16 %v892, %v892
        %v909 = vpack.c.b16 %v893, %v893
        %v910 = vpack.c.b16 %v894, %v894
        %v911 = vpack.c.b16 %v895, %v895
        %v912 = vpack.c.b16 %v896, %v896
        %v913 = vpack.c.b16 %v897, %v897
        %v914 = vpack.c.b16 %v898, %v898
        %v915 = vpack.c.b16 %v899, %v899
        %v916 = vpack.c.b16 %v900, %v900
        %v918 = vshrl.u32 %v901, 16
        %v920 = vrot.slane %v918, 7
        %v921 = vshll.u32 %v901, 16
        %v923 = vor.u32 %v920, %v921
        %v925 = vshrl.u32 %v902, 16
        %v927 = vrot.slane %v925, 7
        %v928 = vshll.u32 %v902, 16
        %v930 = vor.u32 %v927, %v928
        %v932 = vshrl.u32 %v903, 16
        %v934 = vrot.slane %v932, 7
        %v935 = vshll.u32 %v903, 16
        %v937 = vor.u32 %v934, %v935
        %v939 = vshrl.u32 %v904, 16
        %v941 = vrot.slane %v939, 7
        %v942 = vshll.u32 %v904, 16
        %v944 = vor.u32 %v941, %v942
        %v946 = vshrl.u32 %v905, 16
        %v948 = vrot.slane %v946, 7
        %v949 = vshll.u32 %v905, 16
        %v951 = vor.u32 %v948, %v949
        %v953 = vshrl.u32 %v906, 16
        %v955 = vrot.slane %v953, 7
        %v956 = vshll.u32 %v906, 16
        %v958 = vor.u32 %v955, %v956
        %v960 = vshrl.u32 %v907, 16
        %v962 = vrot.slane %v960, 7
        %v963 = vshll.u32 %v907, 16
        %v965 = vor.u32 %v962, %v963
        %v967 = vshrl.u32 %v908, 16
        %v969 = vrot.slane %v967, 7
        %v970 = vshll.u32 %v908, 16
        %v972 = vor.u32 %v969, %v970
        %v974 = vshrl.u32 %v909, 16
        %v976 = vrot.slane %v974, 7
        %v977 = vshll.u32 %v909, 16
        %v979 = vor.u32 %v976, %v977
        %v981 = vshrl.u32 %v910, 16
        %v983 = vrot.slane %v981, 7
        %v984 = vshll.u32 %v910, 16
        %v986 = vor.u32 %v983, %v984
        %v988 = vshrl.u32 %v911, 16
        %v990 = vrot.slane %v988, 7
        %v991 = vshll.u32 %v911, 16
        %v993 = vor.u32 %v990, %v991
        %v995 = vshrl.u32 %v912, 16
        %v997 = vrot.slane %v995, 7
        %v998 = vshll.u32 %v912, 16
        %v1000 = vor.u32 %v997, %v998
        %v1002 = vshrl.u32 %v913, 16
        %v1004 = vrot.slane %v1002, 7
        %v1005 = vshll.u32 %v913, 16
        %v1007 = vor.u32 %v1004, %v1005
        %v1009 = vshrl.u32 %v914, 16
        %v1011 = vrot.slane %v1009, 7
        %v1012 = vshll.u32 %v914, 16
        %v1014 = vor.u32 %v1011, %v1012
        %v1016 = vshrl.u32 %v915, 16
        %v1018 = vrot.slane %v1016, 7
        %v1019 = vshll.u32 %v915, 16
        %v1021 = vor.u32 %v1018, %v1019
        %v1023 = vshrl.u32 %v916, 16
        %v1025 = vrot.slane %v1023, 7
        %v1026 = vshll.u32 %v916, 16
        %v1028 = vor.u32 %v1025, %v1026
        %vm1045 = vcmask 1044480
        %vm1046 = vsmask.f32 4354
        %vm1047 = vmand %vm1045, %vm1046
        %v1048 = vld [vmem:[%s766] sm:$0x1f]
        %v1049 = vsel %vm1047, %v923, %v1048
        %1050 = vst [vmem:[%s766] sm:$0x1f] %v1049
        %v1051 = vld [vmem:[%s766 + $0x8] sm:$0x1f]
        %v1052 = vsel %vm1047, %v930, %v1051
        %1053 = vst [vmem:[%s766 + $0x8] sm:$0x1f] %v1052
        %v1054 = vld [vmem:[%s766 + $0x10] sm:$0x1f]
        %v1055 = vsel %vm1047, %v937, %v1054
        %1056 = vst [vmem:[%s766 + $0x10] sm:$0x1f] %v1055
        %v1057 = vld [vmem:[%s766 + $0x18] sm:$0x1f]
        %v1058 = vsel %vm1047, %v944, %v1057
        %1059 = vst [vmem:[%s766 + $0x18] sm:$0x1f] %v1058
        %v1060 = vld [vmem:[%s766 + $0x20] sm:$0x1f]
        %v1061 = vsel %vm1047, %v951, %v1060
        %1062 = vst [vmem:[%s766 + $0x20] sm:$0x1f] %v1061
        %v1063 = vld [vmem:[%s766 + $0x28] sm:$0x1f]
        %v1064 = vsel %vm1047, %v958, %v1063
        %1065 = vst [vmem:[%s766 + $0x28] sm:$0x1f] %v1064
        %v1066 = vld [vmem:[%s766 + $0x30] sm:$0x1f]
        %v1067 = vsel %vm1047, %v965, %v1066
        %1068 = vst [vmem:[%s766 + $0x30] sm:$0x1f] %v1067
        %v1069 = vld [vmem:[%s766 + $0x38] sm:$0x1f]
        %v1070 = vsel %vm1047, %v972, %v1069
        %1071 = vst [vmem:[%s766 + $0x38] sm:$0x1f] %v1070
        %v1072 = vld [vmem:[%s766 + $0x50] sm:$0x1f]
        %v1073 = vsel %vm1047, %v979, %v1072
        %1074 = vst [vmem:[%s766 + $0x50] sm:$0x1f] %v1073
        %v1075 = vld [vmem:[%s766 + $0x58] sm:$0x1f]
        %v1076 = vsel %vm1047, %v986, %v1075
        %1077 = vst [vmem:[%s766 + $0x58] sm:$0x1f] %v1076
        %v1078 = vld [vmem:[%s766 + $0x60] sm:$0x1f]
        %v1079 = vsel %vm1047, %v993, %v1078
        %1080 = vst [vmem:[%s766 + $0x60] sm:$0x1f] %v1079
        %v1081 = vld [vmem:[%s766 + $0x68] sm:$0x1f]
        %v1082 = vsel %vm1047, %v1000, %v1081
        %1083 = vst [vmem:[%s766 + $0x68] sm:$0x1f] %v1082
        %v1084 = vld [vmem:[%s766 + $0x70] sm:$0x1f]
        %v1085 = vsel %vm1047, %v1007, %v1084
        %1086 = vst [vmem:[%s766 + $0x70] sm:$0x1f] %v1085
        %v1087 = vld [vmem:[%s766 + $0x78] sm:$0x1f]
        %v1088 = vsel %vm1047, %v1014, %v1087
        %1089 = vst [vmem:[%s766 + $0x78] sm:$0x1f] %v1088
        %v1090 = vld [vmem:[%s766 + $0x80] sm:$0x1f]
        %v1091 = vsel %vm1047, %v1021, %v1090
        %1092 = vst [vmem:[%s766 + $0x80] sm:$0x1f] %v1091
        %v1093 = vld [vmem:[%s766 + $0x88] sm:$0x1f]
        %v1094 = vsel %vm1047, %v1028, %v1093
        %1095 = vst [vmem:[%s766 + $0x88] sm:$0x1f] %v1094
        %v1096 = vld [vmem:[#allocation2] sm:$0xf]
        %v1097 = vld [vmem:[#allocation2 + $0x8] sm:$0xf]
        %v1098 = vld [vmem:[#allocation2 + $0x10] sm:$0xf]
        %v1099 = vld [vmem:[#allocation2 + $0x18] sm:$0xf]
        %v1100 = vld [vmem:[#allocation2 + $0x20] sm:$0xf]
        %v1101 = vld [vmem:[#allocation2 + $0x28] sm:$0xf]
        %v1102 = vld [vmem:[#allocation2 + $0x30] sm:$0xf]
        %v1103 = vld [vmem:[#allocation2 + $0x38] sm:$0xf]
        %v1104 = vld [vmem:[#allocation2 + $0x50] sm:$0xf]
        %v1105 = vld [vmem:[#allocation2 + $0x58] sm:$0xf]
        %v1106 = vld [vmem:[#allocation2 + $0x60] sm:$0xf]
        %v1107 = vld [vmem:[#allocation2 + $0x68] sm:$0xf]
        %v1108 = vld [vmem:[#allocation2 + $0x70] sm:$0xf]
        %v1109 = vld [vmem:[#allocation2 + $0x78] sm:$0xf]
        %v1110 = vld [vmem:[#allocation2 + $0x80] sm:$0xf]
        %v1111 = vld [vmem:[#allocation2 + $0x88] sm:$0xf]
        %v1112 = vld [vmem:[%s4] sm:$0xf]
        %v1113 = vld [vmem:[%s4 + $0x4] sm:$0xf]
        %v1114 = vld [vmem:[%s4 + $0x8] sm:$0xf]
        %v1115 = vld [vmem:[%s4 + $0xc] sm:$0xf]
        %v1116 = vld [vmem:[%s4 + $0x10] sm:$0xf]
        %v1117 = vld [vmem:[%s4 + $0x14] sm:$0xf]
        %v1118 = vld [vmem:[%s4 + $0x18] sm:$0xf]
        %v1119 = vld [vmem:[%s4 + $0x1c] sm:$0xf]
        %v1120 = vld [vmem:[%s4 + $0x20] sm:$0xf]
        %v1121 = vld [vmem:[%s4 + $0x24] sm:$0xf]
        %v1122 = vld [vmem:[%s4 + $0x28] sm:$0xf]
        %v1123 = vld [vmem:[%s4 + $0x2c] sm:$0xf]
        %v1124 = vld [vmem:[%s4 + $0x30] sm:$0xf]
        %v1125 = vld [vmem:[%s4 + $0x34] sm:$0xf]
        %v1126 = vld [vmem:[%s4 + $0x38] sm:$0xf]
        %v1127 = vld [vmem:[%s4 + $0x3c] sm:$0xf]
        %v1128 = vld [vmem:[#allocation2] sm:$0x1f]
        %v1129 = vld [vmem:[#allocation2 + $0x8] sm:$0x1f]
        %v1130 = vld [vmem:[#allocation2 + $0x10] sm:$0x1f]
        %v1131 = vld [vmem:[#allocation2 + $0x18] sm:$0x1f]
        %v1132 = vld [vmem:[#allocation2 + $0x20] sm:$0x1f]
        %v1133 = vld [vmem:[#allocation2 + $0x28] sm:$0x1f]
        %v1134 = vld [vmem:[#allocation2 + $0x30] sm:$0x1f]
        %v1135 = vld [vmem:[#allocation2 + $0x38] sm:$0x1f]
        %v1136 = vld [vmem:[#allocation2 + $0x50] sm:$0x1f]
        %v1137 = vld [vmem:[#allocation2 + $0x58] sm:$0x1f]
        %v1138 = vld [vmem:[#allocation2 + $0x60] sm:$0x1f]
        %v1139 = vld [vmem:[#allocation2 + $0x68] sm:$0x1f]
        %v1140 = vld [vmem:[#allocation2 + $0x70] sm:$0x1f]
        %v1141 = vld [vmem:[#allocation2 + $0x78] sm:$0x1f]
        %v1142 = vld [vmem:[#allocation2 + $0x80] sm:$0x1f]
        %v1143 = vld [vmem:[#allocation2 + $0x88] sm:$0x1f]
        %v1160 = vunpack.c.l.b16 %v1128
        %v1161 = vunpack.c.h.b16 %v1128
        %v1162 = vunpack.c.l.b16 %v1129
        %v1163 = vunpack.c.h.b16 %v1129
        %v1164 = vunpack.c.l.b16 %v1130
        %v1165 = vunpack.c.h.b16 %v1130
        %v1166 = vunpack.c.l.b16 %v1131
        %v1167 = vunpack.c.h.b16 %v1131
        %v1168 = vunpack.c.l.b16 %v1132
        %v1169 = vunpack.c.h.b16 %v1132
        %v1170 = vunpack.c.l.b16 %v1133
        %v1171 = vunpack.c.h.b16 %v1133
        %v1172 = vunpack.c.l.b16 %v1134
        %v1173 = vunpack.c.h.b16 %v1134
        %v1174 = vunpack.c.l.b16 %v1135
        %v1175 = vunpack.c.h.b16 %v1135
        %v1176 = vunpack.c.l.b16 %v1136
        %v1177 = vunpack.c.h.b16 %v1136
        %v1178 = vunpack.c.l.b16 %v1137
        %v1179 = vunpack.c.h.b16 %v1137
        %v1180 = vunpack.c.l.b16 %v1138
        %v1181 = vunpack.c.h.b16 %v1138
        %v1182 = vunpack.c.l.b16 %v1139
        %v1183 = vunpack.c.h.b16 %v1139
        %v1184 = vunpack.c.l.b16 %v1140
        %v1185 = vunpack.c.h.b16 %v1140
        %v1186 = vunpack.c.l.b16 %v1141
        %v1187 = vunpack.c.h.b16 %v1141
        %v1188 = vunpack.c.l.b16 %v1142
        %v1189 = vunpack.c.h.b16 %v1142
        %v1190 = vunpack.c.l.b16 %v1143
        %v1191 = vunpack.c.h.b16 %v1143
        %v1192 = vpack.c.b16 %v1160, %v1160
        %v1193 = vpack.c.b16 %v1161, %v1161
        %v1194 = vpack.c.b16 %v1162, %v1162
        %v1195 = vpack.c.b16 %v1163, %v1163
        %v1196 = vpack.c.b16 %v1164, %v1164
        %v1197 = vpack.c.b16 %v1165, %v1165
        %v1198 = vpack.c.b16 %v1166, %v1166
        %v1199 = vpack.c.b16 %v1167, %v1167
        %v1200 = vpack.c.b16 %v1168, %v1168
        %v1201 = vpack.c.b16 %v1169, %v1169
        %v1202 = vpack.c.b16 %v1170, %v1170
        %v1203 = vpack.c.b16 %v1171, %v1171
        %v1204 = vpack.c.b16 %v1172, %v1172
        %v1205 = vpack.c.b16 %v1173, %v1173
        %v1206 = vpack.c.b16 %v1174, %v1174
        %v1207 = vpack.c.b16 %v1175, %v1175
        %v1208 = vpack.c.b16 %v1176, %v1176
        %v1209 = vpack.c.b16 %v1177, %v1177
        %v1210 = vpack.c.b16 %v1178, %v1178
        %v1211 = vpack.c.b16 %v1179, %v1179
        %v1212 = vpack.c.b16 %v1180, %v1180
        %v1213 = vpack.c.b16 %v1181, %v1181
        %v1214 = vpack.c.b16 %v1182, %v1182
        %v1215 = vpack.c.b16 %v1183, %v1183
        %v1216 = vpack.c.b16 %v1184, %v1184
        %v1217 = vpack.c.b16 %v1185, %v1185
        %v1218 = vpack.c.b16 %v1186, %v1186
        %v1219 = vpack.c.b16 %v1187, %v1187
        %v1220 = vpack.c.b16 %v1188, %v1188
        %v1221 = vpack.c.b16 %v1189, %v1189
        %v1222 = vpack.c.b16 %v1190, %v1190
        %v1223 = vpack.c.b16 %v1191, %v1191
        %vm1224 = vsmask.f32 3328
        %vm1225 = vsmask.f32 7440
        %vm1226 = vmor %vm1224, %vm1225
        %v1228 = vshrl.u32 %v1192, 16
        %v1230 = vrot.slane %v1228, 4
        %v1231 = vshll.u32 %v1192, 16
        %v1233 = vrot.slane %v1231, 5
        %v1234 = vor.u32 %v1230, %v1233
        %v1235 = vrot.slane %v1234, 4
        %v1237 = vshll.u32 %v1193, 16
        %v1239 = vrot.slane %v1237, 5
        %v1240 = vsel %vm1226, %v1235, %v1239
        %v1242 = vshrl.u32 %v1194, 16
        %v1244 = vrot.slane %v1242, 4
        %v1245 = vshll.u32 %v1194, 16
        %v1247 = vrot.slane %v1245, 5
        %v1248 = vor.u32 %v1244, %v1247
        %v1249 = vrot.slane %v1248, 4
        %v1251 = vshll.u32 %v1195, 16
        %v1253 = vrot.slane %v1251, 5
        %v1254 = vsel %vm1226, %v1249, %v1253
        %v1256 = vshrl.u32 %v1196, 16
        %v1258 = vrot.slane %v1256, 4
        %v1259 = vshll.u32 %v1196, 16
        %v1261 = vrot.slane %v1259, 5
        %v1262 = vor.u32 %v1258, %v1261
        %v1263 = vrot.slane %v1262, 4
        %v1265 = vshll.u32 %v1197, 16
        %v1267 = vrot.slane %v1265, 5
        %v1268 = vsel %vm1226, %v1263, %v1267
        %v1270 = vshrl.u32 %v1198, 16
        %v1272 = vrot.slane %v1270, 4
        %v1273 = vshll.u32 %v1198, 16
        %v1275 = vrot.slane %v1273, 5
        %v1276 = vor.u32 %v1272, %v1275
        %v1277 = vrot.slane %v1276, 4
        %v1279 = vshll.u32 %v1199, 16
        %v1281 = vrot.slane %v1279, 5
        %v1282 = vsel %vm1226, %v1277, %v1281
        %v1284 = vshrl.u32 %v1200, 16
        %v1286 = vrot.slane %v1284, 4
        %v1287 = vshll.u32 %v1200, 16
        %v1289 = vrot.slane %v1287, 5
        %v1290 = vor.u32 %v1286, %v1289
        %v1291 = vrot.slane %v1290, 4
        %v1293 = vshll.u32 %v1201, 16
        %v1295 = vrot.slane %v1293, 5
        %v1296 = vsel %vm1226, %v1291, %v1295
        %v1298 = vshrl.u32 %v1202, 16
        %v1300 = vrot.slane %v1298, 4
        %v1301 = vshll.u32 %v1202, 16
        %v1303 = vrot.slane %v1301, 5
        %v1304 = vor.u32 %v1300, %v1303
        %v1305 = vrot.slane %v1304, 4
        %v1307 = vshll.u32 %v1203, 16
        %v1309 = vrot.slane %v1307, 5
        %v1310 = vsel %vm1226, %v1305, %v1309
        %v1312 = vshrl.u32 %v1204, 16
        %v1314 = vrot.slane %v1312, 4
        %v1315 = vshll.u32 %v1204, 16
        %v1317 = vrot.slane %v1315, 5
        %v1318 = vor.u32 %v1314, %v1317
        %v1319 = vrot.slane %v1318, 4
        %v1321 = vshll.u32 %v1205, 16
        %v1323 = vrot.slane %v1321, 5
        %v1324 = vsel %vm1226, %v1319, %v1323
        %v1326 = vshrl.u32 %v1206, 16
        %v1328 = vrot.slane %v1326, 4
        %v1329 = vshll.u32 %v1206, 16
        %v1331 = vrot.slane %v1329, 5
        %v1332 = vor.u32 %v1328, %v1331
        %v1333 = vrot.slane %v1332, 4
        %v1335 = vshll.u32 %v1207, 16
        %v1337 = vrot.slane %v1335, 5
        %v1338 = vsel %vm1226, %v1333, %v1337
        %v1340 = vshrl.u32 %v1208, 16
        %v1342 = vrot.slane %v1340, 4
        %v1343 = vshll.u32 %v1208, 16
        %v1345 = vrot.slane %v1343, 5
        %v1346 = vor.u32 %v1342, %v1345
        %v1347 = vrot.slane %v1346, 4
        %v1349 = vshll.u32 %v1209, 16
        %v1351 = vrot.slane %v1349, 5
        %v1352 = vsel %vm1226, %v1347, %v1351
        %v1354 = vshrl.u32 %v1210, 16
        %v1356 = vrot.slane %v1354, 4
        %v1357 = vshll.u32 %v1210, 16
        %v1359 = vrot.slane %v1357, 5
        %v1360 = vor.u32 %v1356, %v1359
        %v1361 = vrot.slane %v1360, 4
        %v1363 = vshll.u32 %v1211, 16
        %v1365 = vrot.slane %v1363, 5
        %v1366 = vsel %vm1226, %v1361, %v1365
        %v1368 = vshrl.u32 %v1212, 16
        %v1370 = vrot.slane %v1368, 4
        %v1371 = vshll.u32 %v1212, 16
        %v1373 = vrot.slane %v1371, 5
        %v1374 = vor.u32 %v1370, %v1373
        %v1375 = vrot.slane %v1374, 4
        %v1377 = vshll.u32 %v1213, 16
        %v1379 = vrot.slane %v1377, 5
        %v1380 = vsel %vm1226, %v1375, %v1379
        %v1382 = vshrl.u32 %v1214, 16
        %v1384 = vrot.slane %v1382, 4
        %v1385 = vshll.u32 %v1214, 16
        %v1387 = vrot.slane %v1385, 5
        %v1388 = vor.u32 %v1384, %v1387
        %v1389 = vrot.slane %v1388, 4
        %v1391 = vshll.u32 %v1215, 16
        %v1393 = vrot.slane %v1391, 5
        %v1394 = vsel %vm1226, %v1389, %v1393
        %v1396 = vshrl.u32 %v1216, 16
        %v1398 = vrot.slane %v1396, 4
        %v1399 = vshll.u32 %v1216, 16
        %v1401 = vrot.slane %v1399, 5
        %v1402 = vor.u32 %v1398, %v1401
        %v1403 = vrot.slane %v1402, 4
        %v1405 = vshll.u32 %v1217, 16
        %v1407 = vrot.slane %v1405, 5
        %v1408 = vsel %vm1226, %v1403, %v1407
        %v1410 = vshrl.u32 %v1218, 16
        %v1412 = vrot.slane %v1410, 4
        %v1413 = vshll.u32 %v1218, 16
        %v1415 = vrot.slane %v1413, 5
        %v1416 = vor.u32 %v1412, %v1415
        %v1417 = vrot.slane %v1416, 4
        %v1419 = vshll.u32 %v1219, 16
        %v1421 = vrot.slane %v1419, 5
        %v1422 = vsel %vm1226, %v1417, %v1421
        %v1424 = vshrl.u32 %v1220, 16
        %v1426 = vrot.slane %v1424, 4
        %v1427 = vshll.u32 %v1220, 16
        %v1429 = vrot.slane %v1427, 5
        %v1430 = vor.u32 %v1426, %v1429
        %v1431 = vrot.slane %v1430, 4
        %v1433 = vshll.u32 %v1221, 16
        %v1435 = vrot.slane %v1433, 5
        %v1436 = vsel %vm1226, %v1431, %v1435
        %v1438 = vshrl.u32 %v1222, 16
        %v1440 = vrot.slane %v1438, 4
        %v1441 = vshll.u32 %v1222, 16
        %v1443 = vrot.slane %v1441, 5
        %v1444 = vor.u32 %v1440, %v1443
        %v1445 = vrot.slane %v1444, 4
        %v1447 = vshll.u32 %v1223, 16
        %v1449 = vrot.slane %v1447, 5
        %v1450 = vsel %vm1226, %v1445, %v1449
        %s1451 = scalar_lea.vmem %s4, 64
        %v1452 = vld [vmem:[%s1451] sm:$0xf]
        %v1453 = vld [vmem:[%s1451 + $0x4] sm:$0xf]
        %v1454 = vld [vmem:[%s1451 + $0x8] sm:$0xf]
        %v1455 = vld [vmem:[%s1451 + $0xc] sm:$0xf]
        %v1456 = vld [vmem:[%s1451 + $0x10] sm:$0xf]
        %v1457 = vld [vmem:[%s1451 + $0x14] sm:$0xf]
        %v1458 = vld [vmem:[%s1451 + $0x18] sm:$0xf]
        %v1459 = vld [vmem:[%s1451 + $0x1c] sm:$0xf]
        %v1460 = vld [vmem:[%s1451 + $0x20] sm:$0xf]
        %v1461 = vld [vmem:[%s1451 + $0x24] sm:$0xf]
        %v1462 = vld [vmem:[%s1451 + $0x28] sm:$0xf]
        %v1463 = vld [vmem:[%s1451 + $0x2c] sm:$0xf]
        %v1464 = vld [vmem:[%s1451 + $0x30] sm:$0xf]
        %v1465 = vld [vmem:[%s1451 + $0x34] sm:$0xf]
        %v1466 = vld [vmem:[%s1451 + $0x38] sm:$0xf]
        %v1467 = vld [vmem:[%s1451 + $0x3c] sm:$0xf]
        %v1468 = vunpack.c.l.b16 %v1240
        %v1469 = vunpack.c.l.b16 %v1254
        %v1470 = vunpack.c.l.b16 %v1268
        %v1471 = vunpack.c.l.b16 %v1282
        %v1472 = vunpack.c.l.b16 %v1296
        %v1473 = vunpack.c.l.b16 %v1310
        %v1474 = vunpack.c.l.b16 %v1324
        %v1475 = vunpack.c.l.b16 %v1338
        %v1476 = vunpack.c.l.b16 %v1352
        %v1477 = vunpack.c.l.b16 %v1366
        %v1478 = vunpack.c.l.b16 %v1380
        %v1479 = vunpack.c.l.b16 %v1394
        %v1480 = vunpack.c.l.b16 %v1408
        %v1481 = vunpack.c.l.b16 %v1422
        %v1482 = vunpack.c.l.b16 %v1436
        %v1483 = vunpack.c.l.b16 %v1450
        %v1484 = vpack.c.b16 %v1469, %v1468
        %v1485 = vpack.c.b16 %v1471, %v1470
        %v1486 = vpack.c.b16 %v1473, %v1472
        %v1487 = vpack.c.b16 %v1475, %v1474
        %v1488 = vpack.c.b16 %v1477, %v1476
        %v1489 = vpack.c.b16 %v1479, %v1478
        %v1490 = vpack.c.b16 %v1481, %v1480
        %v1491 = vpack.c.b16 %v1483, %v1482
        %v1516 = vunpack.c.l.b16 %v1452
        %v1517 = vunpack.c.l.b16 %v1453
        %v1518 = vunpack.c.l.b16 %v1454
        %v1519 = vunpack.c.l.b16 %v1455
        %v1520 = vunpack.c.l.b16 %v1456
        %v1521 = vunpack.c.l.b16 %v1457
        %v1522 = vunpack.c.l.b16 %v1458
        %v1523 = vunpack.c.l.b16 %v1459
        %v1524 = vunpack.c.l.b16 %v1460
        %v1525 = vunpack.c.l.b16 %v1461
        %v1526 = vunpack.c.l.b16 %v1462
        %v1527 = vunpack.c.l.b16 %v1463
        %v1528 = vunpack.c.l.b16 %v1464
        %v1529 = vunpack.c.l.b16 %v1465
        %v1530 = vunpack.c.l.b16 %v1466
        %v1531 = vunpack.c.l.b16 %v1467
        %v1532 = vpack.c.b16 %v1517, %v1516
        %v1533 = vpack.c.b16 %v1519, %v1518
        %v1534 = vpack.c.b16 %v1521, %v1520
        %v1535 = vpack.c.b16 %v1523, %v1522
        %v1536 = vpack.c.b16 %v1525, %v1524
        %v1537 = vpack.c.b16 %v1527, %v1526
        %v1538 = vpack.c.b16 %v1529, %v1528
        %v1539 = vpack.c.b16 %v1531, %v1530
        %1548 = vmatprep.subr.bf16.mxu0 0
        %1549 = vmatpush1.bf16.msra.mxu0 %v1532
        %1550 = vmatprep.subr.bf16.mxu0 0
        %1551 = vmatpush1.bf16.msra.mxu0 %v1533
        %1552 = vmatprep.subr.bf16.mxu0 0
        %1553 = vmatpush1.bf16.msra.mxu0 %v1534
        %1554 = vmatprep.subr.bf16.mxu0 0
        %1555 = vmatpush1.bf16.msra.mxu0 %v1535
        %1556 = vmatprep.subr.bf16.mxu0 0
        %1557 = vmatpush1.bf16.msra.mxu0 %v1536
        %1558 = vmatprep.subr.bf16.mxu0 0
        %1559 = vmatpush1.bf16.msra.mxu0 %v1537
        %1560 = vmatprep.subr.bf16.mxu0 0
        %1561 = vmatpush1.bf16.msra.mxu0 %v1538
        %1562 = vmatprep.subr.bf16.mxu0 0
        %1563 = vmatpush1.bf16.msra.mxu0 %v1539
        %1564 = vmatprep.subr.bf16.mxu0 0
        %1565 = vmatpush1.bf16.msra.mxu0 0
        %1566 = vmatprep.subr.bf16.mxu0 0
        %1567 = vmatpush1.bf16.msra.mxu0 0
        %1568 = vmatprep.subr.bf16.mxu0 0
        %1569 = vmatpush1.bf16.msra.mxu0 0
        %1570 = vmatprep.subr.bf16.mxu0 0
        %1571 = vmatpush1.bf16.msra.mxu0 0
        %1572 = vmatprep.subr.bf16.mxu0 0
        %1573 = vmatpush1.bf16.msra.mxu0 0
        %1574 = vmatprep.subr.bf16.mxu0 0
        %1575 = vmatpush1.bf16.msra.mxu0 0
        %1576 = vmatprep.subr.bf16.mxu0 0
        %1577 = vmatpush1.bf16.msra.mxu0 0
        %1578 = vmatprep.subr.bf16.mxu0 0
        %1579 = vmatpush1.bf16.msra.mxu0 0
        %1580 = vmatprep.mubr.bf16.mxu0 0
        %1581 = vmatmul.mubr.bf16.gmra.mrb[0].mxu0 %v1484
        %v1582 = vpop.f32.mrb[0].mxu0
        %v1583 = vadd.f32 0.0, %v1582
        %v1584 = vpop.f32.mrb[0].mxu0
        %v1585 = vpop.f32.mrb[0].mxu0
        %v1586 = vadd.f32 0.0, %v1585
        %v1587 = vpop.f32.mrb[0].mxu0
        %1588 = vmatprep.mubr.bf16.mxu0 0
        %1589 = vmatmul.mubr.bf16.gmra.mrb[0].mxu0 %v1485
        %v1590 = vpop.f32.mrb[0].mxu0
        %v1591 = vadd.f32 0.0, %v1590
        %v1592 = vpop.f32.mrb[0].mxu0
        %v1593 = vpop.f32.mrb[0].mxu0
        %v1594 = vadd.f32 0.0, %v1593
        %v1595 = vpop.f32.mrb[0].mxu0
        %1596 = vmatprep.mubr.bf16.mxu0 0
        %1597 = vmatmul.mubr.bf16.gmra.mrb[0].mxu0 %v1486
        %v1598 = vpop.f32.mrb[0].mxu0
        %v1599 = vadd.f32 0.0, %v1598
        %v1600 = vpop.f32.mrb[0].mxu0
        %v1601 = vpop.f32.mrb[0].mxu0
        %v1602 = vadd.f32 0.0, %v1601
        %v1603 = vpop.f32.mrb[0].mxu0
        %1604 = vmatprep.mubr.bf16.mxu0 0
        %1605 = vmatmul.mubr.bf16.gmra.mrb[0].mxu0 %v1487
        %v1606 = vpop.f32.mrb[0].mxu0
        %v1607 = vadd.f32 0.0, %v1606
        %v1608 = vpop.f32.mrb[0].mxu0
        %v1609 = vpop.f32.mrb[0].mxu0
        %v1610 = vadd.f32 0.0, %v1609
        %v1611 = vpop.f32.mrb[0].mxu0
        %1612 = vmatprep.mubr.bf16.mxu0 0
        %1613 = vmatmul.mubr.bf16.gmra.mrb[0].mxu0 %v1488
        %v1614 = vpop.f32.mrb[0].mxu0
        %v1615 = vadd.f32 0.0, %v1614
        %v1616 = vpop.f32.mrb[0].mxu0
        %v1617 = vpop.f32.mrb[0].mxu0
        %v1618 = vadd.f32 0.0, %v1617
        %v1619 = vpop.f32.mrb[0].mxu0
        %1620 = vmatprep.mubr.bf16.mxu0 0
        %1621 = vmatmul.mubr.bf16.gmra.mrb[0].mxu0 %v1489
        %v1622 = vpop.f32.mrb[0].mxu0
        %v1623 = vadd.f32 0.0, %v1622
        %v1624 = vpop.f32.mrb[0].mxu0
        %v1625 = vpop.f32.mrb[0].mxu0
        %v1626 = vadd.f32 0.0, %v1625
        %v1627 = vpop.f32.mrb[0].mxu0
        %1628 = vmatprep.mubr.bf16.mxu0 0
        %1629 = vmatmul.mubr.bf16.gmra.mrb[0].mxu0 %v1490
        %v1630 = vpop.f32.mrb[0].mxu0
        %v1631 = vadd.f32 0.0, %v1630
        %v1632 = vpop.f32.mrb[0].mxu0
        %v1633 = vpop.f32.mrb[0].mxu0
        %v1634 = vadd.f32 0.0, %v1633
        %v1635 = vpop.f32.mrb[0].mxu0
        %1636 = vmatprep.mubr.bf16.mxu0 0
        %1637 = vmatmul.mubr.bf16.gmra.mrb[0].mxu0 %v1491
        %v1638 = vpop.f32.mrb[0].mxu0
        %v1639 = vadd.f32 0.0, %v1638
        %v1640 = vpop.f32.mrb[0].mxu0
        %v1641 = vpop.f32.mrb[0].mxu0
        %v1642 = vadd.f32 0.0, %v1641
        %v1643 = vpop.f32.mrb[0].mxu0
        %1644 = vdwg.mxu0
        %v1661 = vunpack.c.l.b16 %v1096
        %v1662 = vunpack.c.l.b16 %v1097
        %v1663 = vunpack.c.l.b16 %v1098
        %v1664 = vunpack.c.l.b16 %v1099
        %v1665 = vunpack.c.l.b16 %v1100
        %v1666 = vunpack.c.l.b16 %v1101
        %v1667 = vunpack.c.l.b16 %v1102
        %v1668 = vunpack.c.l.b16 %v1103
        %v1669 = vunpack.c.l.b16 %v1104
        %v1670 = vunpack.c.l.b16 %v1105
        %v1671 = vunpack.c.l.b16 %v1106
        %v1672 = vunpack.c.l.b16 %v1107
        %v1673 = vunpack.c.l.b16 %v1108
        %v1674 = vunpack.c.l.b16 %v1109
        %v1675 = vunpack.c.l.b16 %v1110
        %v1676 = vunpack.c.l.b16 %v1111
        %v1677 = vpack.c.b16 %v1662, %v1661
        %v1678 = vpack.c.b16 %v1664, %v1663
        %v1679 = vpack.c.b16 %v1666, %v1665
        %v1680 = vpack.c.b16 %v1668, %v1667
        %v1681 = vpack.c.b16 %v1670, %v1669
        %v1682 = vpack.c.b16 %v1672, %v1671
        %v1683 = vpack.c.b16 %v1674, %v1673
        %v1684 = vpack.c.b16 %v1676, %v1675
        %v1709 = vunpack.c.l.b16 %v1112
        %v1710 = vunpack.c.l.b16 %v1113
        %v1711 = vunpack.c.l.b16 %v1114
        %v1712 = vunpack.c.l.b16 %v1115
        %v1713 = vunpack.c.l.b16 %v1116
        %v1714 = vunpack.c.l.b16 %v1117
        %v1715 = vunpack.c.l.b16 %v1118
        %v1716 = vunpack.c.l.b16 %v1119
        %v1717 = vunpack.c.l.b16 %v1120
        %v1718 = vunpack.c.l.b16 %v1121
        %v1719 = vunpack.c.l.b16 %v1122
        %v1720 = vunpack.c.l.b16 %v1123
        %v1721 = vunpack.c.l.b16 %v1124
        %v1722 = vunpack.c.l.b16 %v1125
        %v1723 = vunpack.c.l.b16 %v1126
        %v1724 = vunpack.c.l.b16 %v1127
        %v1725 = vpack.c.b16 %v1710, %v1709
        %v1726 = vpack.c.b16 %v1712, %v1711
        %v1727 = vpack.c.b16 %v1714, %v1713
        %v1728 = vpack.c.b16 %v1716, %v1715
        %v1729 = vpack.c.b16 %v1718, %v1717
        %v1730 = vpack.c.b16 %v1720, %v1719
        %v1731 = vpack.c.b16 %v1722, %v1721
        %v1732 = vpack.c.b16 %v1724, %v1723
        %1741 = vmatprep.subr.bf16.mxu0 0
        %1742 = vmatpush1.bf16.msra.mxu0 %v1725
        %1743 = vmatprep.subr.bf16.mxu0 0
        %1744 = vmatpush1.bf16.msra.mxu0 %v1726
        %1745 = vmatprep.subr.bf16.mxu0 0
        %1746 = vmatpush1.bf16.msra.mxu0 %v1727
        %1747 = vmatprep.subr.bf16.mxu0 0
        %1748 = vmatpush1.bf16.msra.mxu0 %v1728
        %1749 = vmatprep.subr.bf16.mxu0 0
        %1750 = vmatpush1.bf16.msra.mxu0 %v1729
        %1751 = vmatprep.subr.bf16.mxu0 0
        %1752 = vmatpush1.bf16.msra.mxu0 %v1730
        %1753 = vmatprep.subr.bf16.mxu0 0
        %1754 = vmatpush1.bf16.msra.mxu0 %v1731
        %1755 = vmatprep.subr.bf16.mxu0 0
        %1756 = vmatpush1.bf16.msra.mxu0 %v1732
        %1757 = vmatprep.subr.bf16.mxu0 0
        %1758 = vmatpush1.bf16.msra.mxu0 0
        %1759 = vmatprep.subr.bf16.mxu0 0
        %1760 = vmatpush1.bf16.msra.mxu0 0
        %1761 = vmatprep.subr.bf16.mxu0 0
        %1762 = vmatpush1.bf16.msra.mxu0 0
        %1763 = vmatprep.subr.bf16.mxu0 0
        %1764 = vmatpush1.bf16.msra.mxu0 0
        %1765 = vmatprep.subr.bf16.mxu0 0
        %1766 = vmatpush1.bf16.msra.mxu0 0
        %1767 = vmatprep.subr.bf16.mxu0 0
        %1768 = vmatpush1.bf16.msra.mxu0 0
        %1769 = vmatprep.subr.bf16.mxu0 0
        %1770 = vmatpush1.bf16.msra.mxu0 0
        %1771 = vmatprep.subr.bf16.mxu0 0
        %1772 = vmatpush1.bf16.msra.mxu0 0
        %1773 = vmatprep.mubr.bf16.mxu0 0
        %1774 = vmatmul.mubr.bf16.gmra.mrb[0].mxu0 %v1677
        %v1775 = vpop.f32.mrb[0].mxu0
        %v1776 = vadd.f32 %v1583, %v1775
        %v1777 = vpop.f32.mrb[0].mxu0
        %v1778 = vpop.f32.mrb[0].mxu0
        %v1779 = vadd.f32 %v1586, %v1778
        %v1780 = vpop.f32.mrb[0].mxu0
        %1781 = vmatprep.mubr.bf16.mxu0 0
        %1782 = vmatmul.mubr.bf16.gmra.mrb[0].mxu0 %v1678
        %v1783 = vpop.f32.mrb[0].mxu0
        %v1784 = vadd.f32 %v1591, %v1783
        %v1785 = vpop.f32.mrb[0].mxu0
        %v1786 = vpop.f32.mrb[0].mxu0
        %v1787 = vadd.f32 %v1594, %v1786
        %v1788 = vpop.f32.mrb[0].mxu0
        %1789 = vmatprep.mubr.bf16.mxu0 0
        %1790 = vmatmul.mubr.bf16.gmra.mrb[0].mxu0 %v1679
        %v1791 = vpop.f32.mrb[0].mxu0
        %v1792 = vadd.f32 %v1599, %v1791
        %v1793 = vpop.f32.mrb[0].mxu0
        %v1794 = vpop.f32.mrb[0].mxu0
        %v1795 = vadd.f32 %v1602, %v1794
        %v1796 = vpop.f32.mrb[0].mxu0
        %1797 = vmatprep.mubr.bf16.mxu0 0
        %1798 = vmatmul.mubr.bf16.gmra.mrb[0].mxu0 %v1680
        %v1799 = vpop.f32.mrb[0].mxu0
        %v1800 = vadd.f32 %v1607, %v1799
        %v1801 = vpop.f32.mrb[0].mxu0
        %v1802 = vpop.f32.mrb[0].mxu0
        %v1803 = vadd.f32 %v1610, %v1802
        %v1804 = vpop.f32.mrb[0].mxu0
        %1805 = vmatprep.mubr.bf16.mxu0 0
        %1806 = vmatmul.mubr.bf16.gmra.mrb[0].mxu0 %v1681
        %v1807 = vpop.f32.mrb[0].mxu0
        %v1808 = vadd.f32 %v1615, %v1807
        %v1809 = vpop.f32.mrb[0].mxu0
        %v1810 = vpop.f32.mrb[0].mxu0
        %v1811 = vadd.f32 %v1618, %v1810
        %v1812 = vpop.f32.mrb[0].mxu0
        %1813 = vmatprep.mubr.bf16.mxu0 0
        %1814 = vmatmul.mubr.bf16.gmra.mrb[0].mxu0 %v1682
        %v1815 = vpop.f32.mrb[0].mxu0
        %v1816 = vadd.f32 %v1623, %v1815
        %v1817 = vpop.f32.mrb[0].mxu0
        %v1818 = vpop.f32.mrb[0].mxu0
        %v1819 = vadd.f32 %v1626, %v1818
        %v1820 = vpop.f32.mrb[0].mxu0
        %1821 = vmatprep.mubr.bf16.mxu0 0
        %1822 = vmatmul.mubr.bf16.gmra.mrb[0].mxu0 %v1683
        %v1823 = vpop.f32.mrb[0].mxu0
        %v1824 = vadd.f32 %v1631, %v1823
        %v1825 = vpop.f32.mrb[0].mxu0
        %v1826 = vpop.f32.mrb[0].mxu0
        %v1827 = vadd.f32 %v1634, %v1826
        %v1828 = vpop.f32.mrb[0].mxu0
        %1829 = vmatprep.mubr.bf16.mxu0 0
        %1830 = vmatmul.mubr.bf16.gmra.mrb[0].mxu0 %v1684
        %v1831 = vpop.f32.mrb[0].mxu0
        %v1832 = vadd.f32 %v1639, %v1831
        %v1833 = vpop.f32.mrb[0].mxu0
        %v1834 = vpop.f32.mrb[0].mxu0
        %v1835 = vadd.f32 %v1642, %v1834
        %v1836 = vpop.f32.mrb[0].mxu0
        %1837 = vdwg.mxu0
        %v1838 = vld [vmem:[#allocation2] sm:$0x1e]
        %v1839 = vld [vmem:[#allocation2 + $0x8] sm:$0x1e]
        %v1840 = vld [vmem:[#allocation2 + $0x10] sm:$0x1e]
        %v1841 = vld [vmem:[#allocation2 + $0x18] sm:$0x1e]
        %v1842 = vld [vmem:[#allocation2 + $0x20] sm:$0x1e]
        %v1843 = vld [vmem:[#allocation2 + $0x28] sm:$0x1e]
        %v1844 = vld [vmem:[#allocation2 + $0x30] sm:$0x1e]
        %v1845 = vld [vmem:[#allocation2 + $0x38] sm:$0x1e]
        %v1846 = vld [vmem:[#allocation2 + $0x50] sm:$0x1e]
        %v1847 = vld [vmem:[#allocation2 + $0x58] sm:$0x1e]
        %v1848 = vld [vmem:[#allocation2 + $0x60] sm:$0x1e]
        %v1849 = vld [vmem:[#allocation2 + $0x68] sm:$0x1e]
        %v1850 = vld [vmem:[#allocation2 + $0x70] sm:$0x1e]
        %v1851 = vld [vmem:[#allocation2 + $0x78] sm:$0x1e]
        %v1852 = vld [vmem:[#allocation2 + $0x80] sm:$0x1e]
        %v1853 = vld [vmem:[#allocation2 + $0x88] sm:$0x1e]
        %v1870 = vunpack.c.l.b16 %v1838
        %v1871 = vunpack.c.h.b16 %v1838
        %v1872 = vunpack.c.l.b16 %v1839
        %v1873 = vunpack.c.h.b16 %v1839
        %v1874 = vunpack.c.l.b16 %v1840
        %v1875 = vunpack.c.h.b16 %v1840
        %v1876 = vunpack.c.l.b16 %v1841
        %v1877 = vunpack.c.h.b16 %v1841
        %v1878 = vunpack.c.l.b16 %v1842
        %v1879 = vunpack.c.h.b16 %v1842
        %v1880 = vunpack.c.l.b16 %v1843
        %v1881 = vunpack.c.h.b16 %v1843
        %v1882 = vunpack.c.l.b16 %v1844
        %v1883 = vunpack.c.h.b16 %v1844
        %v1884 = vunpack.c.l.b16 %v1845
        %v1885 = vunpack.c.h.b16 %v1845
        %v1886 = vunpack.c.l.b16 %v1846
        %v1887 = vunpack.c.h.b16 %v1846
        %v1888 = vunpack.c.l.b16 %v1847
        %v1889 = vunpack.c.h.b16 %v1847
        %v1890 = vunpack.c.l.b16 %v1848
        %v1891 = vunpack.c.h.b16 %v1848
        %v1892 = vunpack.c.l.b16 %v1849
        %v1893 = vunpack.c.h.b16 %v1849
        %v1894 = vunpack.c.l.b16 %v1850
        %v1895 = vunpack.c.h.b16 %v1850
        %v1896 = vunpack.c.l.b16 %v1851
        %v1897 = vunpack.c.h.b16 %v1851
        %v1898 = vunpack.c.l.b16 %v1852
        %v1899 = vunpack.c.h.b16 %v1852
        %v1900 = vunpack.c.l.b16 %v1853
        %v1901 = vunpack.c.h.b16 %v1853
        %v1902 = vpack.c.b16 %v1870, %v1870
        %v1903 = vpack.c.b16 %v1871, %v1871
        %v1904 = vpack.c.b16 %v1872, %v1872
        %v1905 = vpack.c.b16 %v1873, %v1873
        %v1906 = vpack.c.b16 %v1874, %v1874
        %v1907 = vpack.c.b16 %v1875, %v1875
        %v1908 = vpack.c.b16 %v1876, %v1876
        %v1909 = vpack.c.b16 %v1877, %v1877
        %v1910 = vpack.c.b16 %v1878, %v1878
        %v1911 = vpack.c.b16 %v1879, %v1879
        %v1912 = vpack.c.b16 %v1880, %v1880
        %v1913 = vpack.c.b16 %v1881, %v1881
        %v1914 = vpack.c.b16 %v1882, %v1882
        %v1915 = vpack.c.b16 %v1883, %v1883
        %v1916 = vpack.c.b16 %v1884, %v1884
        %v1917 = vpack.c.b16 %v1885, %v1885
        %v1918 = vpack.c.b16 %v1886, %v1886
        %v1919 = vpack.c.b16 %v1887, %v1887
        %v1920 = vpack.c.b16 %v1888, %v1888
        %v1921 = vpack.c.b16 %v1889, %v1889
        %v1922 = vpack.c.b16 %v1890, %v1890
        %v1923 = vpack.c.b16 %v1891, %v1891
        %v1924 = vpack.c.b16 %v1892, %v1892
        %v1925 = vpack.c.b16 %v1893, %v1893
        %v1926 = vpack.c.b16 %v1894, %v1894
        %v1927 = vpack.c.b16 %v1895, %v1895
        %v1928 = vpack.c.b16 %v1896, %v1896
        %v1929 = vpack.c.b16 %v1897, %v1897
        %v1930 = vpack.c.b16 %v1898, %v1898
        %v1931 = vpack.c.b16 %v1899, %v1899
        %v1932 = vpack.c.b16 %v1900, %v1900
        %v1933 = vpack.c.b16 %v1901, %v1901
        %vm1934 = vcmask 1042432
        %vm1935 = vcmask 1046532
        %vm1936 = vmor %vm1934, %vm1935
        %v1937 = vrot.slane %v1902, 5
        %v1938 = vrot.slane %v1937, 4
        %v1939 = vrot.slane %v1903, 5
        %v1940 = vsel %vm1936, %v1938, %v1939
        %v1941 = vrot.slane %v1904, 5
        %v1942 = vrot.slane %v1941, 4
        %v1943 = vrot.slane %v1905, 5
        %v1944 = vsel %vm1936, %v1942, %v1943
        %v1945 = vrot.slane %v1906, 5
        %v1946 = vrot.slane %v1945, 4
        %v1947 = vrot.slane %v1907, 5
        %v1948 = vsel %vm1936, %v1946, %v1947
        %v1949 = vrot.slane %v1908, 5
        %v1950 = vrot.slane %v1949, 4
        %v1951 = vrot.slane %v1909, 5
        %v1952 = vsel %vm1936, %v1950, %v1951
        %v1953 = vrot.slane %v1910, 5
        %v1954 = vrot.slane %v1953, 4
        %v1955 = vrot.slane %v1911, 5
        %v1956 = vsel %vm1936, %v1954, %v1955
        %v1957 = vrot.slane %v1912, 5
        %v1958 = vrot.slane %v1957, 4
        %v1959 = vrot.slane %v1913, 5
        %v1960 = vsel %vm1936, %v1958, %v1959
        %v1961 = vrot.slane %v1914, 5
        %v1962 = vrot.slane %v1961, 4
        %v1963 = vrot.slane %v1915, 5
        %v1964 = vsel %vm1936, %v1962, %v1963
        %v1965 = vrot.slane %v1916, 5
        %v1966 = vrot.slane %v1965, 4
        %v1967 = vrot.slane %v1917, 5
        %v1968 = vsel %vm1936, %v1966, %v1967
        %v1969 = vrot.slane %v1918, 5
        %v1970 = vrot.slane %v1969, 4
        %v1971 = vrot.slane %v1919, 5
        %v1972 = vsel %vm1936, %v1970, %v1971
        %v1973 = vrot.slane %v1920, 5
        %v1974 = vrot.slane %v1973, 4
        %v1975 = vrot.slane %v1921, 5
        %v1976 = vsel %vm1936, %v1974, %v1975
        %v1977 = vrot.slane %v1922, 5
        %v1978 = vrot.slane %v1977, 4
        %v1979 = vrot.slane %v1923, 5
        %v1980 = vsel %vm1936, %v1978, %v1979
        %v1981 = vrot.slane %v1924, 5
        %v1982 = vrot.slane %v1981, 4
        %v1983 = vrot.slane %v1925, 5
        %v1984 = vsel %vm1936, %v1982, %v1983
        %v1985 = vrot.slane %v1926, 5
        %v1986 = vrot.slane %v1985, 4
        %v1987 = vrot.slane %v1927, 5
        %v1988 = vsel %vm1936, %v1986, %v1987
        %v1989 = vrot.slane %v1928, 5
        %v1990 = vrot.slane %v1989, 4
        %v1991 = vrot.slane %v1929, 5
        %v1992 = vsel %vm1936, %v1990, %v1991
        %v1993 = vrot.slane %v1930, 5
        %v1994 = vrot.slane %v1993, 4
        %v1995 = vrot.slane %v1931, 5
        %v1996 = vsel %vm1936, %v1994, %v1995
        %v1997 = vrot.slane %v1932, 5
        %v1998 = vrot.slane %v1997, 4
        %v1999 = vrot.slane %v1933, 5
        %v2000 = vsel %vm1936, %v1998, %v1999
        %s2001 = scalar_lea.vmem %s4, 128
        %v2002 = vld [vmem:[%s2001] sm:$0xf]
        %v2003 = vld [vmem:[%s2001 + $0x4] sm:$0xf]
        %v2004 = vld [vmem:[%s2001 + $0x8] sm:$0xf]
        %v2005 = vld [vmem:[%s2001 + $0xc] sm:$0xf]
        %v2006 = vld [vmem:[%s2001 + $0x10] sm:$0xf]
        %v2007 = vld [vmem:[%s2001 + $0x14] sm:$0xf]
        %v2008 = vld [vmem:[%s2001 + $0x18] sm:$0xf]
        %v2009 = vld [vmem:[%s2001 + $0x1c] sm:$0xf]
        %v2010 = vld [vmem:[%s2001 + $0x20] sm:$0xf]
        %v2011 = vld [vmem:[%s2001 + $0x24] sm:$0xf]
        %v2012 = vld [vmem:[%s2001 + $0x28] sm:$0xf]
        %v2013 = vld [vmem:[%s2001 + $0x2c] sm:$0xf]
        %v2014 = vld [vmem:[%s2001 + $0x30] sm:$0xf]
        %v2015 = vld [vmem:[%s2001 + $0x34] sm:$0xf]
        %v2016 = vld [vmem:[%s2001 + $0x38] sm:$0xf]
        %v2017 = vld [vmem:[%s2001 + $0x3c] sm:$0xf]
        %v2018 = vunpack.c.l.b16 %v1940
        %v2019 = vunpack.c.l.b16 %v1944
        %v2020 = vunpack.c.l.b16 %v1948
        %v2021 = vunpack.c.l.b16 %v1952
        %v2022 = vunpack.c.l.b16 %v1956
        %v2023 = vunpack.c.l.b16 %v1960
        %v2024 = vunpack.c.l.b16 %v1964
        %v2025 = vunpack.c.l.b16 %v1968
        %v2026 = vunpack.c.l.b16 %v1972
        %v2027 = vunpack.c.l.b16 %v1976
        %v2028 = vunpack.c.l.b16 %v1980
        %v2029 = vunpack.c.l.b16 %v1984
        %v2030 = vunpack.c.l.b16 %v1988
        %v2031 = vunpack.c.l.b16 %v1992
        %v2032 = vunpack.c.l.b16 %v1996
        %v2033 = vunpack.c.l.b16 %v2000
        %v2034 = vpack.c.b16 %v2019, %v2018
        %v2035 = vpack.c.b16 %v2021, %v2020
        %v2036 = vpack.c.b16 %v2023, %v2022
        %v2037 = vpack.c.b16 %v2025, %v2024
        %v2038 = vpack.c.b16 %v2027, %v2026
        %v2039 = vpack.c.b16 %v2029, %v2028
        %v2040 = vpack.c.b16 %v2031, %v2030
        %v2041 = vpack.c.b16 %v2033, %v2032
        %v2066 = vunpack.c.l.b16 %v2002
        %v2067 = vunpack.c.l.b16 %v2003
        %v2068 = vunpack.c.l.b16 %v2004
        %v2069 = vunpack.c.l.b16 %v2005
        %v2070 = vunpack.c.l.b16 %v2006
        %v2071 = vunpack.c.l.b16 %v2007
        %v2072 = vunpack.c.l.b16 %v2008
        %v2073 = vunpack.c.l.b16 %v2009
        %v2074 = vunpack.c.l.b16 %v2010
        %v2075 = vunpack.c.l.b16 %v2011
        %v2076 = vunpack.c.l.b16 %v2012
        %v2077 = vunpack.c.l.b16 %v2013
        %v2078 = vunpack.c.l.b16 %v2014
        %v2079 = vunpack.c.l.b16 %v2015
        %v2080 = vunpack.c.l.b16 %v2016
        %v2081 = vunpack.c.l.b16 %v2017
        %v2082 = vpack.c.b16 %v2067, %v2066
        %v2083 = vpack.c.b16 %v2069, %v2068
        %v2084 = vpack.c.b16 %v2071, %v2070
        %v2085 = vpack.c.b16 %v2073, %v2072
        %v2086 = vpack.c.b16 %v2075, %v2074
        %v2087 = vpack.c.b16 %v2077, %v2076
        %v2088 = vpack.c.b16 %v2079, %v2078
        %v2089 = vpack.c.b16 %v2081, %v2080
        %2098 = vmatprep.subr.bf16.mxu0 0
        %2099 = vmatpush1.bf16.msra.mxu0 %v2082
        %2100 = vmatprep.subr.bf16.mxu0 0
        %2101 = vmatpush1.bf16.msra.mxu0 %v2083
        %2102 = vmatprep.subr.bf16.mxu0 0
        %2103 = vmatpush1.bf16.msra.mxu0 %v2084
        %2104 = vmatprep.subr.bf16.mxu0 0
        %2105 = vmatpush1.bf16.msra.mxu0 %v2085
        %2106 = vmatprep.subr.bf16.mxu0 0
        %2107 = vmatpush1.bf16.msra.mxu0 %v2086
        %2108 = vmatprep.subr.bf16.mxu0 0
        %2109 = vmatpush1.bf16.msra.mxu0 %v2087
        %2110 = vmatprep.subr.bf16.mxu0 0
        %2111 = vmatpush1.bf16.msra.mxu0 %v2088
        %2112 = vmatprep.subr.bf16.mxu0 0
        %2113 = vmatpush1.bf16.msra.mxu0 %v2089
        %2114 = vmatprep.subr.bf16.mxu0 0
        %2115 = vmatpush1.bf16.msra.mxu0 0
        %2116 = vmatprep.subr.bf16.mxu0 0
        %2117 = vmatpush1.bf16.msra.mxu0 0
        %2118 = vmatprep.subr.bf16.mxu0 0
        %2119 = vmatpush1.bf16.msra.mxu0 0
        %2120 = vmatprep.subr.bf16.mxu0 0
        %2121 = vmatpush1.bf16.msra.mxu0 0
        %2122 = vmatprep.subr.bf16.mxu0 0
        %2123 = vmatpush1.bf16.msra.mxu0 0
        %2124 = vmatprep.subr.bf16.mxu0 0
        %2125 = vmatpush1.bf16.msra.mxu0 0
        %2126 = vmatprep.subr.bf16.mxu0 0
        %2127 = vmatpush1.bf16.msra.mxu0 0
        %2128 = vmatprep.subr.bf16.mxu0 0
        %2129 = vmatpush1.bf16.msra.mxu0 0
        %2130 = vmatprep.mubr.bf16.mxu0 0
        %2131 = vmatmul.mubr.bf16.gmra.mrb[0].mxu0 %v2034
        %v2132 = vpop.f32.mrb[0].mxu0
        %v2133 = vadd.f32 0.0, %v2132
        %v2134 = vpop.f32.mrb[0].mxu0
        %v2135 = vpop.f32.mrb[0].mxu0
        %v2136 = vadd.f32 0.0, %v2135
        %v2137 = vpop.f32.mrb[0].mxu0
        %2138 = vmatprep.mubr.bf16.mxu0 0
        %2139 = vmatmul.mubr.bf16.gmra.mrb[0].mxu0 %v2035
        %v2140 = vpop.f32.mrb[0].mxu0
        %v2141 = vadd.f32 0.0, %v2140
        %v2142 = vpop.f32.mrb[0].mxu0
        %v2143 = vpop.f32.mrb[0].mxu0
        %v2144 = vadd.f32 0.0, %v2143
        %v2145 = vpop.f32.mrb[0].mxu0
        %2146 = vmatprep.mubr.bf16.mxu0 0
        %2147 = vmatmul.mubr.bf16.gmra.mrb[0].mxu0 %v2036
        %v2148 = vpop.f32.mrb[0].mxu0
        %v2149 = vadd.f32 0.0, %v2148
        %v2150 = vpop.f32.mrb[0].mxu0
        %v2151 = vpop.f32.mrb[0].mxu0
        %v2152 = vadd.f32 0.0, %v2151
        %v2153 = vpop.f32.mrb[0].mxu0
        %2154 = vmatprep.mubr.bf16.mxu0 0
        %2155 = vmatmul.mubr.bf16.gmra.mrb[0].mxu0 %v2037
        %v2156 = vpop.f32.mrb[0].mxu0
        %v2157 = vadd.f32 0.0, %v2156
        %v2158 = vpop.f32.mrb[0].mxu0
        %v2159 = vpop.f32.mrb[0].mxu0
        %v2160 = vadd.f32 0.0, %v2159
        %v2161 = vpop.f32.mrb[0].mxu0
        %2162 = vmatprep.mubr.bf16.mxu0 0
        %2163 = vmatmul.mubr.bf16.gmra.mrb[0].mxu0 %v2038
        %v2164 = vpop.f32.mrb[0].mxu0
        %v2165 = vadd.f32 0.0, %v2164
        %v2166 = vpop.f32.mrb[0].mxu0
        %v2167 = vpop.f32.mrb[0].mxu0
        %v2168 = vadd.f32 0.0, %v2167
        %v2169 = vpop.f32.mrb[0].mxu0
        %2170 = vmatprep.mubr.bf16.mxu0 0
        %2171 = vmatmul.mubr.bf16.gmra.mrb[0].mxu0 %v2039
        %v2172 = vpop.f32.mrb[0].mxu0
        %v2173 = vadd.f32 0.0, %v2172
        %v2174 = vpop.f32.mrb[0].mxu0
        %v2175 = vpop.f32.mrb[0].mxu0
        %v2176 = vadd.f32 0.0, %v2175
        %v2177 = vpop.f32.mrb[0].mxu0
        %2178 = vmatprep.mubr.bf16.mxu0 0
        %2179 = vmatmul.mubr.bf16.gmra.mrb[0].mxu0 %v2040
        %v2180 = vpop.f32.mrb[0].mxu0
        %v2181 = vadd.f32 0.0, %v2180
        %v2182 = vpop.f32.mrb[0].mxu0
        %v2183 = vpop.f32.mrb[0].mxu0
        %v2184 = vadd.f32 0.0, %v2183
        %v2185 = vpop.f32.mrb[0].mxu0
        %2186 = vmatprep.mubr.bf16.mxu0 0
        %2187 = vmatmul.mubr.bf16.gmra.mrb[0].mxu0 %v2041
        %v2188 = vpop.f32.mrb[0].mxu0
        %v2189 = vadd.f32 0.0, %v2188
        %v2190 = vpop.f32.mrb[0].mxu0
        %v2191 = vpop.f32.mrb[0].mxu0
        %v2192 = vadd.f32 0.0, %v2191
        %v2193 = vpop.f32.mrb[0].mxu0
        %2194 = vdwg.mxu0
        %v2195 = vadd.f32 %v1776, %v2133
        %v2196 = vadd.f32 %v1779, %v2136
        %v2197 = vadd.f32 %v1784, %v2141
        %v2198 = vadd.f32 %v1787, %v2144
        %v2199 = vadd.f32 %v1792, %v2149
        %v2200 = vadd.f32 %v1795, %v2152
        %v2201 = vadd.f32 %v1800, %v2157
        %v2202 = vadd.f32 %v1803, %v2160
        %v2203 = vadd.f32 %v1808, %v2165
        %v2204 = vadd.f32 %v1811, %v2168
        %v2205 = vadd.f32 %v1816, %v2173
        %v2206 = vadd.f32 %v1819, %v2176
        %v2207 = vadd.f32 %v1824, %v2181
        %v2208 = vadd.f32 %v1827, %v2184
        %v2209 = vadd.f32 %v1832, %v2189
        %v2210 = vadd.f32 %v1835, %v2192
        %v2211 = vld [vmem:[%s766] sm:$0xf]
        %v2212 = vld [vmem:[%s766 + $0x8] sm:$0xf]
        %v2213 = vld [vmem:[%s766 + $0x10] sm:$0xf]
        %v2214 = vld [vmem:[%s766 + $0x18] sm:$0xf]
        %v2215 = vld [vmem:[%s766 + $0x20] sm:$0xf]
        %v2216 = vld [vmem:[%s766 + $0x28] sm:$0xf]
        %v2217 = vld [vmem:[%s766 + $0x30] sm:$0xf]
        %v2218 = vld [vmem:[%s766 + $0x38] sm:$0xf]
        %v2219 = vld [vmem:[%s766 + $0x50] sm:$0xf]
        %v2220 = vld [vmem:[%s766 + $0x58] sm:$0xf]
        %v2221 = vld [vmem:[%s766 + $0x60] sm:$0xf]
        %v2222 = vld [vmem:[%s766 + $0x68] sm:$0xf]
        %v2223 = vld [vmem:[%s766 + $0x70] sm:$0xf]
        %v2224 = vld [vmem:[%s766 + $0x78] sm:$0xf]
        %v2225 = vld [vmem:[%s766 + $0x80] sm:$0xf]
        %v2226 = vld [vmem:[%s766 + $0x88] sm:$0xf]
        %s2227 = scalar_lea.vmem %s4, 192
        %v2228 = vld [vmem:[%s2227] sm:$0xf]
        %v2229 = vld [vmem:[%s2227 + $0x4] sm:$0xf]
        %v2230 = vld [vmem:[%s2227 + $0x8] sm:$0xf]
        %v2231 = vld [vmem:[%s2227 + $0xc] sm:$0xf]
        %v2232 = vld [vmem:[%s2227 + $0x10] sm:$0xf]
        %v2233 = vld [vmem:[%s2227 + $0x14] sm:$0xf]
        %v2234 = vld [vmem:[%s2227 + $0x18] sm:$0xf]
        %v2235 = vld [vmem:[%s2227 + $0x1c] sm:$0xf]
        %v2236 = vld [vmem:[%s2227 + $0x20] sm:$0xf]
        %v2237 = vld [vmem:[%s2227 + $0x24] sm:$0xf]
        %v2238 = vld [vmem:[%s2227 + $0x28] sm:$0xf]
        %v2239 = vld [vmem:[%s2227 + $0x2c] sm:$0xf]
        %v2240 = vld [vmem:[%s2227 + $0x30] sm:$0xf]
        %v2241 = vld [vmem:[%s2227 + $0x34] sm:$0xf]
        %v2242 = vld [vmem:[%s2227 + $0x38] sm:$0xf]
        %v2243 = vld [vmem:[%s2227 + $0x3c] sm:$0xf]
        %v2260 = vunpack.c.l.b16 %v2211
        %v2261 = vunpack.c.l.b16 %v2212
        %v2262 = vunpack.c.l.b16 %v2213
        %v2263 = vunpack.c.l.b16 %v2214
        %v2264 = vunpack.c.l.b16 %v2215
        %v2265 = vunpack.c.l.b16 %v2216
        %v2266 = vunpack.c.l.b16 %v2217
        %v2267 = vunpack.c.l.b16 %v2218
        %v2268 = vunpack.c.l.b16 %v2219
        %v2269 = vunpack.c.l.b16 %v2220
        %v2270 = vunpack.c.l.b16 %v2221
        %v2271 = vunpack.c.l.b16 %v2222
        %v2272 = vunpack.c.l.b16 %v2223
        %v2273 = vunpack.c.l.b16 %v2224
        %v2274 = vunpack.c.l.b16 %v2225
        %v2275 = vunpack.c.l.b16 %v2226
        %v2276 = vpack.c.b16 %v2261, %v2260
        %v2277 = vpack.c.b16 %v2263, %v2262
        %v2278 = vpack.c.b16 %v2265, %v2264
        %v2279 = vpack.c.b16 %v2267, %v2266
        %v2280 = vpack.c.b16 %v2269, %v2268
        %v2281 = vpack.c.b16 %v2271, %v2270
        %v2282 = vpack.c.b16 %v2273, %v2272
        %v2283 = vpack.c.b16 %v2275, %v2274
        %v2308 = vunpack.c.l.b16 %v2228
        %v2309 = vunpack.c.l.b16 %v2229
        %v2310 = vunpack.c.l.b16 %v2230
        %v2311 = vunpack.c.l.b16 %v2231
        %v2312 = vunpack.c.l.b16 %v2232
        %v2313 = vunpack.c.l.b16 %v2233
        %v2314 = vunpack.c.l.b16 %v2234
        %v2315 = vunpack.c.l.b16 %v2235
        %v2316 = vunpack.c.l.b16 %v2236
        %v2317 = vunpack.c.l.b16 %v2237
        %v2318 = vunpack.c.l.b16 %v2238
        %v2319 = vunpack.c.l.b16 %v2239
        %v2320 = vunpack.c.l.b16 %v2240
        %v2321 = vunpack.c.l.b16 %v2241
        %v2322 = vunpack.c.l.b16 %v2242
        %v2323 = vunpack.c.l.b16 %v2243
        %v2324 = vpack.c.b16 %v2309, %v2308
        %v2325 = vpack.c.b16 %v2311, %v2310
        %v2326 = vpack.c.b16 %v2313, %v2312
        %v2327 = vpack.c.b16 %v2315, %v2314
        %v2328 = vpack.c.b16 %v2317, %v2316
        %v2329 = vpack.c.b16 %v2319, %v2318
        %v2330 = vpack.c.b16 %v2321, %v2320
        %v2331 = vpack.c.b16 %v2323, %v2322
        %2340 = vmatprep.subr.bf16.mxu0 0
        %2341 = vmatpush1.bf16.msra.mxu0 %v2324
        %2342 = vmatprep.subr.bf16.mxu0 0
        %2343 = vmatpush1.bf16.msra.mxu0 %v2325
        %2344 = vmatprep.subr.bf16.mxu0 0
        %2345 = vmatpush1.bf16.msra.mxu0 %v2326
        %2346 = vmatprep.subr.bf16.mxu0 0
        %2347 = vmatpush1.bf16.msra.mxu0 %v2327
        %2348 = vmatprep.subr.bf16.mxu0 0
        %2349 = vmatpush1.bf16.msra.mxu0 %v2328
        %2350 = vmatprep.subr.bf16.mxu0 0
        %2351 = vmatpush1.bf16.msra.mxu0 %v2329
        %2352 = vmatprep.subr.bf16.mxu0 0
        %2353 = vmatpush1.bf16.msra.mxu0 %v2330
        %2354 = vmatprep.subr.bf16.mxu0 0
        %2355 = vmatpush1.bf16.msra.mxu0 %v2331
        %2356 = vmatprep.subr.bf16.mxu0 0
        %2357 = vmatpush1.bf16.msra.mxu0 0
        %2358 = vmatprep.subr.bf16.mxu0 0
        %2359 = vmatpush1.bf16.msra.mxu0 0
        %2360 = vmatprep.subr.bf16.mxu0 0
        %2361 = vmatpush1.bf16.msra.mxu0 0
        %2362 = vmatprep.subr.bf16.mxu0 0
        %2363 = vmatpush1.bf16.msra.mxu0 0
        %2364 = vmatprep.subr.bf16.mxu0 0
        %2365 = vmatpush1.bf16.msra.mxu0 0
        %2366 = vmatprep.subr.bf16.mxu0 0
        %2367 = vmatpush1.bf16.msra.mxu0 0
        %2368 = vmatprep.subr.bf16.mxu0 0
        %2369 = vmatpush1.bf16.msra.mxu0 0
        %2370 = vmatprep.subr.bf16.mxu0 0
        %2371 = vmatpush1.bf16.msra.mxu0 0
        %2372 = vmatprep.mubr.bf16.mxu0 0
        %2373 = vmatmul.mubr.bf16.gmra.mrb[0].mxu0 %v2276
        %v2374 = vpop.f32.mrb[0].mxu0
        %v2375 = vadd.f32 0.0, %v2374
        %v2376 = vpop.f32.mrb[0].mxu0
        %v2377 = vpop.f32.mrb[0].mxu0
        %v2378 = vadd.f32 0.0, %v2377
        %v2379 = vpop.f32.mrb[0].mxu0
        %2380 = vmatprep.mubr.bf16.mxu0 0
        %2381 = vmatmul.mubr.bf16.gmra.mrb[0].mxu0 %v2277
        %v2382 = vpop.f32.mrb[0].mxu0
        %v2383 = vadd.f32 0.0, %v2382
        %v2384 = vpop.f32.mrb[0].mxu0
        %v2385 = vpop.f32.mrb[0].mxu0
        %v2386 = vadd.f32 0.0, %v2385
        %v2387 = vpop.f32.mrb[0].mxu0
        %2388 = vmatprep.mubr.bf16.mxu0 0
        %2389 = vmatmul.mubr.bf16.gmra.mrb[0].mxu0 %v2278
        %v2390 = vpop.f32.mrb[0].mxu0
        %v2391 = vadd.f32 0.0, %v2390
        %v2392 = vpop.f32.mrb[0].mxu0
        %v2393 = vpop.f32.mrb[0].mxu0
        %v2394 = vadd.f32 0.0, %v2393
        %v2395 = vpop.f32.mrb[0].mxu0
        %2396 = vmatprep.mubr.bf16.mxu0 0
        %2397 = vmatmul.mubr.bf16.gmra.mrb[0].mxu0 %v2279
        %v2398 = vpop.f32.mrb[0].mxu0
        %v2399 = vadd.f32 0.0, %v2398
        %v2400 = vpop.f32.mrb[0].mxu0
        %v2401 = vpop.f32.mrb[0].mxu0
        %v2402 = vadd.f32 0.0, %v2401
        %v2403 = vpop.f32.mrb[0].mxu0
        %2404 = vmatprep.mubr.bf16.mxu0 0
        %2405 = vmatmul.mubr.bf16.gmra.mrb[0].mxu0 %v2280
        %v2406 = vpop.f32.mrb[0].mxu0
        %v2407 = vadd.f32 0.0, %v2406
        %v2408 = vpop.f32.mrb[0].mxu0
        %v2409 = vpop.f32.mrb[0].mxu0
        %v2410 = vadd.f32 0.0, %v2409
        %v2411 = vpop.f32.mrb[0].mxu0
        %2412 = vmatprep.mubr.bf16.mxu0 0
        %2413 = vmatmul.mubr.bf16.gmra.mrb[0].mxu0 %v2281
        %v2414 = vpop.f32.mrb[0].mxu0
        %v2415 = vadd.f32 0.0, %v2414
        %v2416 = vpop.f32.mrb[0].mxu0
        %v2417 = vpop.f32.mrb[0].mxu0
        %v2418 = vadd.f32 0.0, %v2417
        %v2419 = vpop.f32.mrb[0].mxu0
        %2420 = vmatprep.mubr.bf16.mxu0 0
        %2421 = vmatmul.mubr.bf16.gmra.mrb[0].mxu0 %v2282
        %v2422 = vpop.f32.mrb[0].mxu0
        %v2423 = vadd.f32 0.0, %v2422
        %v2424 = vpop.f32.mrb[0].mxu0
        %v2425 = vpop.f32.mrb[0].mxu0
        %v2426 = vadd.f32 0.0, %v2425
        %v2427 = vpop.f32.mrb[0].mxu0
        %2428 = vmatprep.mubr.bf16.mxu0 0
        %2429 = vmatmul.mubr.bf16.gmra.mrb[0].mxu0 %v2283
        %v2430 = vpop.f32.mrb[0].mxu0
        %v2431 = vadd.f32 0.0, %v2430
        %v2432 = vpop.f32.mrb[0].mxu0
        %v2433 = vpop.f32.mrb[0].mxu0
        %v2434 = vadd.f32 0.0, %v2433
        %v2435 = vpop.f32.mrb[0].mxu0
        %2436 = vdwg.mxu0
        %v2437 = vadd.f32 %v2195, %v2375
        %v2438 = vadd.f32 %v2196, %v2378
        %v2439 = vadd.f32 %v2197, %v2383
        %v2440 = vadd.f32 %v2198, %v2386
        %v2441 = vadd.f32 %v2199, %v2391
        %v2442 = vadd.f32 %v2200, %v2394
        %v2443 = vadd.f32 %v2201, %v2399
        %v2444 = vadd.f32 %v2202, %v2402
        %v2445 = vadd.f32 %v2203, %v2407
        %v2446 = vadd.f32 %v2204, %v2410
        %v2447 = vadd.f32 %v2205, %v2415
        %v2448 = vadd.f32 %v2206, %v2418
        %v2449 = vadd.f32 %v2207, %v2423
        %v2450 = vadd.f32 %v2208, %v2426
        %v2451 = vadd.f32 %v2209, %v2431
        %v2452 = vadd.f32 %v2210, %v2434
        %v2453 = vld [vmem:[%s766] sm:$0x1f]
        %v2454 = vld [vmem:[%s766 + $0x8] sm:$0x1f]
        %v2455 = vld [vmem:[%s766 + $0x10] sm:$0x1f]
        %v2456 = vld [vmem:[%s766 + $0x18] sm:$0x1f]
        %v2457 = vld [vmem:[%s766 + $0x20] sm:$0x1f]
        %v2458 = vld [vmem:[%s766 + $0x28] sm:$0x1f]
        %v2459 = vld [vmem:[%s766 + $0x30] sm:$0x1f]
        %v2460 = vld [vmem:[%s766 + $0x38] sm:$0x1f]
        %v2461 = vld [vmem:[%s766 + $0x50] sm:$0x1f]
        %v2462 = vld [vmem:[%s766 + $0x58] sm:$0x1f]
        %v2463 = vld [vmem:[%s766 + $0x60] sm:$0x1f]
        %v2464 = vld [vmem:[%s766 + $0x68] sm:$0x1f]
        %v2465 = vld [vmem:[%s766 + $0x70] sm:$0x1f]
        %v2466 = vld [vmem:[%s766 + $0x78] sm:$0x1f]
        %v2467 = vld [vmem:[%s766 + $0x80] sm:$0x1f]
        %v2468 = vld [vmem:[%s766 + $0x88] sm:$0x1f]
        %v2485 = vunpack.c.l.b16 %v2453
        %v2486 = vunpack.c.h.b16 %v2453
        %v2487 = vunpack.c.l.b16 %v2454
        %v2488 = vunpack.c.h.b16 %v2454
        %v2489 = vunpack.c.l.b16 %v2455
        %v2490 = vunpack.c.h.b16 %v2455
        %v2491 = vunpack.c.l.b16 %v2456
        %v2492 = vunpack.c.h.b16 %v2456
        %v2493 = vunpack.c.l.b16 %v2457
        %v2494 = vunpack.c.h.b16 %v2457
        %v2495 = vunpack.c.l.b16 %v2458
        %v2496 = vunpack.c.h.b16 %v2458
        %v2497 = vunpack.c.l.b16 %v2459
        %v2498 = vunpack.c.h.b16 %v2459
        %v2499 = vunpack.c.l.b16 %v2460
        %v2500 = vunpack.c.h.b16 %v2460
        %v2501 = vunpack.c.l.b16 %v2461
        %v2502 = vunpack.c.h.b16 %v2461
        %v2503 = vunpack.c.l.b16 %v2462
        %v2504 = vunpack.c.h.b16 %v2462
        %v2505 = vunpack.c.l.b16 %v2463
        %v2506 = vunpack.c.h.b16 %v2463
        %v2507 = vunpack.c.l.b16 %v2464
        %v2508 = vunpack.c.h.b16 %v2464
        %v2509 = vunpack.c.l.b16 %v2465
        %v2510 = vunpack.c.h.b16 %v2465
        %v2511 = vunpack.c.l.b16 %v2466
        %v2512 = vunpack.c.h.b16 %v2466
        %v2513 = vunpack.c.l.b16 %v2467
        %v2514 = vunpack.c.h.b16 %v2467
        %v2515 = vunpack.c.l.b16 %v2468
        %v2516 = vunpack.c.h.b16 %v2468
        %v2517 = vpack.c.b16 %v2485, %v2485
        %v2518 = vpack.c.b16 %v2486, %v2486
        %v2519 = vpack.c.b16 %v2487, %v2487
        %v2520 = vpack.c.b16 %v2488, %v2488
        %v2521 = vpack.c.b16 %v2489, %v2489
        %v2522 = vpack.c.b16 %v2490, %v2490
        %v2523 = vpack.c.b16 %v2491, %v2491
        %v2524 = vpack.c.b16 %v2492, %v2492
        %v2525 = vpack.c.b16 %v2493, %v2493
        %v2526 = vpack.c.b16 %v2494, %v2494
        %v2527 = vpack.c.b16 %v2495, %v2495
        %v2528 = vpack.c.b16 %v2496, %v2496
        %v2529 = vpack.c.b16 %v2497, %v2497
        %v2530 = vpack.c.b16 %v2498, %v2498
        %v2531 = vpack.c.b16 %v2499, %v2499
        %v2532 = vpack.c.b16 %v2500, %v2500
        %v2533 = vpack.c.b16 %v2501, %v2501
        %v2534 = vpack.c.b16 %v2502, %v2502
        %v2535 = vpack.c.b16 %v2503, %v2503
        %v2536 = vpack.c.b16 %v2504, %v2504
        %v2537 = vpack.c.b16 %v2505, %v2505
        %v2538 = vpack.c.b16 %v2506, %v2506
        %v2539 = vpack.c.b16 %v2507, %v2507
        %v2540 = vpack.c.b16 %v2508, %v2508
        %v2541 = vpack.c.b16 %v2509, %v2509
        %v2542 = vpack.c.b16 %v2510, %v2510
        %v2543 = vpack.c.b16 %v2511, %v2511
        %v2544 = vpack.c.b16 %v2512, %v2512
        %v2545 = vpack.c.b16 %v2513, %v2513
        %v2546 = vpack.c.b16 %v2514, %v2514
        %v2547 = vpack.c.b16 %v2515, %v2515
        %v2548 = vpack.c.b16 %v2516, %v2516
        %v2550 = vshrl.u32 %v2517, 16
        %v2552 = vrot.slane %v2550, 4
        %v2553 = vshll.u32 %v2517, 16
        %v2555 = vrot.slane %v2553, 5
        %v2556 = vor.u32 %v2552, %v2555
        %v2557 = vrot.slane %v2556, 4
        %v2559 = vshll.u32 %v2518, 16
        %v2561 = vrot.slane %v2559, 5
        %v2562 = vsel %vm1226, %v2557, %v2561
        %v2564 = vshrl.u32 %v2519, 16
        %v2566 = vrot.slane %v2564, 4
        %v2567 = vshll.u32 %v2519, 16
        %v2569 = vrot.slane %v2567, 5
        %v2570 = vor.u32 %v2566, %v2569
        %v2571 = vrot.slane %v2570, 4
        %v2573 = vshll.u32 %v2520, 16
        %v2575 = vrot.slane %v2573, 5
        %v2576 = vsel %vm1226, %v2571, %v2575
        %v2578 = vshrl.u32 %v2521, 16
        %v2580 = vrot.slane %v2578, 4
        %v2581 = vshll.u32 %v2521, 16
        %v2583 = vrot.slane %v2581, 5
        %v2584 = vor.u32 %v2580, %v2583
        %v2585 = vrot.slane %v2584, 4
        %v2587 = vshll.u32 %v2522, 16
        %v2589 = vrot.slane %v2587, 5
        %v2590 = vsel %vm1226, %v2585, %v2589
        %v2592 = vshrl.u32 %v2523, 16
        %v2594 = vrot.slane %v2592, 4
        %v2595 = vshll.u32 %v2523, 16
        %v2597 = vrot.slane %v2595, 5
        %v2598 = vor.u32 %v2594, %v2597
        %v2599 = vrot.slane %v2598, 4
        %v2601 = vshll.u32 %v2524, 16
        %v2603 = vrot.slane %v2601, 5
        %v2604 = vsel %vm1226, %v2599, %v2603
        %v2606 = vshrl.u32 %v2525, 16
        %v2608 = vrot.slane %v2606, 4
        %v2609 = vshll.u32 %v2525, 16
        %v2611 = vrot.slane %v2609, 5
        %v2612 = vor.u32 %v2608, %v2611
        %v2613 = vrot.slane %v2612, 4
        %v2615 = vshll.u32 %v2526, 16
        %v2617 = vrot.slane %v2615, 5
        %v2618 = vsel %vm1226, %v2613, %v2617
        %v2620 = vshrl.u32 %v2527, 16
        %v2622 = vrot.slane %v2620, 4
        %v2623 = vshll.u32 %v2527, 16
        %v2625 = vrot.slane %v2623, 5
        %v2626 = vor.u32 %v2622, %v2625
        %v2627 = vrot.slane %v2626, 4
        %v2629 = vshll.u32 %v2528, 16
        %v2631 = vrot.slane %v2629, 5
        %v2632 = vsel %vm1226, %v2627, %v2631
        %v2634 = vshrl.u32 %v2529, 16
        %v2636 = vrot.slane %v2634, 4
        %v2637 = vshll.u32 %v2529, 16
        %v2639 = vrot.slane %v2637, 5
        %v2640 = vor.u32 %v2636, %v2639
        %v2641 = vrot.slane %v2640, 4
        %v2643 = vshll.u32 %v2530, 16
        %v2645 = vrot.slane %v2643, 5
        %v2646 = vsel %vm1226, %v2641, %v2645
        %v2648 = vshrl.u32 %v2531, 16
        %v2650 = vrot.slane %v2648, 4
        %v2651 = vshll.u32 %v2531, 16
        %v2653 = vrot.slane %v2651, 5
        %v2654 = vor.u32 %v2650, %v2653
        %v2655 = vrot.slane %v2654, 4
        %v2657 = vshll.u32 %v2532, 16
        %v2659 = vrot.slane %v2657, 5
        %v2660 = vsel %vm1226, %v2655, %v2659
        %v2662 = vshrl.u32 %v2533, 16
        %v2664 = vrot.slane %v2662, 4
        %v2665 = vshll.u32 %v2533, 16
        %v2667 = vrot.slane %v2665, 5
        %v2668 = vor.u32 %v2664, %v2667
        %v2669 = vrot.slane %v2668, 4
        %v2671 = vshll.u32 %v2534, 16
        %v2673 = vrot.slane %v2671, 5
        %v2674 = vsel %vm1226, %v2669, %v2673
        %v2676 = vshrl.u32 %v2535, 16
        %v2678 = vrot.slane %v2676, 4
        %v2679 = vshll.u32 %v2535, 16
        %v2681 = vrot.slane %v2679, 5
        %v2682 = vor.u32 %v2678, %v2681
        %v2683 = vrot.slane %v2682, 4
        %v2685 = vshll.u32 %v2536, 16
        %v2687 = vrot.slane %v2685, 5
        %v2688 = vsel %vm1226, %v2683, %v2687
        %v2690 = vshrl.u32 %v2537, 16
        %v2692 = vrot.slane %v2690, 4
        %v2693 = vshll.u32 %v2537, 16
        %v2695 = vrot.slane %v2693, 5
        %v2696 = vor.u32 %v2692, %v2695
        %v2697 = vrot.slane %v2696, 4
        %v2699 = vshll.u32 %v2538, 16
        %v2701 = vrot.slane %v2699, 5
        %v2702 = vsel %vm1226, %v2697, %v2701
        %v2704 = vshrl.u32 %v2539, 16
        %v2706 = vrot.slane %v2704, 4
        %v2707 = vshll.u32 %v2539, 16
        %v2709 = vrot.slane %v2707, 5
        %v2710 = vor.u32 %v2706, %v2709
        %v2711 = vrot.slane %v2710, 4
        %v2713 = vshll.u32 %v2540, 16
        %v2715 = vrot.slane %v2713, 5
        %v2716 = vsel %vm1226, %v2711, %v2715
        %v2718 = vshrl.u32 %v2541, 16
        %v2720 = vrot.slane %v2718, 4
        %v2721 = vshll.u32 %v2541, 16
        %v2723 = vrot.slane %v2721, 5
        %v2724 = vor.u32 %v2720, %v2723
        %v2725 = vrot.slane %v2724, 4
        %v2727 = vshll.u32 %v2542, 16
        %v2729 = vrot.slane %v2727, 5
        %v2730 = vsel %vm1226, %v2725, %v2729
        %v2732 = vshrl.u32 %v2543, 16
        %v2734 = vrot.slane %v2732, 4
        %v2735 = vshll.u32 %v2543, 16
        %v2737 = vrot.slane %v2735, 5
        %v2738 = vor.u32 %v2734, %v2737
        %v2739 = vrot.slane %v2738, 4
        %v2741 = vshll.u32 %v2544, 16
        %v2743 = vrot.slane %v2741, 5
        %v2744 = vsel %vm1226, %v2739, %v2743
        %v2746 = vshrl.u32 %v2545, 16
        %v2748 = vrot.slane %v2746, 4
        %v2749 = vshll.u32 %v2545, 16
        %v2751 = vrot.slane %v2749, 5
        %v2752 = vor.u32 %v2748, %v2751
        %v2753 = vrot.slane %v2752, 4
        %v2755 = vshll.u32 %v2546, 16
        %v2757 = vrot.slane %v2755, 5
        %v2758 = vsel %vm1226, %v2753, %v2757
        %v2760 = vshrl.u32 %v2547, 16
        %v2762 = vrot.slane %v2760, 4
        %v2763 = vshll.u32 %v2547, 16
        %v2765 = vrot.slane %v2763, 5
        %v2766 = vor.u32 %v2762, %v2765
        %v2767 = vrot.slane %v2766, 4
        %v2769 = vshll.u32 %v2548, 16
        %v2771 = vrot.slane %v2769, 5
        %v2772 = vsel %vm1226, %v2767, %v2771
        %s2773 = scalar_lea.vmem %s4, 256
        %v2774 = vld [vmem:[%s2773] sm:$0xf]
        %v2775 = vld [vmem:[%s2773 + $0x4] sm:$0xf]
        %v2776 = vld [vmem:[%s2773 + $0x8] sm:$0xf]
        %v2777 = vld [vmem:[%s2773 + $0xc] sm:$0xf]
        %v2778 = vld [vmem:[%s2773 + $0x10] sm:$0xf]
        %v2779 = vld [vmem:[%s2773 + $0x14] sm:$0xf]
        %v2780 = vld [vmem:[%s2773 + $0x18] sm:$0xf]
        %v2781 = vld [vmem:[%s2773 + $0x1c] sm:$0xf]
        %v2782 = vld [vmem:[%s2773 + $0x20] sm:$0xf]
        %v2783 = vld [vmem:[%s2773 + $0x24] sm:$0xf]
        %v2784 = vld [vmem:[%s2773 + $0x28] sm:$0xf]
        %v2785 = vld [vmem:[%s2773 + $0x2c] sm:$0xf]
        %v2786 = vld [vmem:[%s2773 + $0x30] sm:$0xf]
        %v2787 = vld [vmem:[%s2773 + $0x34] sm:$0xf]
        %v2788 = vld [vmem:[%s2773 + $0x38] sm:$0xf]
        %v2789 = vld [vmem:[%s2773 + $0x3c] sm:$0xf]
        %v2790 = vunpack.c.l.b16 %v2562
        %v2791 = vunpack.c.l.b16 %v2576
        %v2792 = vunpack.c.l.b16 %v2590
        %v2793 = vunpack.c.l.b16 %v2604
        %v2794 = vunpack.c.l.b16 %v2618
        %v2795 = vunpack.c.l.b16 %v2632
        %v2796 = vunpack.c.l.b16 %v2646
        %v2797 = vunpack.c.l.b16 %v2660
        %v2798 = vunpack.c.l.b16 %v2674
        %v2799 = vunpack.c.l.b16 %v2688
        %v2800 = vunpack.c.l.b16 %v2702
        %v2801 = vunpack.c.l.b16 %v2716
        %v2802 = vunpack.c.l.b16 %v2730
        %v2803 = vunpack.c.l.b16 %v2744
        %v2804 = vunpack.c.l.b16 %v2758
        %v2805 = vunpack.c.l.b16 %v2772
        %v2806 = vpack.c.b16 %v2791, %v2790
        %v2807 = vpack.c.b16 %v2793, %v2792
        %v2808 = vpack.c.b16 %v2795, %v2794
        %v2809 = vpack.c.b16 %v2797, %v2796
        %v2810 = vpack.c.b16 %v2799, %v2798
        %v2811 = vpack.c.b16 %v2801, %v2800
        %v2812 = vpack.c.b16 %v2803, %v2802
        %v2813 = vpack.c.b16 %v2805, %v2804
        %v2838 = vunpack.c.l.b16 %v2774
        %v2839 = vunpack.c.l.b16 %v2775
        %v2840 = vunpack.c.l.b16 %v2776
        %v2841 = vunpack.c.l.b16 %v2777
        %v2842 = vunpack.c.l.b16 %v2778
        %v2843 = vunpack.c.l.b16 %v2779
        %v2844 = vunpack.c.l.b16 %v2780
        %v2845 = vunpack.c.l.b16 %v2781
        %v2846 = vunpack.c.l.b16 %v2782
        %v2847 = vunpack.c.l.b16 %v2783
        %v2848 = vunpack.c.l.b16 %v2784
        %v2849 = vunpack.c.l.b16 %v2785
        %v2850 = vunpack.c.l.b16 %v2786
        %v2851 = vunpack.c.l.b16 %v2787
        %v2852 = vunpack.c.l.b16 %v2788
        %v2853 = vunpack.c.l.b16 %v2789
        %v2854 = vpack.c.b16 %v2839, %v2838
        %v2855 = vpack.c.b16 %v2841, %v2840
        %v2856 = vpack.c.b16 %v2843, %v2842
        %v2857 = vpack.c.b16 %v2845, %v2844
        %v2858 = vpack.c.b16 %v2847, %v2846
        %v2859 = vpack.c.b16 %v2849, %v2848
        %v2860 = vpack.c.b16 %v2851, %v2850
        %v2861 = vpack.c.b16 %v2853, %v2852
        %2870 = vmatprep.subr.bf16.mxu0 0
        %2871 = vmatpush1.bf16.msra.mxu0 %v2854
        %2872 = vmatprep.subr.bf16.mxu0 0
        %2873 = vmatpush1.bf16.msra.mxu0 %v2855
        %2874 = vmatprep.subr.bf16.mxu0 0
        %2875 = vmatpush1.bf16.msra.mxu0 %v2856
        %2876 = vmatprep.subr.bf16.mxu0 0
        %2877 = vmatpush1.bf16.msra.mxu0 %v2857
        %2878 = vmatprep.subr.bf16.mxu0 0
        %2879 = vmatpush1.bf16.msra.mxu0 %v2858
        %2880 = vmatprep.subr.bf16.mxu0 0
        %2881 = vmatpush1.bf16.msra.mxu0 %v2859
        %2882 = vmatprep.subr.bf16.mxu0 0
        %2883 = vmatpush1.bf16.msra.mxu0 %v2860
        %2884 = vmatprep.subr.bf16.mxu0 0
        %2885 = vmatpush1.bf16.msra.mxu0 %v2861
        %2886 = vmatprep.subr.bf16.mxu0 0
        %2887 = vmatpush1.bf16.msra.mxu0 0
        %2888 = vmatprep.subr.bf16.mxu0 0
        %2889 = vmatpush1.bf16.msra.mxu0 0
        %2890 = vmatprep.subr.bf16.mxu0 0
        %2891 = vmatpush1.bf16.msra.mxu0 0
        %2892 = vmatprep.subr.bf16.mxu0 0
        %2893 = vmatpush1.bf16.msra.mxu0 0
        %2894 = vmatprep.subr.bf16.mxu0 0
        %2895 = vmatpush1.bf16.msra.mxu0 0
        %2896 = vmatprep.subr.bf16.mxu0 0
        %2897 = vmatpush1.bf16.msra.mxu0 0
        %2898 = vmatprep.subr.bf16.mxu0 0
        %2899 = vmatpush1.bf16.msra.mxu0 0
        %2900 = vmatprep.subr.bf16.mxu0 0
        %2901 = vmatpush1.bf16.msra.mxu0 0
        %2902 = vmatprep.mubr.bf16.mxu0 0
        %2903 = vmatmul.mubr.bf16.gmra.mrb[0].mxu0 %v2806
        %v2904 = vpop.f32.mrb[0].mxu0
        %v2905 = vadd.f32 0.0, %v2904
        %v2906 = vpop.f32.mrb[0].mxu0
        %v2907 = vpop.f32.mrb[0].mxu0
        %v2908 = vadd.f32 0.0, %v2907
        %v2909 = vpop.f32.mrb[0].mxu0
        %2910 = vmatprep.mubr.bf16.mxu0 0
        %2911 = vmatmul.mubr.bf16.gmra.mrb[0].mxu0 %v2807
        %v2912 = vpop.f32.mrb[0].mxu0
        %v2913 = vadd.f32 0.0, %v2912
        %v2914 = vpop.f32.mrb[0].mxu0
        %v2915 = vpop.f32.mrb[0].mxu0
        %v2916 = vadd.f32 0.0, %v2915
        %v2917 = vpop.f32.mrb[0].mxu0
        %2918 = vmatprep.mubr.bf16.mxu0 0
        %2919 = vmatmul.mubr.bf16.gmra.mrb[0].mxu0 %v2808
        %v2920 = vpop.f32.mrb[0].mxu0
        %v2921 = vadd.f32 0.0, %v2920
        %v2922 = vpop.f32.mrb[0].mxu0
        %v2923 = vpop.f32.mrb[0].mxu0
        %v2924 = vadd.f32 0.0, %v2923
        %v2925 = vpop.f32.mrb[0].mxu0
        %2926 = vmatprep.mubr.bf16.mxu0 0
        %2927 = vmatmul.mubr.bf16.gmra.mrb[0].mxu0 %v2809
        %v2928 = vpop.f32.mrb[0].mxu0
        %v2929 = vadd.f32 0.0, %v2928
        %v2930 = vpop.f32.mrb[0].mxu0
        %v2931 = vpop.f32.mrb[0].mxu0
        %v2932 = vadd.f32 0.0, %v2931
        %v2933 = vpop.f32.mrb[0].mxu0
        %2934 = vmatprep.mubr.bf16.mxu0 0
        %2935 = vmatmul.mubr.bf16.gmra.mrb[0].mxu0 %v2810
        %v2936 = vpop.f32.mrb[0].mxu0
        %v2937 = vadd.f32 0.0, %v2936
        %v2938 = vpop.f32.mrb[0].mxu0
        %v2939 = vpop.f32.mrb[0].mxu0
        %v2940 = vadd.f32 0.0, %v2939
        %v2941 = vpop.f32.mrb[0].mxu0
        %2942 = vmatprep.mubr.bf16.mxu0 0
        %2943 = vmatmul.mubr.bf16.gmra.mrb[0].mxu0 %v2811
        %v2944 = vpop.f32.mrb[0].mxu0
        %v2945 = vadd.f32 0.0, %v2944
        %v2946 = vpop.f32.mrb[0].mxu0
        %v2947 = vpop.f32.mrb[0].mxu0
        %v2948 = vadd.f32 0.0, %v2947
        %v2949 = vpop.f32.mrb[0].mxu0
        %2950 = vmatprep.mubr.bf16.mxu0 0
        %2951 = vmatmul.mubr.bf16.gmra.mrb[0].mxu0 %v2812
        %v2952 = vpop.f32.mrb[0].mxu0
        %v2953 = vadd.f32 0.0, %v2952
        %v2954 = vpop.f32.mrb[0].mxu0
        %v2955 = vpop.f32.mrb[0].mxu0
        %v2956 = vadd.f32 0.0, %v2955
        %v2957 = vpop.f32.mrb[0].mxu0
        %2958 = vmatprep.mubr.bf16.mxu0 0
        %2959 = vmatmul.mubr.bf16.gmra.mrb[0].mxu0 %v2813
        %v2960 = vpop.f32.mrb[0].mxu0
        %v2961 = vadd.f32 0.0, %v2960
        %v2962 = vpop.f32.mrb[0].mxu0
        %v2963 = vpop.f32.mrb[0].mxu0
        %v2964 = vadd.f32 0.0, %v2963
        %v2965 = vpop.f32.mrb[0].mxu0
        %2966 = vdwg.mxu0
        %v2967 = vadd.f32 %v2437, %v2905
        %v2968 = vadd.f32 %v2438, %v2908
        %v2969 = vadd.f32 %v2439, %v2913
        %v2970 = vadd.f32 %v2440, %v2916
        %v2971 = vadd.f32 %v2441, %v2921
        %v2972 = vadd.f32 %v2442, %v2924
        %v2973 = vadd.f32 %v2443, %v2929
        %v2974 = vadd.f32 %v2444, %v2932
        %v2975 = vadd.f32 %v2445, %v2937
        %v2976 = vadd.f32 %v2446, %v2940
        %v2977 = vadd.f32 %v2447, %v2945
        %v2978 = vadd.f32 %v2448, %v2948
        %v2979 = vadd.f32 %v2449, %v2953
        %v2980 = vadd.f32 %v2450, %v2956
        %v2981 = vadd.f32 %v2451, %v2961
        %v2982 = vadd.f32 %v2452, %v2964
        %v2983 = vld [vmem:[%s766] sm:$0x1e]
        %v2984 = vld [vmem:[%s766 + $0x8] sm:$0x1e]
        %v2985 = vld [vmem:[%s766 + $0x10] sm:$0x1e]
        %v2986 = vld [vmem:[%s766 + $0x18] sm:$0x1e]
        %v2987 = vld [vmem:[%s766 + $0x20] sm:$0x1e]
        %v2988 = vld [vmem:[%s766 + $0x28] sm:$0x1e]
        %v2989 = vld [vmem:[%s766 + $0x30] sm:$0x1e]
        %v2990 = vld [vmem:[%s766 + $0x38] sm:$0x1e]
        %v2991 = vld [vmem:[%s766 + $0x50] sm:$0x1e]
        %v2992 = vld [vmem:[%s766 + $0x58] sm:$0x1e]
        %v2993 = vld [vmem:[%s766 + $0x60] sm:$0x1e]
        %v2994 = vld [vmem:[%s766 + $0x68] sm:$0x1e]
        %v2995 = vld [vmem:[%s766 + $0x70] sm:$0x1e]
        %v2996 = vld [vmem:[%s766 + $0x78] sm:$0x1e]
        %v2997 = vld [vmem:[%s766 + $0x80] sm:$0x1e]
        %v2998 = vld [vmem:[%s766 + $0x88] sm:$0x1e]
        %v3015 = vunpack.c.l.b16 %v2983
        %v3016 = vunpack.c.h.b16 %v2983
        %v3017 = vunpack.c.l.b16 %v2984
        %v3018 = vunpack.c.h.b16 %v2984
        %v3019 = vunpack.c.l.b16 %v2985
        %v3020 = vunpack.c.h.b16 %v2985
        %v3021 = vunpack.c.l.b16 %v2986
        %v3022 = vunpack.c.h.b16 %v2986
        %v3023 = vunpack.c.l.b16 %v2987
        %v3024 = vunpack.c.h.b16 %v2987
        %v3025 = vunpack.c.l.b16 %v2988
        %v3026 = vunpack.c.h.b16 %v2988
        %v3027 = vunpack.c.l.b16 %v2989
        %v3028 = vunpack.c.h.b16 %v2989
        %v3029 = vunpack.c.l.b16 %v2990
        %v3030 = vunpack.c.h.b16 %v2990
        %v3031 = vunpack.c.l.b16 %v2991
        %v3032 = vunpack.c.h.b16 %v2991
        %v3033 = vunpack.c.l.b16 %v2992
        %v3034 = vunpack.c.h.b16 %v2992
        %v3035 = vunpack.c.l.b16 %v2993
        %v3036 = vunpack.c.h.b16 %v2993
        %v3037 = vunpack.c.l.b16 %v2994
        %v3038 = vunpack.c.h.b16 %v2994
        %v3039 = vunpack.c.l.b16 %v2995
        %v3040 = vunpack.c.h.b16 %v2995
        %v3041 = vunpack.c.l.b16 %v2996
        %v3042 = vunpack.c.h.b16 %v2996
        %v3043 = vunpack.c.l.b16 %v2997
        %v3044 = vunpack.c.h.b16 %v2997
        %v3045 = vunpack.c.l.b16 %v2998
        %v3046 = vunpack.c.h.b16 %v2998
        %v3047 = vpack.c.b16 %v3015, %v3015
        %v3048 = vpack.c.b16 %v3016, %v3016
        %v3049 = vpack.c.b16 %v3017, %v3017
        %v3050 = vpack.c.b16 %v3018, %v3018
        %v3051 = vpack.c.b16 %v3019, %v3019
        %v3052 = vpack.c.b16 %v3020, %v3020
        %v3053 = vpack.c.b16 %v3021, %v3021
        %v3054 = vpack.c.b16 %v3022, %v3022
        %v3055 = vpack.c.b16 %v3023, %v3023
        %v3056 = vpack.c.b16 %v3024, %v3024
        %v3057 = vpack.c.b16 %v3025, %v3025
        %v3058 = vpack.c.b16 %v3026, %v3026
        %v3059 = vpack.c.b16 %v3027, %v3027
        %v3060 = vpack.c.b16 %v3028, %v3028
        %v3061 = vpack.c.b16 %v3029, %v3029
        %v3062 = vpack.c.b16 %v3030, %v3030
        %v3063 = vpack.c.b16 %v3031, %v3031
        %v3064 = vpack.c.b16 %v3032, %v3032
        %v3065 = vpack.c.b16 %v3033, %v3033
        %v3066 = vpack.c.b16 %v3034, %v3034
        %v3067 = vpack.c.b16 %v3035, %v3035
        %v3068 = vpack.c.b16 %v3036, %v3036
        %v3069 = vpack.c.b16 %v3037, %v3037
        %v3070 = vpack.c.b16 %v3038, %v3038
        %v3071 = vpack.c.b16 %v3039, %v3039
        %v3072 = vpack.c.b16 %v3040, %v3040
        %v3073 = vpack.c.b16 %v3041, %v3041
        %v3074 = vpack.c.b16 %v3042, %v3042
        %v3075 = vpack.c.b16 %v3043, %v3043
        %v3076 = vpack.c.b16 %v3044, %v3044
        %v3077 = vpack.c.b16 %v3045, %v3045
        %v3078 = vpack.c.b16 %v3046, %v3046
        %v3079 = vrot.slane %v3047, 5
        %v3080 = vrot.slane %v3079, 4
        %v3081 = vrot.slane %v3048, 5
        %v3082 = vsel %vm1936, %v3080, %v3081
        %v3083 = vrot.slane %v3049, 5
        %v3084 = vrot.slane %v3083, 4
        %v3085 = vrot.slane %v3050, 5
        %v3086 = vsel %vm1936, %v3084, %v3085
        %v3087 = vrot.slane %v3051, 5
        %v3088 = vrot.slane %v3087, 4
        %v3089 = vrot.slane %v3052, 5
        %v3090 = vsel %vm1936, %v3088, %v3089
        %v3091 = vrot.slane %v3053, 5
        %v3092 = vrot.slane %v3091, 4
        %v3093 = vrot.slane %v3054, 5
        %v3094 = vsel %vm1936, %v3092, %v3093
        %v3095 = vrot.slane %v3055, 5
        %v3096 = vrot.slane %v3095, 4
        %v3097 = vrot.slane %v3056, 5
        %v3098 = vsel %vm1936, %v3096, %v3097
        %v3099 = vrot.slane %v3057, 5
        %v3100 = vrot.slane %v3099, 4
        %v3101 = vrot.slane %v3058, 5
        %v3102 = vsel %vm1936, %v3100, %v3101
        %v3103 = vrot.slane %v3059, 5
        %v3104 = vrot.slane %v3103, 4
        %v3105 = vrot.slane %v3060, 5
        %v3106 = vsel %vm1936, %v3104, %v3105
        %v3107 = vrot.slane %v3061, 5
        %v3108 = vrot.slane %v3107, 4
        %v3109 = vrot.slane %v3062, 5
        %v3110 = vsel %vm1936, %v3108, %v3109
        %v3111 = vrot.slane %v3063, 5
        %v3112 = vrot.slane %v3111, 4
        %v3113 = vrot.slane %v3064, 5
        %v3114 = vsel %vm1936, %v3112, %v3113
        %v3115 = vrot.slane %v3065, 5
        %v3116 = vrot.slane %v3115, 4
        %v3117 = vrot.slane %v3066, 5
        %v3118 = vsel %vm1936, %v3116, %v3117
        %v3119 = vrot.slane %v3067, 5
        %v3120 = vrot.slane %v3119, 4
        %v3121 = vrot.slane %v3068, 5
        %v3122 = vsel %vm1936, %v3120, %v3121
        %v3123 = vrot.slane %v3069, 5
        %v3124 = vrot.slane %v3123, 4
        %v3125 = vrot.slane %v3070, 5
        %v3126 = vsel %vm1936, %v3124, %v3125
        %v3127 = vrot.slane %v3071, 5
        %v3128 = vrot.slane %v3127, 4
        %v3129 = vrot.slane %v3072, 5
        %v3130 = vsel %vm1936, %v3128, %v3129
        %v3131 = vrot.slane %v3073, 5
        %v3132 = vrot.slane %v3131, 4
        %v3133 = vrot.slane %v3074, 5
        %v3134 = vsel %vm1936, %v3132, %v3133
        %v3135 = vrot.slane %v3075, 5
        %v3136 = vrot.slane %v3135, 4
        %v3137 = vrot.slane %v3076, 5
        %v3138 = vsel %vm1936, %v3136, %v3137
        %v3139 = vrot.slane %v3077, 5
        %v3140 = vrot.slane %v3139, 4
        %v3141 = vrot.slane %v3078, 5
        %v3142 = vsel %vm1936, %v3140, %v3141
        %s3143 = scalar_lea.vmem %s4, 320
        %v3144 = vld [vmem:[%s3143] sm:$0xf]
        %v3145 = vld [vmem:[%s3143 + $0x4] sm:$0xf]
        %v3146 = vld [vmem:[%s3143 + $0x8] sm:$0xf]
        %v3147 = vld [vmem:[%s3143 + $0xc] sm:$0xf]
        %v3148 = vld [vmem:[%s3143 + $0x10] sm:$0xf]
        %v3149 = vld [vmem:[%s3143 + $0x14] sm:$0xf]
        %v3150 = vld [vmem:[%s3143 + $0x18] sm:$0xf]
        %v3151 = vld [vmem:[%s3143 + $0x1c] sm:$0xf]
        %v3152 = vld [vmem:[%s3143 + $0x20] sm:$0xf]
        %v3153 = vld [vmem:[%s3143 + $0x24] sm:$0xf]
        %v3154 = vld [vmem:[%s3143 + $0x28] sm:$0xf]
        %v3155 = vld [vmem:[%s3143 + $0x2c] sm:$0xf]
        %v3156 = vld [vmem:[%s3143 + $0x30] sm:$0xf]
        %v3157 = vld [vmem:[%s3143 + $0x34] sm:$0xf]
        %v3158 = vld [vmem:[%s3143 + $0x38] sm:$0xf]
        %v3159 = vld [vmem:[%s3143 + $0x3c] sm:$0xf]
        %v3160 = vunpack.c.l.b16 %v3082
        %v3161 = vunpack.c.l.b16 %v3086
        %v3162 = vunpack.c.l.b16 %v3090
        %v3163 = vunpack.c.l.b16 %v3094
        %v3164 = vunpack.c.l.b16 %v3098
        %v3165 = vunpack.c.l.b16 %v3102
        %v3166 = vunpack.c.l.b16 %v3106
        %v3167 = vunpack.c.l.b16 %v3110
        %v3168 = vunpack.c.l.b16 %v3114
        %v3169 = vunpack.c.l.b16 %v3118
        %v3170 = vunpack.c.l.b16 %v3122
        %v3171 = vunpack.c.l.b16 %v3126
        %v3172 = vunpack.c.l.b16 %v3130
        %v3173 = vunpack.c.l.b16 %v3134
        %v3174 = vunpack.c.l.b16 %v3138
        %v3175 = vunpack.c.l.b16 %v3142
        %v3176 = vpack.c.b16 %v3161, %v3160
        %v3177 = vpack.c.b16 %v3163, %v3162
        %v3178 = vpack.c.b16 %v3165, %v3164
        %v3179 = vpack.c.b16 %v3167, %v3166
        %v3180 = vpack.c.b16 %v3169, %v3168
        %v3181 = vpack.c.b16 %v3171, %v3170
        %v3182 = vpack.c.b16 %v3173, %v3172
        %v3183 = vpack.c.b16 %v3175, %v3174
        %v3208 = vunpack.c.l.b16 %v3144
        %v3209 = vunpack.c.l.b16 %v3145
        %v3210 = vunpack.c.l.b16 %v3146
        %v3211 = vunpack.c.l.b16 %v3147
        %v3212 = vunpack.c.l.b16 %v3148
        %v3213 = vunpack.c.l.b16 %v3149
        %v3214 = vunpack.c.l.b16 %v3150
        %v3215 = vunpack.c.l.b16 %v3151
        %v3216 = vunpack.c.l.b16 %v3152
        %v3217 = vunpack.c.l.b16 %v3153
        %v3218 = vunpack.c.l.b16 %v3154
        %v3219 = vunpack.c.l.b16 %v3155
        %v3220 = vunpack.c.l.b16 %v3156
        %v3221 = vunpack.c.l.b16 %v3157
        %v3222 = vunpack.c.l.b16 %v3158
        %v3223 = vunpack.c.l.b16 %v3159
        %v3224 = vpack.c.b16 %v3209, %v3208
        %v3225 = vpack.c.b16 %v3211, %v3210
        %v3226 = vpack.c.b16 %v3213, %v3212
        %v3227 = vpack.c.b16 %v3215, %v3214
        %v3228 = vpack.c.b16 %v3217, %v3216
        %v3229 = vpack.c.b16 %v3219, %v3218
        %v3230 = vpack.c.b16 %v3221, %v3220
        %v3231 = vpack.c.b16 %v3223, %v3222
        %3240 = vmatprep.subr.bf16.mxu0 0
        %3241 = vmatpush1.bf16.msra.mxu0 %v3224
        %3242 = vmatprep.subr.bf16.mxu0 0
        %3243 = vmatpush1.bf16.msra.mxu0 %v3225
        %3244 = vmatprep.subr.bf16.mxu0 0
        %3245 = vmatpush1.bf16.msra.mxu0 %v3226
        %3246 = vmatprep.subr.bf16.mxu0 0
        %3247 = vmatpush1.bf16.msra.mxu0 %v3227
        %3248 = vmatprep.subr.bf16.mxu0 0
        %3249 = vmatpush1.bf16.msra.mxu0 %v3228
        %3250 = vmatprep.subr.bf16.mxu0 0
        %3251 = vmatpush1.bf16.msra.mxu0 %v3229
        %3252 = vmatprep.subr.bf16.mxu0 0
        %3253 = vmatpush1.bf16.msra.mxu0 %v3230
        %3254 = vmatprep.subr.bf16.mxu0 0
        %3255 = vmatpush1.bf16.msra.mxu0 %v3231
        %3256 = vmatprep.subr.bf16.mxu0 0
        %3257 = vmatpush1.bf16.msra.mxu0 0
        %3258 = vmatprep.subr.bf16.mxu0 0
        %3259 = vmatpush1.bf16.msra.mxu0 0
        %3260 = vmatprep.subr.bf16.mxu0 0
        %3261 = vmatpush1.bf16.msra.mxu0 0
        %3262 = vmatprep.subr.bf16.mxu0 0
        %3263 = vmatpush1.bf16.msra.mxu0 0
        %3264 = vmatprep.subr.bf16.mxu0 0
        %3265 = vmatpush1.bf16.msra.mxu0 0
        %3266 = vmatprep.subr.bf16.mxu0 0
        %3267 = vmatpush1.bf16.msra.mxu0 0
        %3268 = vmatprep.subr.bf16.mxu0 0
        %3269 = vmatpush1.bf16.msra.mxu0 0
        %3270 = vmatprep.subr.bf16.mxu0 0
        %3271 = vmatpush1.bf16.msra.mxu0 0
        %3272 = vmatprep.mubr.bf16.mxu0 0
        %3273 = vmatmul.mubr.bf16.gmra.mrb[0].mxu0 %v3176
        %v3274 = vpop.f32.mrb[0].mxu0
        %v3275 = vadd.f32 0.0, %v3274
        %v3276 = vpop.f32.mrb[0].mxu0
        %v3277 = vpop.f32.mrb[0].mxu0
        %v3278 = vadd.f32 0.0, %v3277
        %v3279 = vpop.f32.mrb[0].mxu0
        %3280 = vmatprep.mubr.bf16.mxu0 0
        %3281 = vmatmul.mubr.bf16.gmra.mrb[0].mxu0 %v3177
        %v3282 = vpop.f32.mrb[0].mxu0
        %v3283 = vadd.f32 0.0, %v3282
        %v3284 = vpop.f32.mrb[0].mxu0
        %v3285 = vpop.f32.mrb[0].mxu0
        %v3286 = vadd.f32 0.0, %v3285
        %v3287 = vpop.f32.mrb[0].mxu0
        %3288 = vmatprep.mubr.bf16.mxu0 0
        %3289 = vmatmul.mubr.bf16.gmra.mrb[0].mxu0 %v3178
        %v3290 = vpop.f32.mrb[0].mxu0
        %v3291 = vadd.f32 0.0, %v3290
        %v3292 = vpop.f32.mrb[0].mxu0
        %v3293 = vpop.f32.mrb[0].mxu0
        %v3294 = vadd.f32 0.0, %v3293
        %v3295 = vpop.f32.mrb[0].mxu0
        %3296 = vmatprep.mubr.bf16.mxu0 0
        %3297 = vmatmul.mubr.bf16.gmra.mrb[0].mxu0 %v3179
        %v3298 = vpop.f32.mrb[0].mxu0
        %v3299 = vadd.f32 0.0, %v3298
        %v3300 = vpop.f32.mrb[0].mxu0
        %v3301 = vpop.f32.mrb[0].mxu0
        %v3302 = vadd.f32 0.0, %v3301
        %v3303 = vpop.f32.mrb[0].mxu0
        %3304 = vmatprep.mubr.bf16.mxu0 0
        %3305 = vmatmul.mubr.bf16.gmra.mrb[0].mxu0 %v3180
        %v3306 = vpop.f32.mrb[0].mxu0
        %v3307 = vadd.f32 0.0, %v3306
        %v3308 = vpop.f32.mrb[0].mxu0
        %v3309 = vpop.f32.mrb[0].mxu0
        %v3310 = vadd.f32 0.0, %v3309
        %v3311 = vpop.f32.mrb[0].mxu0
        %3312 = vmatprep.mubr.bf16.mxu0 0
        %3313 = vmatmul.mubr.bf16.gmra.mrb[0].mxu0 %v3181
        %v3314 = vpop.f32.mrb[0].mxu0
        %v3315 = vadd.f32 0.0, %v3314
        %v3316 = vpop.f32.mrb[0].mxu0
        %v3317 = vpop.f32.mrb[0].mxu0
        %v3318 = vadd.f32 0.0, %v3317
        %v3319 = vpop.f32.mrb[0].mxu0
        %3320 = vmatprep.mubr.bf16.mxu0 0
        %3321 = vmatmul.mubr.bf16.gmra.mrb[0].mxu0 %v3182
        %v3322 = vpop.f32.mrb[0].mxu0
        %v3323 = vadd.f32 0.0, %v3322
        %v3324 = vpop.f32.mrb[0].mxu0
        %v3325 = vpop.f32.mrb[0].mxu0
        %v3326 = vadd.f32 0.0, %v3325
        %v3327 = vpop.f32.mrb[0].mxu0
        %3328 = vmatprep.mubr.bf16.mxu0 0
        %3329 = vmatmul.mubr.bf16.gmra.mrb[0].mxu0 %v3183
        %v3330 = vpop.f32.mrb[0].mxu0
        %v3331 = vadd.f32 0.0, %v3330
        %v3332 = vpop.f32.mrb[0].mxu0
        %v3333 = vpop.f32.mrb[0].mxu0
        %v3334 = vadd.f32 0.0, %v3333
        %v3335 = vpop.f32.mrb[0].mxu0
        %3336 = vdwg.mxu0
        %v3337 = vadd.f32 %v2967, %v3275
        %v3338 = vadd.f32 %v2968, %v3278
        %v3339 = vadd.f32 %v2969, %v3283
        %v3340 = vadd.f32 %v2970, %v3286
        %v3341 = vadd.f32 %v2971, %v3291
        %v3342 = vadd.f32 %v2972, %v3294
        %v3343 = vadd.f32 %v2973, %v3299
        %v3344 = vadd.f32 %v2974, %v3302
        %v3345 = vadd.f32 %v2975, %v3307
        %v3346 = vadd.f32 %v2976, %v3310
        %v3347 = vadd.f32 %v2977, %v3315
        %v3348 = vadd.f32 %v2978, %v3318
        %v3349 = vadd.f32 %v2979, %v3323
        %v3350 = vadd.f32 %v2980, %v3326
        %v3351 = vadd.f32 %v2981, %v3331
        %v3352 = vadd.f32 %v2982, %v3334
        %s3353 = scalar_lea.vmem [#allocation2], 16
        %v3354 = vld [vmem:[%s3353] sm:$0xf]
        %v3355 = vld [vmem:[%s3353 + $0x8] sm:$0xf]
        %v3356 = vld [vmem:[%s3353 + $0x10] sm:$0xf]
        %v3357 = vld [vmem:[%s3353 + $0x18] sm:$0xf]
        %v3358 = vld [vmem:[%s3353 + $0x20] sm:$0xf]
        %v3359 = vld [vmem:[%s3353 + $0x28] sm:$0xf]
        %v3360 = vld [vmem:[%s3353 + $0x30] sm:$0xf]
        %v3361 = vld [vmem:[%s3353 + $0x38] sm:$0xf]
        %v3362 = vld [vmem:[%s3353 + $0x50] sm:$0xf]
        %v3363 = vld [vmem:[%s3353 + $0x58] sm:$0xf]
        %v3364 = vld [vmem:[%s3353 + $0x60] sm:$0xf]
        %v3365 = vld [vmem:[%s3353 + $0x68] sm:$0xf]
        %v3366 = vld [vmem:[%s3353 + $0x70] sm:$0xf]
        %v3367 = vld [vmem:[%s3353 + $0x78] sm:$0xf]
        %v3368 = vld [vmem:[%s3353 + $0x80] sm:$0xf]
        %v3369 = vld [vmem:[%s3353 + $0x88] sm:$0xf]
        %s3370 = scalar_lea.vmem %s4, 384
        %v3371 = vld [vmem:[%s3370] sm:$0xf]
        %v3372 = vld [vmem:[%s3370 + $0x4] sm:$0xf]
        %v3373 = vld [vmem:[%s3370 + $0x8] sm:$0xf]
        %v3374 = vld [vmem:[%s3370 + $0xc] sm:$0xf]
        %v3375 = vld [vmem:[%s3370 + $0x10] sm:$0xf]
        %v3376 = vld [vmem:[%s3370 + $0x14] sm:$0xf]
        %v3377 = vld [vmem:[%s3370 + $0x18] sm:$0xf]
        %v3378 = vld [vmem:[%s3370 + $0x1c] sm:$0xf]
        %v3379 = vld [vmem:[%s3370 + $0x20] sm:$0xf]
        %v3380 = vld [vmem:[%s3370 + $0x24] sm:$0xf]
        %v3381 = vld [vmem:[%s3370 + $0x28] sm:$0xf]
        %v3382 = vld [vmem:[%s3370 + $0x2c] sm:$0xf]
        %v3383 = vld [vmem:[%s3370 + $0x30] sm:$0xf]
        %v3384 = vld [vmem:[%s3370 + $0x34] sm:$0xf]
        %v3385 = vld [vmem:[%s3370 + $0x38] sm:$0xf]
        %v3386 = vld [vmem:[%s3370 + $0x3c] sm:$0xf]
        %v3403 = vunpack.c.l.b16 %v3354
        %v3404 = vunpack.c.l.b16 %v3355
        %v3405 = vunpack.c.l.b16 %v3356
        %v3406 = vunpack.c.l.b16 %v3357
        %v3407 = vunpack.c.l.b16 %v3358
        %v3408 = vunpack.c.l.b16 %v3359
        %v3409 = vunpack.c.l.b16 %v3360
        %v3410 = vunpack.c.l.b16 %v3361
        %v3411 = vunpack.c.l.b16 %v3362
        %v3412 = vunpack.c.l.b16 %v3363
        %v3413 = vunpack.c.l.b16 %v3364
        %v3414 = vunpack.c.l.b16 %v3365
        %v3415 = vunpack.c.l.b16 %v3366
        %v3416 = vunpack.c.l.b16 %v3367
        %v3417 = vunpack.c.l.b16 %v3368
        %v3418 = vunpack.c.l.b16 %v3369
        %v3419 = vpack.c.b16 %v3404, %v3403
        %v3420 = vpack.c.b16 %v3406, %v3405
        %v3421 = vpack.c.b16 %v3408, %v3407
        %v3422 = vpack.c.b16 %v3410, %v3409
        %v3423 = vpack.c.b16 %v3412, %v3411
        %v3424 = vpack.c.b16 %v3414, %v3413
        %v3425 = vpack.c.b16 %v3416, %v3415
        %v3426 = vpack.c.b16 %v3418, %v3417
        %v3451 = vunpack.c.l.b16 %v3371
        %v3452 = vunpack.c.l.b16 %v3372
        %v3453 = vunpack.c.l.b16 %v3373
        %v3454 = vunpack.c.l.b16 %v3374
        %v3455 = vunpack.c.l.b16 %v3375
        %v3456 = vunpack.c.l.b16 %v3376
        %v3457 = vunpack.c.l.b16 %v3377
        %v3458 = vunpack.c.l.b16 %v3378
        %v3459 = vunpack.c.l.b16 %v3379
        %v3460 = vunpack.c.l.b16 %v3380
        %v3461 = vunpack.c.l.b16 %v3381
        %v3462 = vunpack.c.l.b16 %v3382
        %v3463 = vunpack.c.l.b16 %v3383
        %v3464 = vunpack.c.l.b16 %v3384
        %v3465 = vunpack.c.l.b16 %v3385
        %v3466 = vunpack.c.l.b16 %v3386
        %v3467 = vpack.c.b16 %v3452, %v3451
        %v3468 = vpack.c.b16 %v3454, %v3453
        %v3469 = vpack.c.b16 %v3456, %v3455
        %v3470 = vpack.c.b16 %v3458, %v3457
        %v3471 = vpack.c.b16 %v3460, %v3459
        %v3472 = vpack.c.b16 %v3462, %v3461
        %v3473 = vpack.c.b16 %v3464, %v3463
        %v3474 = vpack.c.b16 %v3466, %v3465
        %3483 = vmatprep.subr.bf16.mxu0 0
        %3484 = vmatpush1.bf16.msra.mxu0 %v3467
        %3485 = vmatprep.subr.bf16.mxu0 0
        %3486 = vmatpush1.bf16.msra.mxu0 %v3468
        %3487 = vmatprep.subr.bf16.mxu0 0
        %3488 = vmatpush1.bf16.msra.mxu0 %v3469
        %3489 = vmatprep.subr.bf16.mxu0 0
        %3490 = vmatpush1.bf16.msra.mxu0 %v3470
        %3491 = vmatprep.subr.bf16.mxu0 0
        %3492 = vmatpush1.bf16.msra.mxu0 %v3471
        %3493 = vmatprep.subr.bf16.mxu0 0
        %3494 = vmatpush1.bf16.msra.mxu0 %v3472
        %3495 = vmatprep.subr.bf16.mxu0 0
        %3496 = vmatpush1.bf16.msra.mxu0 %v3473
        %3497 = vmatprep.subr.bf16.mxu0 0
        %3498 = vmatpush1.bf16.msra.mxu0 %v3474
        %3499 = vmatprep.subr.bf16.mxu0 0
        %3500 = vmatpush1.bf16.msra.mxu0 0
        %3501 = vmatprep.subr.bf16.mxu0 0
        %3502 = vmatpush1.bf16.msra.mxu0 0
        %3503 = vmatprep.subr.bf16.mxu0 0
        %3504 = vmatpush1.bf16.msra.mxu0 0
        %3505 = vmatprep.subr.bf16.mxu0 0
        %3506 = vmatpush1.bf16.msra.mxu0 0
        %3507 = vmatprep.subr.bf16.mxu0 0
        %3508 = vmatpush1.bf16.msra.mxu0 0
        %3509 = vmatprep.subr.bf16.mxu0 0
        %3510 = vmatpush1.bf16.msra.mxu0 0
        %3511 = vmatprep.subr.bf16.mxu0 0
        %3512 = vmatpush1.bf16.msra.mxu0 0
        %3513 = vmatprep.subr.bf16.mxu0 0
        %3514 = vmatpush1.bf16.msra.mxu0 0
        %3515 = vmatprep.mubr.bf16.mxu0 0
        %3516 = vmatmul.mubr.bf16.gmra.mrb[0].mxu0 %v3419
        %v3517 = vpop.f32.mrb[0].mxu0
        %v3518 = vadd.f32 0.0, %v3517
        %v3519 = vpop.f32.mrb[0].mxu0
        %v3520 = vpop.f32.mrb[0].mxu0
        %v3521 = vadd.f32 0.0, %v3520
        %v3522 = vpop.f32.mrb[0].mxu0
        %3523 = vmatprep.mubr.bf16.mxu0 0
        %3524 = vmatmul.mubr.bf16.gmra.mrb[0].mxu0 %v3420
        %v3525 = vpop.f32.mrb[0].mxu0
        %v3526 = vadd.f32 0.0, %v3525
        %v3527 = vpop.f32.mrb[0].mxu0
        %v3528 = vpop.f32.mrb[0].mxu0
        %v3529 = vadd.f32 0.0, %v3528
        %v3530 = vpop.f32.mrb[0].mxu0
        %3531 = vmatprep.mubr.bf16.mxu0 0
        %3532 = vmatmul.mubr.bf16.gmra.mrb[0].mxu0 %v3421
        %v3533 = vpop.f32.mrb[0].mxu0
        %v3534 = vadd.f32 0.0, %v3533
        %v3535 = vpop.f32.mrb[0].mxu0
        %v3536 = vpop.f32.mrb[0].mxu0
        %v3537 = vadd.f32 0.0, %v3536
        %v3538 = vpop.f32.mrb[0].mxu0
        %3539 = vmatprep.mubr.bf16.mxu0 0
        %3540 = vmatmul.mubr.bf16.gmra.mrb[0].mxu0 %v3422
        %v3541 = vpop.f32.mrb[0].mxu0
        %v3542 = vadd.f32 0.0, %v3541
        %v3543 = vpop.f32.mrb[0].mxu0
        %v3544 = vpop.f32.mrb[0].mxu0
        %v3545 = vadd.f32 0.0, %v3544
        %v3546 = vpop.f32.mrb[0].mxu0
        %3547 = vmatprep.mubr.bf16.mxu0 0
        %3548 = vmatmul.mubr.bf16.gmra.mrb[0].mxu0 %v3423
        %v3549 = vpop.f32.mrb[0].mxu0
        %v3550 = vadd.f32 0.0, %v3549
        %v3551 = vpop.f32.mrb[0].mxu0
        %v3552 = vpop.f32.mrb[0].mxu0
        %v3553 = vadd.f32 0.0, %v3552
        %v3554 = vpop.f32.mrb[0].mxu0
        %3555 = vmatprep.mubr.bf16.mxu0 0
        %3556 = vmatmul.mubr.bf16.gmra.mrb[0].mxu0 %v3424
        %v3557 = vpop.f32.mrb[0].mxu0
        %v3558 = vadd.f32 0.0, %v3557
        %v3559 = vpop.f32.mrb[0].mxu0
        %v3560 = vpop.f32.mrb[0].mxu0
        %v3561 = vadd.f32 0.0, %v3560
        %v3562 = vpop.f32.mrb[0].mxu0
        %3563 = vmatprep.mubr.bf16.mxu0 0
        %3564 = vmatmul.mubr.bf16.gmra.mrb[0].mxu0 %v3425
        %v3565 = vpop.f32.mrb[0].mxu0
        %v3566 = vadd.f32 0.0, %v3565
        %v3567 = vpop.f32.mrb[0].mxu0
        %v3568 = vpop.f32.mrb[0].mxu0
        %v3569 = vadd.f32 0.0, %v3568
        %v3570 = vpop.f32.mrb[0].mxu0
        %3571 = vmatprep.mubr.bf16.mxu0 0
        %3572 = vmatmul.mubr.bf16.gmra.mrb[0].mxu0 %v3426
        %v3573 = vpop.f32.mrb[0].mxu0
        %v3574 = vadd.f32 0.0, %v3573
        %v3575 = vpop.f32.mrb[0].mxu0
        %v3576 = vpop.f32.mrb[0].mxu0
        %v3577 = vadd.f32 0.0, %v3576
        %v3578 = vpop.f32.mrb[0].mxu0
        %3579 = vdwg.mxu0
        %v3580 = vadd.f32 %v3337, %v3518
        %v3581 = vadd.f32 %v3338, %v3521
        %v3582 = vadd.f32 %v3339, %v3526
        %v3583 = vadd.f32 %v3340, %v3529
        %v3584 = vadd.f32 %v3341, %v3534
        %v3585 = vadd.f32 %v3342, %v3537
        %v3586 = vadd.f32 %v3343, %v3542
        %v3587 = vadd.f32 %v3344, %v3545
        %v3588 = vadd.f32 %v3345, %v3550
        %v3589 = vadd.f32 %v3346, %v3553
        %v3590 = vadd.f32 %v3347, %v3558
        %v3591 = vadd.f32 %v3348, %v3561
        %v3592 = vadd.f32 %v3349, %v3566
        %v3593 = vadd.f32 %v3350, %v3569
        %v3594 = vadd.f32 %v3351, %v3574
        %v3595 = vadd.f32 %v3352, %v3577
        %v3596 = vld [vmem:[%s3353] sm:$0x1f]
        %v3597 = vld [vmem:[%s3353 + $0x8] sm:$0x1f]
        %v3598 = vld [vmem:[%s3353 + $0x10] sm:$0x1f]
        %v3599 = vld [vmem:[%s3353 + $0x18] sm:$0x1f]
        %v3600 = vld [vmem:[%s3353 + $0x20] sm:$0x1f]
        %v3601 = vld [vmem:[%s3353 + $0x28] sm:$0x1f]
        %v3602 = vld [vmem:[%s3353 + $0x30] sm:$0x1f]
        %v3603 = vld [vmem:[%s3353 + $0x38] sm:$0x1f]
        %v3604 = vld [vmem:[%s3353 + $0x50] sm:$0x1f]
        %v3605 = vld [vmem:[%s3353 + $0x58] sm:$0x1f]
        %v3606 = vld [vmem:[%s3353 + $0x60] sm:$0x1f]
        %v3607 = vld [vmem:[%s3353 + $0x68] sm:$0x1f]
        %v3608 = vld [vmem:[%s3353 + $0x70] sm:$0x1f]
        %v3609 = vld [vmem:[%s3353 + $0x78] sm:$0x1f]
        %v3610 = vld [vmem:[%s3353 + $0x80] sm:$0x1f]
        %v3611 = vld [vmem:[%s3353 + $0x88] sm:$0x1f]
        %v3628 = vunpack.c.l.b16 %v3596
        %v3629 = vunpack.c.h.b16 %v3596
        %v3630 = vunpack.c.l.b16 %v3597
        %v3631 = vunpack.c.h.b16 %v3597
        %v3632 = vunpack.c.l.b16 %v3598
        %v3633 = vunpack.c.h.b16 %v3598
        %v3634 = vunpack.c.l.b16 %v3599
        %v3635 = vunpack.c.h.b16 %v3599
        %v3636 = vunpack.c.l.b16 %v3600
        %v3637 = vunpack.c.h.b16 %v3600
        %v3638 = vunpack.c.l.b16 %v3601
        %v3639 = vunpack.c.h.b16 %v3601
        %v3640 = vunpack.c.l.b16 %v3602
        %v3641 = vunpack.c.h.b16 %v3602
        %v3642 = vunpack.c.l.b16 %v3603
        %v3643 = vunpack.c.h.b16 %v3603
        %v3644 = vunpack.c.l.b16 %v3604
        %v3645 = vunpack.c.h.b16 %v3604
        %v3646 = vunpack.c.l.b16 %v3605
        %v3647 = vunpack.c.h.b16 %v3605
        %v3648 = vunpack.c.l.b16 %v3606
        %v3649 = vunpack.c.h.b16 %v3606
        %v3650 = vunpack.c.l.b16 %v3607
        %v3651 = vunpack.c.h.b16 %v3607
        %v3652 = vunpack.c.l.b16 %v3608
        %v3653 = vunpack.c.h.b16 %v3608
        %v3654 = vunpack.c.l.b16 %v3609
        %v3655 = vunpack.c.h.b16 %v3609
        %v3656 = vunpack.c.l.b16 %v3610
        %v3657 = vunpack.c.h.b16 %v3610
        %v3658 = vunpack.c.l.b16 %v3611
        %v3659 = vunpack.c.h.b16 %v3611
        %v3660 = vpack.c.b16 %v3628, %v3628
        %v3661 = vpack.c.b16 %v3629, %v3629
        %v3662 = vpack.c.b16 %v3630, %v3630
        %v3663 = vpack.c.b16 %v3631, %v3631
        %v3664 = vpack.c.b16 %v3632, %v3632
        %v3665 = vpack.c.b16 %v3633, %v3633
        %v3666 = vpack.c.b16 %v3634, %v3634
        %v3667 = vpack.c.b16 %v3635, %v3635
        %v3668 = vpack.c.b16 %v3636, %v3636
        %v3669 = vpack.c.b16 %v3637, %v3637
        %v3670 = vpack.c.b16 %v3638, %v3638
        %v3671 = vpack.c.b16 %v3639, %v3639
        %v3672 = vpack.c.b16 %v3640, %v3640
        %v3673 = vpack.c.b16 %v3641, %v3641
        %v3674 = vpack.c.b16 %v3642, %v3642
        %v3675 = vpack.c.b16 %v3643, %v3643
        %v3676 = vpack.c.b16 %v3644, %v3644
        %v3677 = vpack.c.b16 %v3645, %v3645
        %v3678 = vpack.c.b16 %v3646, %v3646
        %v3679 = vpack.c.b16 %v3647, %v3647
        %v3680 = vpack.c.b16 %v3648, %v3648
        %v3681 = vpack.c.b16 %v3649, %v3649
        %v3682 = vpack.c.b16 %v3650, %v3650
        %v3683 = vpack.c.b16 %v3651, %v3651
        %v3684 = vpack.c.b16 %v3652, %v3652
        %v3685 = vpack.c.b16 %v3653, %v3653
        %v3686 = vpack.c.b16 %v3654, %v3654
        %v3687 = vpack.c.b16 %v3655, %v3655
        %v3688 = vpack.c.b16 %v3656, %v3656
        %v3689 = vpack.c.b16 %v3657, %v3657
        %v3690 = vpack.c.b16 %v3658, %v3658
        %v3691 = vpack.c.b16 %v3659, %v3659
        %v3693 = vshrl.u32 %v3660, 16
        %v3695 = vrot.slane %v3693, 4
        %v3696 = vshll.u32 %v3660, 16
        %v3698 = vrot.slane %v3696, 5
        %v3699 = vor.u32 %v3695, %v3698
        %v3700 = vrot.slane %v3699, 4
        %v3702 = vshll.u32 %v3661, 16
        %v3704 = vrot.slane %v3702, 5
        %v3705 = vsel %vm1226, %v3700, %v3704
        %v3707 = vshrl.u32 %v3662, 16
        %v3709 = vrot.slane %v3707, 4
        %v3710 = vshll.u32 %v3662, 16
        %v3712 = vrot.slane %v3710, 5
        %v3713 = vor.u32 %v3709, %v3712
        %v3714 = vrot.slane %v3713, 4
        %v3716 = vshll.u32 %v3663, 16
        %v3718 = vrot.slane %v3716, 5
        %v3719 = vsel %vm1226, %v3714, %v3718
        %v3721 = vshrl.u32 %v3664, 16
        %v3723 = vrot.slane %v3721, 4
        %v3724 = vshll.u32 %v3664, 16
        %v3726 = vrot.slane %v3724, 5
        %v3727 = vor.u32 %v3723, %v3726
        %v3728 = vrot.slane %v3727, 4
        %v3730 = vshll.u32 %v3665, 16
        %v3732 = vrot.slane %v3730, 5
        %v3733 = vsel %vm1226, %v3728, %v3732
        %v3735 = vshrl.u32 %v3666, 16
        %v3737 = vrot.slane %v3735, 4
        %v3738 = vshll.u32 %v3666, 16
        %v3740 = vrot.slane %v3738, 5
        %v3741 = vor.u32 %v3737, %v3740
        %v3742 = vrot.slane %v3741, 4
        %v3744 = vshll.u32 %v3667, 16
        %v3746 = vrot.slane %v3744, 5
        %v3747 = vsel %vm1226, %v3742, %v3746
        %v3749 = vshrl.u32 %v3668, 16
        %v3751 = vrot.slane %v3749, 4
        %v3752 = vshll.u32 %v3668, 16
        %v3754 = vrot.slane %v3752, 5
        %v3755 = vor.u32 %v3751, %v3754
        %v3756 = vrot.slane %v3755, 4
        %v3758 = vshll.u32 %v3669, 16
        %v3760 = vrot.slane %v3758, 5
        %v3761 = vsel %vm1226, %v3756, %v3760
        %v3763 = vshrl.u32 %v3670, 16
        %v3765 = vrot.slane %v3763, 4
        %v3766 = vshll.u32 %v3670, 16
        %v3768 = vrot.slane %v3766, 5
        %v3769 = vor.u32 %v3765, %v3768
        %v3770 = vrot.slane %v3769, 4
        %v3772 = vshll.u32 %v3671, 16
        %v3774 = vrot.slane %v3772, 5
        %v3775 = vsel %vm1226, %v3770, %v3774
        %v3777 = vshrl.u32 %v3672, 16
        %v3779 = vrot.slane %v3777, 4
        %v3780 = vshll.u32 %v3672, 16
        %v3782 = vrot.slane %v3780, 5
        %v3783 = vor.u32 %v3779, %v3782
        %v3784 = vrot.slane %v3783, 4
        %v3786 = vshll.u32 %v3673, 16
        %v3788 = vrot.slane %v3786, 5
        %v3789 = vsel %vm1226, %v3784, %v3788
        %v3791 = vshrl.u32 %v3674, 16
        %v3793 = vrot.slane %v3791, 4
        %v3794 = vshll.u32 %v3674, 16
        %v3796 = vrot.slane %v3794, 5
        %v3797 = vor.u32 %v3793, %v3796
        %v3798 = vrot.slane %v3797, 4
        %v3800 = vshll.u32 %v3675, 16
        %v3802 = vrot.slane %v3800, 5
        %v3803 = vsel %vm1226, %v3798, %v3802
        %v3805 = vshrl.u32 %v3676, 16
        %v3807 = vrot.slane %v3805, 4
        %v3808 = vshll.u32 %v3676, 16
        %v3810 = vrot.slane %v3808, 5
        %v3811 = vor.u32 %v3807, %v3810
        %v3812 = vrot.slane %v3811, 4
        %v3814 = vshll.u32 %v3677, 16
        %v3816 = vrot.slane %v3814, 5
        %v3817 = vsel %vm1226, %v3812, %v3816
        %v3819 = vshrl.u32 %v3678, 16
        %v3821 = vrot.slane %v3819, 4
        %v3822 = vshll.u32 %v3678, 16
        %v3824 = vrot.slane %v3822, 5
        %v3825 = vor.u32 %v3821, %v3824
        %v3826 = vrot.slane %v3825, 4
        %v3828 = vshll.u32 %v3679, 16
        %v3830 = vrot.slane %v3828, 5
        %v3831 = vsel %vm1226, %v3826, %v3830
        %v3833 = vshrl.u32 %v3680, 16
        %v3835 = vrot.slane %v3833, 4
        %v3836 = vshll.u32 %v3680, 16
        %v3838 = vrot.slane %v3836, 5
        %v3839 = vor.u32 %v3835, %v3838
        %v3840 = vrot.slane %v3839, 4
        %v3842 = vshll.u32 %v3681, 16
        %v3844 = vrot.slane %v3842, 5
        %v3845 = vsel %vm1226, %v3840, %v3844
        %v3847 = vshrl.u32 %v3682, 16
        %v3849 = vrot.slane %v3847, 4
        %v3850 = vshll.u32 %v3682, 16
        %v3852 = vrot.slane %v3850, 5
        %v3853 = vor.u32 %v3849, %v3852
        %v3854 = vrot.slane %v3853, 4
        %v3856 = vshll.u32 %v3683, 16
        %v3858 = vrot.slane %v3856, 5
        %v3859 = vsel %vm1226, %v3854, %v3858
        %v3861 = vshrl.u32 %v3684, 16
        %v3863 = vrot.slane %v3861, 4
        %v3864 = vshll.u32 %v3684, 16
        %v3866 = vrot.slane %v3864, 5
        %v3867 = vor.u32 %v3863, %v3866
        %v3868 = vrot.slane %v3867, 4
        %v3870 = vshll.u32 %v3685, 16
        %v3872 = vrot.slane %v3870, 5
        %v3873 = vsel %vm1226, %v3868, %v3872
        %v3875 = vshrl.u32 %v3686, 16
        %v3877 = vrot.slane %v3875, 4
        %v3878 = vshll.u32 %v3686, 16
        %v3880 = vrot.slane %v3878, 5
        %v3881 = vor.u32 %v3877, %v3880
        %v3882 = vrot.slane %v3881, 4
        %v3884 = vshll.u32 %v3687, 16
        %v3886 = vrot.slane %v3884, 5
        %v3887 = vsel %vm1226, %v3882, %v3886
        %v3889 = vshrl.u32 %v3688, 16
        %v3891 = vrot.slane %v3889, 4
        %v3892 = vshll.u32 %v3688, 16
        %v3894 = vrot.slane %v3892, 5
        %v3895 = vor.u32 %v3891, %v3894
        %v3896 = vrot.slane %v3895, 4
        %v3898 = vshll.u32 %v3689, 16
        %v3900 = vrot.slane %v3898, 5
        %v3901 = vsel %vm1226, %v3896, %v3900
        %v3903 = vshrl.u32 %v3690, 16
        %v3905 = vrot.slane %v3903, 4
        %v3906 = vshll.u32 %v3690, 16
        %v3908 = vrot.slane %v3906, 5
        %v3909 = vor.u32 %v3905, %v3908
        %v3910 = vrot.slane %v3909, 4
        %v3912 = vshll.u32 %v3691, 16
        %v3914 = vrot.slane %v3912, 5
        %v3915 = vsel %vm1226, %v3910, %v3914
        %s3916 = scalar_lea.vmem %s4, 448
        %v3917 = vld [vmem:[%s3916] sm:$0xf]
        %v3918 = vld [vmem:[%s3916 + $0x4] sm:$0xf]
        %v3919 = vld [vmem:[%s3916 + $0x8] sm:$0xf]
        %v3920 = vld [vmem:[%s3916 + $0xc] sm:$0xf]
        %v3921 = vld [vmem:[%s3916 + $0x10] sm:$0xf]
        %v3922 = vld [vmem:[%s3916 + $0x14] sm:$0xf]
        %v3923 = vld [vmem:[%s3916 + $0x18] sm:$0xf]
        %v3924 = vld [vmem:[%s3916 + $0x1c] sm:$0xf]
        %v3925 = vld [vmem:[%s3916 + $0x20] sm:$0xf]
        %v3926 = vld [vmem:[%s3916 + $0x24] sm:$0xf]
        %v3927 = vld [vmem:[%s3916 + $0x28] sm:$0xf]
        %v3928 = vld [vmem:[%s3916 + $0x2c] sm:$0xf]
        %v3929 = vld [vmem:[%s3916 + $0x30] sm:$0xf]
        %v3930 = vld [vmem:[%s3916 + $0x34] sm:$0xf]
        %v3931 = vld [vmem:[%s3916 + $0x38] sm:$0xf]
        %v3932 = vld [vmem:[%s3916 + $0x3c] sm:$0xf]
        %v3933 = vunpack.c.l.b16 %v3705
        %v3934 = vunpack.c.l.b16 %v3719
        %v3935 = vunpack.c.l.b16 %v3733
        %v3936 = vunpack.c.l.b16 %v3747
        %v3937 = vunpack.c.l.b16 %v3761
        %v3938 = vunpack.c.l.b16 %v3775
        %v3939 = vunpack.c.l.b16 %v3789
        %v3940 = vunpack.c.l.b16 %v3803
        %v3941 = vunpack.c.l.b16 %v3817
        %v3942 = vunpack.c.l.b16 %v3831
        %v3943 = vunpack.c.l.b16 %v3845
        %v3944 = vunpack.c.l.b16 %v3859
        %v3945 = vunpack.c.l.b16 %v3873
        %v3946 = vunpack.c.l.b16 %v3887
        %v3947 = vunpack.c.l.b16 %v3901
        %v3948 = vunpack.c.l.b16 %v3915
        %v3949 = vpack.c.b16 %v3934, %v3933
        %v3950 = vpack.c.b16 %v3936, %v3935
        %v3951 = vpack.c.b16 %v3938, %v3937
        %v3952 = vpack.c.b16 %v3940, %v3939
        %v3953 = vpack.c.b16 %v3942, %v3941
        %v3954 = vpack.c.b16 %v3944, %v3943
        %v3955 = vpack.c.b16 %v3946, %v3945
        %v3956 = vpack.c.b16 %v3948, %v3947
        %v3981 = vunpack.c.l.b16 %v3917
        %v3982 = vunpack.c.l.b16 %v3918
        %v3983 = vunpack.c.l.b16 %v3919
        %v3984 = vunpack.c.l.b16 %v3920
        %v3985 = vunpack.c.l.b16 %v3921
        %v3986 = vunpack.c.l.b16 %v3922
        %v3987 = vunpack.c.l.b16 %v3923
        %v3988 = vunpack.c.l.b16 %v3924
        %v3989 = vunpack.c.l.b16 %v3925
        %v3990 = vunpack.c.l.b16 %v3926
        %v3991 = vunpack.c.l.b16 %v3927
        %v3992 = vunpack.c.l.b16 %v3928
        %v3993 = vunpack.c.l.b16 %v3929
        %v3994 = vunpack.c.l.b16 %v3930
        %v3995 = vunpack.c.l.b16 %v3931
        %v3996 = vunpack.c.l.b16 %v3932
        %v3997 = vpack.c.b16 %v3982, %v3981
        %v3998 = vpack.c.b16 %v3984, %v3983
        %v3999 = vpack.c.b16 %v3986, %v3985
        %v4000 = vpack.c.b16 %v3988, %v3987
        %v4001 = vpack.c.b16 %v3990, %v3989
        %v4002 = vpack.c.b16 %v3992, %v3991
        %v4003 = vpack.c.b16 %v3994, %v3993
        %v4004 = vpack.c.b16 %v3996, %v3995
        %4013 = vmatprep.subr.bf16.mxu0 0
        %4014 = vmatpush1.bf16.msra.mxu0 %v3997
        %4015 = vmatprep.subr.bf16.mxu0 0
        %4016 = vmatpush1.bf16.msra.mxu0 %v3998
        %4017 = vmatprep.subr.bf16.mxu0 0
        %4018 = vmatpush1.bf16.msra.mxu0 %v3999
        %4019 = vmatprep.subr.bf16.mxu0 0
        %4020 = vmatpush1.bf16.msra.mxu0 %v4000
        %4021 = vmatprep.subr.bf16.mxu0 0
        %4022 = vmatpush1.bf16.msra.mxu0 %v4001
        %4023 = vmatprep.subr.bf16.mxu0 0
        %4024 = vmatpush1.bf16.msra.mxu0 %v4002
        %4025 = vmatprep.subr.bf16.mxu0 0
        %4026 = vmatpush1.bf16.msra.mxu0 %v4003
        %4027 = vmatprep.subr.bf16.mxu0 0
        %4028 = vmatpush1.bf16.msra.mxu0 %v4004
        %4029 = vmatprep.subr.bf16.mxu0 0
        %4030 = vmatpush1.bf16.msra.mxu0 0
        %4031 = vmatprep.subr.bf16.mxu0 0
        %4032 = vmatpush1.bf16.msra.mxu0 0
        %4033 = vmatprep.subr.bf16.mxu0 0
        %4034 = vmatpush1.bf16.msra.mxu0 0
        %4035 = vmatprep.subr.bf16.mxu0 0
        %4036 = vmatpush1.bf16.msra.mxu0 0
        %4037 = vmatprep.subr.bf16.mxu0 0
        %4038 = vmatpush1.bf16.msra.mxu0 0
        %4039 = vmatprep.subr.bf16.mxu0 0
        %4040 = vmatpush1.bf16.msra.mxu0 0
        %4041 = vmatprep.subr.bf16.mxu0 0
        %4042 = vmatpush1.bf16.msra.mxu0 0
        %4043 = vmatprep.subr.bf16.mxu0 0
        %4044 = vmatpush1.bf16.msra.mxu0 0
        %4045 = vmatprep.mubr.bf16.mxu0 0
        %4046 = vmatmul.mubr.bf16.gmra.mrb[0].mxu0 %v3949
        %v4047 = vpop.f32.mrb[0].mxu0
        %v4048 = vadd.f32 0.0, %v4047
        %v4049 = vpop.f32.mrb[0].mxu0
        %v4050 = vpop.f32.mrb[0].mxu0
        %v4051 = vadd.f32 0.0, %v4050
        %v4052 = vpop.f32.mrb[0].mxu0
        %4053 = vmatprep.mubr.bf16.mxu0 0
        %4054 = vmatmul.mubr.bf16.gmra.mrb[0].mxu0 %v3950
        %v4055 = vpop.f32.mrb[0].mxu0
        %v4056 = vadd.f32 0.0, %v4055
        %v4057 = vpop.f32.mrb[0].mxu0
        %v4058 = vpop.f32.mrb[0].mxu0
        %v4059 = vadd.f32 0.0, %v4058
        %v4060 = vpop.f32.mrb[0].mxu0
        %4061 = vmatprep.mubr.bf16.mxu0 0
        %4062 = vmatmul.mubr.bf16.gmra.mrb[0].mxu0 %v3951
        %v4063 = vpop.f32.mrb[0].mxu0
        %v4064 = vadd.f32 0.0, %v4063
        %v4065 = vpop.f32.mrb[0].mxu0
        %v4066 = vpop.f32.mrb[0].mxu0
        %v4067 = vadd.f32 0.0, %v4066
        %v4068 = vpop.f32.mrb[0].mxu0
        %4069 = vmatprep.mubr.bf16.mxu0 0
        %4070 = vmatmul.mubr.bf16.gmra.mrb[0].mxu0 %v3952
        %v4071 = vpop.f32.mrb[0].mxu0
        %v4072 = vadd.f32 0.0, %v4071
        %v4073 = vpop.f32.mrb[0].mxu0
        %v4074 = vpop.f32.mrb[0].mxu0
        %v4075 = vadd.f32 0.0, %v4074
        %v4076 = vpop.f32.mrb[0].mxu0
        %4077 = vmatprep.mubr.bf16.mxu0 0
        %4078 = vmatmul.mubr.bf16.gmra.mrb[0].mxu0 %v3953
        %v4079 = vpop.f32.mrb[0].mxu0
        %v4080 = vadd.f32 0.0, %v4079
        %v4081 = vpop.f32.mrb[0].mxu0
        %v4082 = vpop.f32.mrb[0].mxu0
        %v4083 = vadd.f32 0.0, %v4082
        %v4084 = vpop.f32.mrb[0].mxu0
        %4085 = vmatprep.mubr.bf16.mxu0 0
        %4086 = vmatmul.mubr.bf16.gmra.mrb[0].mxu0 %v3954
        %v4087 = vpop.f32.mrb[0].mxu0
        %v4088 = vadd.f32 0.0, %v4087
        %v4089 = vpop.f32.mrb[0].mxu0
        %v4090 = vpop.f32.mrb[0].mxu0
        %v4091 = vadd.f32 0.0, %v4090
        %v4092 = vpop.f32.mrb[0].mxu0
        %4093 = vmatprep.mubr.bf16.mxu0 0
        %4094 = vmatmul.mubr.bf16.gmra.mrb[0].mxu0 %v3955
        %v4095 = vpop.f32.mrb[0].mxu0
        %v4096 = vadd.f32 0.0, %v4095
        %v4097 = vpop.f32.mrb[0].mxu0
        %v4098 = vpop.f32.mrb[0].mxu0
        %v4099 = vadd.f32 0.0, %v4098
        %v4100 = vpop.f32.mrb[0].mxu0
        %4101 = vmatprep.mubr.bf16.mxu0 0
        %4102 = vmatmul.mubr.bf16.gmra.mrb[0].mxu0 %v3956
        %v4103 = vpop.f32.mrb[0].mxu0
        %v4104 = vadd.f32 0.0, %v4103
        %v4105 = vpop.f32.mrb[0].mxu0
        %v4106 = vpop.f32.mrb[0].mxu0
        %v4107 = vadd.f32 0.0, %v4106
        %v4108 = vpop.f32.mrb[0].mxu0
        %4109 = vdwg.mxu0
        %v4110 = vadd.f32 %v3580, %v4048
        %v4111 = vadd.f32 %v3581, %v4051
        %v4112 = vadd.f32 %v3582, %v4056
        %v4113 = vadd.f32 %v3583, %v4059
        %v4114 = vadd.f32 %v3584, %v4064
        %v4115 = vadd.f32 %v3585, %v4067
        %v4116 = vadd.f32 %v3586, %v4072
        %v4117 = vadd.f32 %v3587, %v4075
        %v4118 = vadd.f32 %v3588, %v4080
        %v4119 = vadd.f32 %v3589, %v4083
        %v4120 = vadd.f32 %v3590, %v4088
        %v4121 = vadd.f32 %v3591, %v4091
        %v4122 = vadd.f32 %v3592, %v4096
        %v4123 = vadd.f32 %v3593, %v4099
        %v4124 = vadd.f32 %v3594, %v4104
        %v4125 = vadd.f32 %v3595, %v4107
        %v4126 = vld [vmem:[%s3353] sm:$0x1e]
        %v4127 = vld [vmem:[%s3353 + $0x8] sm:$0x1e]
        %v4128 = vld [vmem:[%s3353 + $0x10] sm:$0x1e]
        %v4129 = vld [vmem:[%s3353 + $0x18] sm:$0x1e]
        %v4130 = vld [vmem:[%s3353 + $0x20] sm:$0x1e]
        %v4131 = vld [vmem:[%s3353 + $0x28] sm:$0x1e]
        %v4132 = vld [vmem:[%s3353 + $0x30] sm:$0x1e]
        %v4133 = vld [vmem:[%s3353 + $0x38] sm:$0x1e]
        %v4134 = vld [vmem:[%s3353 + $0x50] sm:$0x1e]
        %v4135 = vld [vmem:[%s3353 + $0x58] sm:$0x1e]
        %v4136 = vld [vmem:[%s3353 + $0x60] sm:$0x1e]
        %v4137 = vld [vmem:[%s3353 + $0x68] sm:$0x1e]
        %v4138 = vld [vmem:[%s3353 + $0x70] sm:$0x1e]
        %v4139 = vld [vmem:[%s3353 + $0x78] sm:$0x1e]
        %v4140 = vld [vmem:[%s3353 + $0x80] sm:$0x1e]
        %v4141 = vld [vmem:[%s3353 + $0x88] sm:$0x1e]
        %v4158 = vunpack.c.l.b16 %v4126
        %v4159 = vunpack.c.h.b16 %v4126
        %v4160 = vunpack.c.l.b16 %v4127
        %v4161 = vunpack.c.h.b16 %v4127
        %v4162 = vunpack.c.l.b16 %v4128
        %v4163 = vunpack.c.h.b16 %v4128
        %v4164 = vunpack.c.l.b16 %v4129
        %v4165 = vunpack.c.h.b16 %v4129
        %v4166 = vunpack.c.l.b16 %v4130
        %v4167 = vunpack.c.h.b16 %v4130
        %v4168 = vunpack.c.l.b16 %v4131
        %v4169 = vunpack.c.h.b16 %v4131
        %v4170 = vunpack.c.l.b16 %v4132
        %v4171 = vunpack.c.h.b16 %v4132
        %v4172 = vunpack.c.l.b16 %v4133
        %v4173 = vunpack.c.h.b16 %v4133
        %v4174 = vunpack.c.l.b16 %v4134
        %v4175 = vunpack.c.h.b16 %v4134
        %v4176 = vunpack.c.l.b16 %v4135
        %v4177 = vunpack.c.h.b16 %v4135
        %v4178 = vunpack.c.l.b16 %v4136
        %v4179 = vunpack.c.h.b16 %v4136
        %v4180 = vunpack.c.l.b16 %v4137
        %v4181 = vunpack.c.h.b16 %v4137
        %v4182 = vunpack.c.l.b16 %v4138
        %v4183 = vunpack.c.h.b16 %v4138
        %v4184 = vunpack.c.l.b16 %v4139
        %v4185 = vunpack.c.h.b16 %v4139
        %v4186 = vunpack.c.l.b16 %v4140
        %v4187 = vunpack.c.h.b16 %v4140
        %v4188 = vunpack.c.l.b16 %v4141
        %v4189 = vunpack.c.h.b16 %v4141
        %v4190 = vpack.c.b16 %v4158, %v4158
        %v4191 = vpack.c.b16 %v4159, %v4159
        %v4192 = vpack.c.b16 %v4160, %v4160
        %v4193 = vpack.c.b16 %v4161, %v4161
        %v4194 = vpack.c.b16 %v4162, %v4162
        %v4195 = vpack.c.b16 %v4163, %v4163
        %v4196 = vpack.c.b16 %v4164, %v4164
        %v4197 = vpack.c.b16 %v4165, %v4165
        %v4198 = vpack.c.b16 %v4166, %v4166
        %v4199 = vpack.c.b16 %v4167, %v4167
        %v4200 = vpack.c.b16 %v4168, %v4168
        %v4201 = vpack.c.b16 %v4169, %v4169
        %v4202 = vpack.c.b16 %v4170, %v4170
        %v4203 = vpack.c.b16 %v4171, %v4171
        %v4204 = vpack.c.b16 %v4172, %v4172
        %v4205 = vpack.c.b16 %v4173, %v4173
        %v4206 = vpack.c.b16 %v4174, %v4174
        %v4207 = vpack.c.b16 %v4175, %v4175
        %v4208 = vpack.c.b16 %v4176, %v4176
        %v4209 = vpack.c.b16 %v4177, %v4177
        %v4210 = vpack.c.b16 %v4178, %v4178
        %v4211 = vpack.c.b16 %v4179, %v4179
        %v4212 = vpack.c.b16 %v4180, %v4180
        %v4213 = vpack.c.b16 %v4181, %v4181
        %v4214 = vpack.c.b16 %v4182, %v4182
        %v4215 = vpack.c.b16 %v4183, %v4183
        %v4216 = vpack.c.b16 %v4184, %v4184
        %v4217 = vpack.c.b16 %v4185, %v4185
        %v4218 = vpack.c.b16 %v4186, %v4186
        %v4219 = vpack.c.b16 %v4187, %v4187
        %v4220 = vpack.c.b16 %v4188, %v4188
        %v4221 = vpack.c.b16 %v4189, %v4189
        %v4222 = vrot.slane %v4190, 5
        %v4223 = vrot.slane %v4222, 4
        %v4224 = vrot.slane %v4191, 5
        %v4225 = vsel %vm1936, %v4223, %v4224
        %v4226 = vrot.slane %v4192, 5
        %v4227 = vrot.slane %v4226, 4
        %v4228 = vrot.slane %v4193, 5
        %v4229 = vsel %vm1936, %v4227, %v4228
        %v4230 = vrot.slane %v4194, 5
        %v4231 = vrot.slane %v4230, 4
        %v4232 = vrot.slane %v4195, 5
        %v4233 = vsel %vm1936, %v4231, %v4232
        %v4234 = vrot.slane %v4196, 5
        %v4235 = vrot.slane %v4234, 4
        %v4236 = vrot.slane %v4197, 5
        %v4237 = vsel %vm1936, %v4235, %v4236
        %v4238 = vrot.slane %v4198, 5
        %v4239 = vrot.slane %v4238, 4
        %v4240 = vrot.slane %v4199, 5
        %v4241 = vsel %vm1936, %v4239, %v4240
        %v4242 = vrot.slane %v4200, 5
        %v4243 = vrot.slane %v4242, 4
        %v4244 = vrot.slane %v4201, 5
        %v4245 = vsel %vm1936, %v4243, %v4244
        %v4246 = vrot.slane %v4202, 5
        %v4247 = vrot.slane %v4246, 4
        %v4248 = vrot.slane %v4203, 5
        %v4249 = vsel %vm1936, %v4247, %v4248
        %v4250 = vrot.slane %v4204, 5
        %v4251 = vrot.slane %v4250, 4
        %v4252 = vrot.slane %v4205, 5
        %v4253 = vsel %vm1936, %v4251, %v4252
        %v4254 = vrot.slane %v4206, 5
        %v4255 = vrot.slane %v4254, 4
        %v4256 = vrot.slane %v4207, 5
        %v4257 = vsel %vm1936, %v4255, %v4256
        %v4258 = vrot.slane %v4208, 5
        %v4259 = vrot.slane %v4258, 4
        %v4260 = vrot.slane %v4209, 5
        %v4261 = vsel %vm1936, %v4259, %v4260
        %v4262 = vrot.slane %v4210, 5
        %v4263 = vrot.slane %v4262, 4
        %v4264 = vrot.slane %v4211, 5
        %v4265 = vsel %vm1936, %v4263, %v4264
        %v4266 = vrot.slane %v4212, 5
        %v4267 = vrot.slane %v4266, 4
        %v4268 = vrot.slane %v4213, 5
        %v4269 = vsel %vm1936, %v4267, %v4268
        %v4270 = vrot.slane %v4214, 5
        %v4271 = vrot.slane %v4270, 4
        %v4272 = vrot.slane %v4215, 5
        %v4273 = vsel %vm1936, %v4271, %v4272
        %v4274 = vrot.slane %v4216, 5
        %v4275 = vrot.slane %v4274, 4
        %v4276 = vrot.slane %v4217, 5
        %v4277 = vsel %vm1936, %v4275, %v4276
        %v4278 = vrot.slane %v4218, 5
        %v4279 = vrot.slane %v4278, 4
        %v4280 = vrot.slane %v4219, 5
        %v4281 = vsel %vm1936, %v4279, %v4280
        %v4282 = vrot.slane %v4220, 5
        %v4283 = vrot.slane %v4282, 4
        %v4284 = vrot.slane %v4221, 5
        %v4285 = vsel %vm1936, %v4283, %v4284
        %s4286 = scalar_lea.vmem %s4, 512
        %v4287 = vld [vmem:[%s4286] sm:$0xf]
        %v4288 = vld [vmem:[%s4286 + $0x4] sm:$0xf]
        %v4289 = vld [vmem:[%s4286 + $0x8] sm:$0xf]
        %v4290 = vld [vmem:[%s4286 + $0xc] sm:$0xf]
        %v4291 = vld [vmem:[%s4286 + $0x10] sm:$0xf]
        %v4292 = vld [vmem:[%s4286 + $0x14] sm:$0xf]
        %v4293 = vld [vmem:[%s4286 + $0x18] sm:$0xf]
        %v4294 = vld [vmem:[%s4286 + $0x1c] sm:$0xf]
        %v4295 = vld [vmem:[%s4286 + $0x20] sm:$0xf]
        %v4296 = vld [vmem:[%s4286 + $0x24] sm:$0xf]
        %v4297 = vld [vmem:[%s4286 + $0x28] sm:$0xf]
        %v4298 = vld [vmem:[%s4286 + $0x2c] sm:$0xf]
        %v4299 = vld [vmem:[%s4286 + $0x30] sm:$0xf]
        %v4300 = vld [vmem:[%s4286 + $0x34] sm:$0xf]
        %v4301 = vld [vmem:[%s4286 + $0x38] sm:$0xf]
        %v4302 = vld [vmem:[%s4286 + $0x3c] sm:$0xf]
        %v4303 = vunpack.c.l.b16 %v4225
        %v4304 = vunpack.c.l.b16 %v4229
        %v4305 = vunpack.c.l.b16 %v4233
        %v4306 = vunpack.c.l.b16 %v4237
        %v4307 = vunpack.c.l.b16 %v4241
        %v4308 = vunpack.c.l.b16 %v4245
        %v4309 = vunpack.c.l.b16 %v4249
        %v4310 = vunpack.c.l.b16 %v4253
        %v4311 = vunpack.c.l.b16 %v4257
        %v4312 = vunpack.c.l.b16 %v4261
        %v4313 = vunpack.c.l.b16 %v4265
        %v4314 = vunpack.c.l.b16 %v4269
        %v4315 = vunpack.c.l.b16 %v4273
        %v4316 = vunpack.c.l.b16 %v4277
        %v4317 = vunpack.c.l.b16 %v4281
        %v4318 = vunpack.c.l.b16 %v4285
        %v4319 = vpack.c.b16 %v4304, %v4303
        %v4320 = vpack.c.b16 %v4306, %v4305
        %v4321 = vpack.c.b16 %v4308, %v4307
        %v4322 = vpack.c.b16 %v4310, %v4309
        %v4323 = vpack.c.b16 %v4312, %v4311
        %v4324 = vpack.c.b16 %v4314, %v4313
        %v4325 = vpack.c.b16 %v4316, %v4315
        %v4326 = vpack.c.b16 %v4318, %v4317
        %v4351 = vunpack.c.l.b16 %v4287
        %v4352 = vunpack.c.l.b16 %v4288
        %v4353 = vunpack.c.l.b16 %v4289
        %v4354 = vunpack.c.l.b16 %v4290
        %v4355 = vunpack.c.l.b16 %v4291
        %v4356 = vunpack.c.l.b16 %v4292
        %v4357 = vunpack.c.l.b16 %v4293
        %v4358 = vunpack.c.l.b16 %v4294
        %v4359 = vunpack.c.l.b16 %v4295
        %v4360 = vunpack.c.l.b16 %v4296
        %v4361 = vunpack.c.l.b16 %v4297
        %v4362 = vunpack.c.l.b16 %v4298
        %v4363 = vunpack.c.l.b16 %v4299
        %v4364 = vunpack.c.l.b16 %v4300
        %v4365 = vunpack.c.l.b16 %v4301
        %v4366 = vunpack.c.l.b16 %v4302
        %v4367 = vpack.c.b16 %v4352, %v4351
        %v4368 = vpack.c.b16 %v4354, %v4353
        %v4369 = vpack.c.b16 %v4356, %v4355
        %v4370 = vpack.c.b16 %v4358, %v4357
        %v4371 = vpack.c.b16 %v4360, %v4359
        %v4372 = vpack.c.b16 %v4362, %v4361
        %v4373 = vpack.c.b16 %v4364, %v4363
        %v4374 = vpack.c.b16 %v4366, %v4365
        %4383 = vmatprep.subr.bf16.mxu0 0
        %4384 = vmatpush1.bf16.msra.mxu0 %v4367
        %4385 = vmatprep.subr.bf16.mxu0 0
        %4386 = vmatpush1.bf16.msra.mxu0 %v4368
        %4387 = vmatprep.subr.bf16.mxu0 0
        %4388 = vmatpush1.bf16.msra.mxu0 %v4369
        %4389 = vmatprep.subr.bf16.mxu0 0
        %4390 = vmatpush1.bf16.msra.mxu0 %v4370
        %4391 = vmatprep.subr.bf16.mxu0 0
        %4392 = vmatpush1.bf16.msra.mxu0 %v4371
        %4393 = vmatprep.subr.bf16.mxu0 0
        %4394 = vmatpush1.bf16.msra.mxu0 %v4372
        %4395 = vmatprep.subr.bf16.mxu0 0
        %4396 = vmatpush1.bf16.msra.mxu0 %v4373
        %4397 = vmatprep.subr.bf16.mxu0 0
        %4398 = vmatpush1.bf16.msra.mxu0 %v4374
        %4399 = vmatprep.subr.bf16.mxu0 0
        %4400 = vmatpush1.bf16.msra.mxu0 0
        %4401 = vmatprep.subr.bf16.mxu0 0
        %4402 = vmatpush1.bf16.msra.mxu0 0
        %4403 = vmatprep.subr.bf16.mxu0 0
        %4404 = vmatpush1.bf16.msra.mxu0 0
        %4405 = vmatprep.subr.bf16.mxu0 0
        %4406 = vmatpush1.bf16.msra.mxu0 0
        %4407 = vmatprep.subr.bf16.mxu0 0
        %4408 = vmatpush1.bf16.msra.mxu0 0
        %4409 = vmatprep.subr.bf16.mxu0 0
        %4410 = vmatpush1.bf16.msra.mxu0 0
        %4411 = vmatprep.subr.bf16.mxu0 0
        %4412 = vmatpush1.bf16.msra.mxu0 0
        %4413 = vmatprep.subr.bf16.mxu0 0
        %4414 = vmatpush1.bf16.msra.mxu0 0
        %4415 = vmatprep.mubr.bf16.mxu0 0
        %4416 = vmatmul.mubr.bf16.gmra.mrb[0].mxu0 %v4319
        %v4417 = vpop.f32.mrb[0].mxu0
        %v4418 = vadd.f32 0.0, %v4417
        %v4419 = vpop.f32.mrb[0].mxu0
        %v4420 = vpop.f32.mrb[0].mxu0
        %v4421 = vadd.f32 0.0, %v4420
        %v4422 = vpop.f32.mrb[0].mxu0
        %4423 = vmatprep.mubr.bf16.mxu0 0
        %4424 = vmatmul.mubr.bf16.gmra.mrb[0].mxu0 %v4320
        %v4425 = vpop.f32.mrb[0].mxu0
        %v4426 = vadd.f32 0.0, %v4425
        %v4427 = vpop.f32.mrb[0].mxu0
        %v4428 = vpop.f32.mrb[0].mxu0
        %v4429 = vadd.f32 0.0, %v4428
        %v4430 = vpop.f32.mrb[0].mxu0
        %4431 = vmatprep.mubr.bf16.mxu0 0
        %4432 = vmatmul.mubr.bf16.gmra.mrb[0].mxu0 %v4321
        %v4433 = vpop.f32.mrb[0].mxu0
        %v4434 = vadd.f32 0.0, %v4433
        %v4435 = vpop.f32.mrb[0].mxu0
        %v4436 = vpop.f32.mrb[0].mxu0
        %v4437 = vadd.f32 0.0, %v4436
        %v4438 = vpop.f32.mrb[0].mxu0
        %4439 = vmatprep.mubr.bf16.mxu0 0
        %4440 = vmatmul.mubr.bf16.gmra.mrb[0].mxu0 %v4322
        %v4441 = vpop.f32.mrb[0].mxu0
        %v4442 = vadd.f32 0.0, %v4441
        %v4443 = vpop.f32.mrb[0].mxu0
        %v4444 = vpop.f32.mrb[0].mxu0
        %v4445 = vadd.f32 0.0, %v4444
        %v4446 = vpop.f32.mrb[0].mxu0
        %4447 = vmatprep.mubr.bf16.mxu0 0
        %4448 = vmatmul.mubr.bf16.gmra.mrb[0].mxu0 %v4323
        %v4449 = vpop.f32.mrb[0].mxu0
        %v4450 = vadd.f32 0.0, %v4449
        %v4451 = vpop.f32.mrb[0].mxu0
        %v4452 = vpop.f32.mrb[0].mxu0
        %v4453 = vadd.f32 0.0, %v4452
        %v4454 = vpop.f32.mrb[0].mxu0
        %4455 = vmatprep.mubr.bf16.mxu0 0
        %4456 = vmatmul.mubr.bf16.gmra.mrb[0].mxu0 %v4324
        %v4457 = vpop.f32.mrb[0].mxu0
        %v4458 = vadd.f32 0.0, %v4457
        %v4459 = vpop.f32.mrb[0].mxu0
        %v4460 = vpop.f32.mrb[0].mxu0
        %v4461 = vadd.f32 0.0, %v4460
        %v4462 = vpop.f32.mrb[0].mxu0
        %4463 = vmatprep.mubr.bf16.mxu0 0
        %4464 = vmatmul.mubr.bf16.gmra.mrb[0].mxu0 %v4325
        %v4465 = vpop.f32.mrb[0].mxu0
        %v4466 = vadd.f32 0.0, %v4465
        %v4467 = vpop.f32.mrb[0].mxu0
        %v4468 = vpop.f32.mrb[0].mxu0
        %v4469 = vadd.f32 0.0, %v4468
        %v4470 = vpop.f32.mrb[0].mxu0
        %4471 = vmatprep.mubr.bf16.mxu0 0
        %4472 = vmatmul.mubr.bf16.gmra.mrb[0].mxu0 %v4326
        %v4473 = vpop.f32.mrb[0].mxu0
        %v4474 = vadd.f32 0.0, %v4473
        %v4475 = vpop.f32.mrb[0].mxu0
        %v4476 = vpop.f32.mrb[0].mxu0
        %v4477 = vadd.f32 0.0, %v4476
        %v4478 = vpop.f32.mrb[0].mxu0
        %4479 = vdwg.mxu0
        %v4480 = vadd.f32 %v4110, %v4418
        %v4481 = vadd.f32 %v4111, %v4421
        %v4482 = vadd.f32 %v4112, %v4426
        %v4483 = vadd.f32 %v4113, %v4429
        %v4484 = vadd.f32 %v4114, %v4434
        %v4485 = vadd.f32 %v4115, %v4437
        %v4486 = vadd.f32 %v4116, %v4442
        %v4487 = vadd.f32 %v4117, %v4445
        %v4488 = vadd.f32 %v4118, %v4450
        %v4489 = vadd.f32 %v4119, %v4453
        %v4490 = vadd.f32 %v4120, %v4458
        %v4491 = vadd.f32 %v4121, %v4461
        %v4492 = vadd.f32 %v4122, %v4466
        %v4493 = vadd.f32 %v4123, %v4469
        %v4494 = vadd.f32 %v4124, %v4474
        %v4495 = vadd.f32 %v4125, %v4477
        %v4496 = vld [vmem:[%s5] sm:$0x1]
        %v4498 = vlaneseq
        %v4499 = vshrl.u32 %v4498, 7
        %v4500 = vsub.s32 0, %v4499
        %v4501 = vrot.slane %v4496, %v4500
        %v4503 = vmul.f32 %v4480, %v4501
        %v4504 = vmul.f32 %v4481, %v4501
        %v4505 = vmul.f32 %v4482, %v4501
        %v4506 = vmul.f32 %v4483, %v4501
        %v4507 = vmul.f32 %v4484, %v4501
        %v4508 = vmul.f32 %v4485, %v4501
        %v4509 = vmul.f32 %v4486, %v4501
        %v4510 = vmul.f32 %v4487, %v4501
        %v4511 = vmul.f32 %v4488, %v4501
        %v4512 = vmul.f32 %v4489, %v4501
        %v4513 = vmul.f32 %v4490, %v4501
        %v4514 = vmul.f32 %v4491, %v4501
        %v4515 = vmul.f32 %v4492, %v4501
        %v4516 = vmul.f32 %v4493, %v4501
        %v4517 = vmul.f32 %v4494, %v4501
        %v4518 = vmul.f32 %v4495, %v4501
        %v4519 = vld [vmem:[%s6] sm:$0x1]
        %v4521 = vlaneseq
        %v4522 = vshrl.u32 %v4521, 7
        %v4523 = vsub.s32 0, %v4522
        %v4524 = vrot.slane %v4519, %v4523
        %v4526 = vadd.f32 %v4503, %v4524
        %v4527 = vadd.f32 %v4504, %v4524
        %v4528 = vadd.f32 %v4505, %v4524
        %v4529 = vadd.f32 %v4506, %v4524
        %v4530 = vadd.f32 %v4507, %v4524
        %v4531 = vadd.f32 %v4508, %v4524
        %v4532 = vadd.f32 %v4509, %v4524
        %v4533 = vadd.f32 %v4510, %v4524
        %v4534 = vadd.f32 %v4511, %v4524
        %v4535 = vadd.f32 %v4512, %v4524
        %v4536 = vadd.f32 %v4513, %v4524
        %v4537 = vadd.f32 %v4514, %v4524
        %v4538 = vadd.f32 %v4515, %v4524
        %v4539 = vadd.f32 %v4516, %v4524
        %v4540 = vadd.f32 %v4517, %v4524
        %v4541 = vadd.f32 %v4518, %v4524
        %v4542 = vmax.f32 %v4526, 0.0
        %v4543 = vmax.f32 %v4527, 0.0
        %v4544 = vmax.f32 %v4528, 0.0
        %v4545 = vmax.f32 %v4529, 0.0
        %v4546 = vmax.f32 %v4530, 0.0
        %v4547 = vmax.f32 %v4531, 0.0
        %v4548 = vmax.f32 %v4532, 0.0
        %v4549 = vmax.f32 %v4533, 0.0
        %v4550 = vmax.f32 %v4534, 0.0
        %v4551 = vmax.f32 %v4535, 0.0
        %v4552 = vmax.f32 %v4536, 0.0
        %v4553 = vmax.f32 %v4537, 0.0
        %v4554 = vmax.f32 %v4538, 0.0
        %v4555 = vmax.f32 %v4539, 0.0
        %v4556 = vmax.f32 %v4540, 0.0
        %v4557 = vmax.f32 %v4541, 0.0
        %v4558 = vpack.c.bf16 %v4543, %v4542
        %v4559 = vpack.c.bf16 %v4545, %v4544
        %v4560 = vpack.c.bf16 %v4547, %v4546
        %v4561 = vpack.c.bf16 %v4549, %v4548
        %v4562 = vpack.c.bf16 %v4551, %v4550
        %v4563 = vpack.c.bf16 %v4553, %v4552
        %v4564 = vpack.c.bf16 %v4555, %v4554
        %v4565 = vpack.c.bf16 %v4557, %v4556
        %v4566 = vld [vmem:[%s7] sm:$0xf]
        %v4567 = vld [vmem:[%s7 + $0x4] sm:$0xf]
        %v4568 = vld [vmem:[%s7 + $0x8] sm:$0xf]
        %v4569 = vld [vmem:[%s7 + $0xc] sm:$0xf]
        %v4570 = vld [vmem:[%s7 + $0x10] sm:$0xf]
        %v4571 = vld [vmem:[%s7 + $0x14] sm:$0xf]
        %v4572 = vld [vmem:[%s7 + $0x18] sm:$0xf]
        %v4573 = vld [vmem:[%s7 + $0x1c] sm:$0xf]
        %v4574 = vld [vmem:[%s7 + $0x20] sm:$0xf]
        %v4575 = vld [vmem:[%s7 + $0x24] sm:$0xf]
        %v4576 = vld [vmem:[%s7 + $0x28] sm:$0xf]
        %v4577 = vld [vmem:[%s7 + $0x2c] sm:$0xf]
        %v4578 = vld [vmem:[%s7 + $0x30] sm:$0xf]
        %v4579 = vld [vmem:[%s7 + $0x34] sm:$0xf]
        %v4580 = vld [vmem:[%s7 + $0x38] sm:$0xf]
        %v4581 = vld [vmem:[%s7 + $0x3c] sm:$0xf]
        %v4598 = vunpack.c.l.b16 %v4566
        %v4599 = vunpack.c.l.b16 %v4567
        %v4600 = vunpack.c.l.b16 %v4568
        %v4601 = vunpack.c.l.b16 %v4569
        %v4602 = vunpack.c.l.b16 %v4570
        %v4603 = vunpack.c.l.b16 %v4571
        %v4604 = vunpack.c.l.b16 %v4572
        %v4605 = vunpack.c.l.b16 %v4573
        %v4606 = vunpack.c.l.b16 %v4574
        %v4607 = vunpack.c.l.b16 %v4575
        %v4608 = vunpack.c.l.b16 %v4576
        %v4609 = vunpack.c.l.b16 %v4577
        %v4610 = vunpack.c.l.b16 %v4578
        %v4611 = vunpack.c.l.b16 %v4579
        %v4612 = vunpack.c.l.b16 %v4580
        %v4613 = vunpack.c.l.b16 %v4581
        %v4614 = vpack.c.b16 %v4599, %v4598
        %v4615 = vpack.c.b16 %v4601, %v4600
        %v4616 = vpack.c.b16 %v4603, %v4602
        %v4617 = vpack.c.b16 %v4605, %v4604
        %v4618 = vpack.c.b16 %v4607, %v4606
        %v4619 = vpack.c.b16 %v4609, %v4608
        %v4620 = vpack.c.b16 %v4611, %v4610
        %v4621 = vpack.c.b16 %v4613, %v4612
        %4630 = vmatprep.subr.bf16.mxu0 0
        %4631 = vmatpush1.bf16.msra.mxu0 %v4614
        %4632 = vmatprep.subr.bf16.mxu0 0
        %4633 = vmatpush1.bf16.msra.mxu0 %v4615
        %4634 = vmatprep.subr.bf16.mxu0 0
        %4635 = vmatpush1.bf16.msra.mxu0 %v4616
        %4636 = vmatprep.subr.bf16.mxu0 0
        %4637 = vmatpush1.bf16.msra.mxu0 %v4617
        %4638 = vmatprep.subr.bf16.mxu0 0
        %4639 = vmatpush1.bf16.msra.mxu0 %v4618
        %4640 = vmatprep.subr.bf16.mxu0 0
        %4641 = vmatpush1.bf16.msra.mxu0 %v4619
        %4642 = vmatprep.subr.bf16.mxu0 0
        %4643 = vmatpush1.bf16.msra.mxu0 %v4620
        %4644 = vmatprep.subr.bf16.mxu0 0
        %4645 = vmatpush1.bf16.msra.mxu0 %v4621
        %4646 = vmatprep.subr.bf16.mxu0 0
        %4647 = vmatpush1.bf16.msra.mxu0 0
        %4648 = vmatprep.subr.bf16.mxu0 0
        %4649 = vmatpush1.bf16.msra.mxu0 0
        %4650 = vmatprep.subr.bf16.mxu0 0
        %4651 = vmatpush1.bf16.msra.mxu0 0
        %4652 = vmatprep.subr.bf16.mxu0 0
        %4653 = vmatpush1.bf16.msra.mxu0 0
        %4654 = vmatprep.subr.bf16.mxu0 0
        %4655 = vmatpush1.bf16.msra.mxu0 0
        %4656 = vmatprep.subr.bf16.mxu0 0
        %4657 = vmatpush1.bf16.msra.mxu0 0
        %4658 = vmatprep.subr.bf16.mxu0 0
        %4659 = vmatpush1.bf16.msra.mxu0 0
        %4660 = vmatprep.subr.bf16.mxu0 0
        %4661 = vmatpush1.bf16.msra.mxu0 0
        %4662 = vmatprep.mubr.bf16.mxu0 0
        %4663 = vmatmul.mubr.bf16.gmra.mrb[0].mxu0 %v4558
        %v4664 = vpop.f32.mrb[0].mxu0
        %v4665 = vadd.f32 0.0, %v4664
        %v4666 = vpop.f32.mrb[0].mxu0
        %v4667 = vpop.f32.mrb[0].mxu0
        %v4668 = vadd.f32 0.0, %v4667
        %v4669 = vpop.f32.mrb[0].mxu0
        %4670 = vmatprep.mubr.bf16.mxu0 0
        %4671 = vmatmul.mubr.bf16.gmra.mrb[0].mxu0 %v4559
        %v4672 = vpop.f32.mrb[0].mxu0
        %v4673 = vadd.f32 0.0, %v4672
        %v4674 = vpop.f32.mrb[0].mxu0
        %v4675 = vpop.f32.mrb[0].mxu0
        %v4676 = vadd.f32 0.0, %v4675
        %v4677 = vpop.f32.mrb[0].mxu0
        %4678 = vmatprep.mubr.bf16.mxu0 0
        %4679 = vmatmul.mubr.bf16.gmra.mrb[0].mxu0 %v4560
        %v4680 = vpop.f32.mrb[0].mxu0
        %v4681 = vadd.f32 0.0, %v4680
        %v4682 = vpop.f32.mrb[0].mxu0
        %v4683 = vpop.f32.mrb[0].mxu0
        %v4684 = vadd.f32 0.0, %v4683
        %v4685 = vpop.f32.mrb[0].mxu0
        %4686 = vmatprep.mubr.bf16.mxu0 0
        %4687 = vmatmul.mubr.bf16.gmra.mrb[0].mxu0 %v4561
        %v4688 = vpop.f32.mrb[0].mxu0
        %v4689 = vadd.f32 0.0, %v4688
        %v4690 = vpop.f32.mrb[0].mxu0
        %v4691 = vpop.f32.mrb[0].mxu0
        %v4692 = vadd.f32 0.0, %v4691
        %v4693 = vpop.f32.mrb[0].mxu0
        %4694 = vmatprep.mubr.bf16.mxu0 0
        %4695 = vmatmul.mubr.bf16.gmra.mrb[0].mxu0 %v4562
        %v4696 = vpop.f32.mrb[0].mxu0
        %v4697 = vadd.f32 0.0, %v4696
        %v4698 = vpop.f32.mrb[0].mxu0
        %v4699 = vpop.f32.mrb[0].mxu0
        %v4700 = vadd.f32 0.0, %v4699
        %v4701 = vpop.f32.mrb[0].mxu0
        %4702 = vmatprep.mubr.bf16.mxu0 0
        %4703 = vmatmul.mubr.bf16.gmra.mrb[0].mxu0 %v4563
        %v4704 = vpop.f32.mrb[0].mxu0
        %v4705 = vadd.f32 0.0, %v4704
        %v4706 = vpop.f32.mrb[0].mxu0
        %v4707 = vpop.f32.mrb[0].mxu0
        %v4708 = vadd.f32 0.0, %v4707
        %v4709 = vpop.f32.mrb[0].mxu0
        %4710 = vmatprep.mubr.bf16.mxu0 0
        %4711 = vmatmul.mubr.bf16.gmra.mrb[0].mxu0 %v4564
        %v4712 = vpop.f32.mrb[0].mxu0
        %v4713 = vadd.f32 0.0, %v4712
        %v4714 = vpop.f32.mrb[0].mxu0
        %v4715 = vpop.f32.mrb[0].mxu0
        %v4716 = vadd.f32 0.0, %v4715
        %v4717 = vpop.f32.mrb[0].mxu0
        %4718 = vmatprep.mubr.bf16.mxu0 0
        %4719 = vmatmul.mubr.bf16.gmra.mrb[0].mxu0 %v4565
        %v4720 = vpop.f32.mrb[0].mxu0
        %v4721 = vadd.f32 0.0, %v4720
        %v4722 = vpop.f32.mrb[0].mxu0
        %v4723 = vpop.f32.mrb[0].mxu0
        %v4724 = vadd.f32 0.0, %v4723
        %v4725 = vpop.f32.mrb[0].mxu0
        %4726 = vdwg.mxu0
        %v4727 = vld [vmem:[%s8] sm:$0x1]
        %v4729 = vlaneseq
        %v4730 = vshrl.u32 %v4729, 7
        %v4731 = vsub.s32 0, %v4730
        %v4732 = vrot.slane %v4727, %v4731
        %v4734 = vmul.f32 %v4665, %v4732
        %v4735 = vmul.f32 %v4668, %v4732
        %v4736 = vmul.f32 %v4673, %v4732
        %v4737 = vmul.f32 %v4676, %v4732
        %v4738 = vmul.f32 %v4681, %v4732
        %v4739 = vmul.f32 %v4684, %v4732
        %v4740 = vmul.f32 %v4689, %v4732
        %v4741 = vmul.f32 %v4692, %v4732
        %v4742 = vmul.f32 %v4697, %v4732
        %v4743 = vmul.f32 %v4700, %v4732
        %v4744 = vmul.f32 %v4705, %v4732
        %v4745 = vmul.f32 %v4708, %v4732
        %v4746 = vmul.f32 %v4713, %v4732
        %v4747 = vmul.f32 %v4716, %v4732
        %v4748 = vmul.f32 %v4721, %v4732
        %v4749 = vmul.f32 %v4724, %v4732
        %v4750 = vld [vmem:[%s9] sm:$0x1]
        %v4752 = vlaneseq
        %v4753 = vshrl.u32 %v4752, 7
        %v4754 = vsub.s32 0, %v4753
        %v4755 = vrot.slane %v4750, %v4754
        %v4757 = vadd.f32 %v4734, %v4755
        %v4758 = vadd.f32 %v4735, %v4755
        %v4759 = vadd.f32 %v4736, %v4755
        %v4760 = vadd.f32 %v4737, %v4755
        %v4761 = vadd.f32 %v4738, %v4755
        %v4762 = vadd.f32 %v4739, %v4755
        %v4763 = vadd.f32 %v4740, %v4755
        %v4764 = vadd.f32 %v4741, %v4755
        %v4765 = vadd.f32 %v4742, %v4755
        %v4766 = vadd.f32 %v4743, %v4755
        %v4767 = vadd.f32 %v4744, %v4755
        %v4768 = vadd.f32 %v4745, %v4755
        %v4769 = vadd.f32 %v4746, %v4755
        %v4770 = vadd.f32 %v4747, %v4755
        %v4771 = vadd.f32 %v4748, %v4755
        %v4772 = vadd.f32 %v4749, %v4755
        %v4773 = vadd.f32 %v4757, %v714
        %v4774 = vadd.f32 %v4758, %v716
        %v4775 = vadd.f32 %v4759, %v718
        %v4776 = vadd.f32 %v4760, %v720
        %v4777 = vadd.f32 %v4761, %v722
        %v4778 = vadd.f32 %v4762, %v724
        %v4779 = vadd.f32 %v4763, %v726
        %v4780 = vadd.f32 %v4764, %v728
        %v4781 = vadd.f32 %v4765, %v730
        %v4782 = vadd.f32 %v4766, %v732
        %v4783 = vadd.f32 %v4767, %v734
        %v4784 = vadd.f32 %v4768, %v736
        %v4785 = vadd.f32 %v4769, %v738
        %v4786 = vadd.f32 %v4770, %v740
        %v4787 = vadd.f32 %v4771, %v742
        %v4788 = vadd.f32 %v4772, %v744
        %v4789 = vmax.f32 %v4773, 0.0
        %v4790 = vmax.f32 %v4774, 0.0
        %v4791 = vmax.f32 %v4775, 0.0
        %v4792 = vmax.f32 %v4776, 0.0
        %v4793 = vmax.f32 %v4777, 0.0
        %v4794 = vmax.f32 %v4778, 0.0
        %v4795 = vmax.f32 %v4779, 0.0
        %v4796 = vmax.f32 %v4780, 0.0
        %v4797 = vmax.f32 %v4781, 0.0
        %v4798 = vmax.f32 %v4782, 0.0
        %v4799 = vmax.f32 %v4783, 0.0
        %v4800 = vmax.f32 %v4784, 0.0
        %v4801 = vmax.f32 %v4785, 0.0
        %v4802 = vmax.f32 %v4786, 0.0
        %v4803 = vmax.f32 %v4787, 0.0
        %v4804 = vmax.f32 %v4788, 0.0
        %v4805 = vpack.c.bf16 %v4790, %v4789
        %v4806 = vpack.c.bf16 %v4792, %v4791
        %v4807 = vpack.c.bf16 %v4794, %v4793
        %v4808 = vpack.c.bf16 %v4796, %v4795
        %v4809 = vpack.c.bf16 %v4798, %v4797
        %v4810 = vpack.c.bf16 %v4800, %v4799
        %v4811 = vpack.c.bf16 %v4802, %v4801
        %v4812 = vpack.c.bf16 %v4804, %v4803
        %v4821 = vunpack.c.l.b16 %v4805
        %v4822 = vunpack.c.h.b16 %v4805
        %v4823 = vunpack.c.l.b16 %v4806
        %v4824 = vunpack.c.h.b16 %v4806
        %v4825 = vunpack.c.l.b16 %v4807
        %v4826 = vunpack.c.h.b16 %v4807
        %v4827 = vunpack.c.l.b16 %v4808
        %v4828 = vunpack.c.h.b16 %v4808
        %v4829 = vunpack.c.l.b16 %v4809
        %v4830 = vunpack.c.h.b16 %v4809
        %v4831 = vunpack.c.l.b16 %v4810
        %v4832 = vunpack.c.h.b16 %v4810
        %v4833 = vunpack.c.l.b16 %v4811
        %v4834 = vunpack.c.h.b16 %v4811
        %v4835 = vunpack.c.l.b16 %v4812
        %v4836 = vunpack.c.h.b16 %v4812
        %v4837 = vpack.c.b16 %v4821, %v4821
        %v4838 = vpack.c.b16 %v4822, %v4822
        %v4839 = vpack.c.b16 %v4823, %v4823
        %v4840 = vpack.c.b16 %v4824, %v4824
        %v4841 = vpack.c.b16 %v4825, %v4825
        %v4842 = vpack.c.b16 %v4826, %v4826
        %v4843 = vpack.c.b16 %v4827, %v4827
        %v4844 = vpack.c.b16 %v4828, %v4828
        %v4845 = vpack.c.b16 %v4829, %v4829
        %v4846 = vpack.c.b16 %v4830, %v4830
        %v4847 = vpack.c.b16 %v4831, %v4831
        %v4848 = vpack.c.b16 %v4832, %v4832
        %v4849 = vpack.c.b16 %v4833, %v4833
        %v4850 = vpack.c.b16 %v4834, %v4834
        %v4851 = vpack.c.b16 %v4835, %v4835
        %v4852 = vpack.c.b16 %v4836, %v4836
        %4869 = vst [vmem:[%s381] sm:$0xf] %v4837
        %4870 = vst [vmem:[%s381 + $0x4] sm:$0xf] %v4838
        %4871 = vst [vmem:[%s381 + $0x8] sm:$0xf] %v4839
        %4872 = vst [vmem:[%s381 + $0xc] sm:$0xf] %v4840
        %4873 = vst [vmem:[%s381 + $0x10] sm:$0xf] %v4841
        %4874 = vst [vmem:[%s381 + $0x14] sm:$0xf] %v4842
        %4875 = vst [vmem:[%s381 + $0x18] sm:$0xf] %v4843
        %4876 = vst [vmem:[%s381 + $0x1c] sm:$0xf] %v4844
        %4877 = vst [vmem:[%s381 + $0x20] sm:$0xf] %v4845
        %4878 = vst [vmem:[%s381 + $0x24] sm:$0xf] %v4846
        %4879 = vst [vmem:[%s381 + $0x28] sm:$0xf] %v4847
        %4880 = vst [vmem:[%s381 + $0x2c] sm:$0xf] %v4848
        %4881 = vst [vmem:[%s381 + $0x30] sm:$0xf] %v4849
        %4882 = vst [vmem:[%s381 + $0x34] sm:$0xf] %v4850
        %4883 = vst [vmem:[%s381 + $0x38] sm:$0xf] %v4851
        %4884 = vst [vmem:[%s381 + $0x3c] sm:$0xf] %v4852
        %s4885 = smul.u32 2, %s22
        %p4886 = scmp.lt.s32.totalorder %s4885, 3
        %s4887 = scalar_select %p4886, %s4885, 3
        %s4888 = smul.addr %s4887, 8
        %s4889 = smul.addr %s4888, 4
        %s4890 = scalar_lea.vmem %s10, %s4889
        // Predicated region
        $region65: #{_forward_once_jit.1} parent=59 // pred_check
          %p4891 = pneg %p255
        $region66: #{_forward_once_jit.1} parent=59 // pred_check_branch
          %4893 = sbr.rel (%p4891) target = $region68
        $region67: #{_forward_once_jit.1} parent=59 // pred_region
          %s4894 = smul.u32 2, %s22
        $region68: #{_forward_once_jit.1} parent=59 // pred_fallthru
          _
      $region60: #{_forward_once_jit.1} parent=5 // pred_fallthru
        _
      %p4895 = scmp.le.s32.totalorder 2, %s17
      // Predicated region
      $region69: #{_forward_once_jit.1} parent=5 // pred_check
        %p4896 = pneg %p4895
      $region70: #{_forward_once_jit.1} parent=5 // pred_check_branch
        %4898 = sbr.rel (%p4896) target = $region72
      $region71: #{_forward_once_jit.1} parent=5 // pred_region
        %s4899 = ssub.s32 %s17, 2
        // Predicated region
        $region73: #{_forward_once_jit.1} parent=71 // pred_check
          %p4900 = pneg %p261
        $region74: #{_forward_once_jit.1} parent=71 // pred_check_branch
          %4902 = sbr.rel (%p4900) target = $region76
        $region75: #{_forward_once_jit.1} parent=71 // pred_region
          %s4903 = smul.u32 2, %s23
          %p4904 = scmp.lt.s32.totalorder %s4903, 3
          %s4905 = scalar_select %p4904, %s4903, 3
          %s4906 = smul.addr %s4905, 8
          %s4907 = smul.addr %s4906, 4
          %s4908 = scalar_lea.vmem %s10, %s4907
        $region76: #{_forward_once_jit.1} parent=71 // pred_fallthru
          _
      $region72: #{_forward_once_jit.1} parent=5 // pred_fallthru
        _
    $region6: #{_forward_once_jit.1} parent=1 // loop_footer
      %s21 = sadd.s32 1, %s17
    $region7: #{_forward_once_jit.1} parent=1 // loop_footer_branch
      %16 = sbr.rel target = $region3
    $region8: #{_forward_once_jit.1} parent=1 // loop_exit
      _
    %4909 = vsyncpa [#allocation4], 1
    %s4910 = scalar_lea.sflag [#allocation4], 1
    %4911 = vsyncpa %s4910, 1

</llo_original>
